<compile_context>
chip_gen: v5e
topology: v5e:2x2
jax: 0.10.0
libtpu: 0.0.40
codegen_flags: <defaults>
</compile_context>

<pallas_src>
import jax
import jax.numpy as jnp
from jax import lax
from jax.experimental import pallas as pl
from jax.experimental.pallas import tpu as pltpu


def _round_up(n, m):
    return ((n + m - 1) // m) * m


def mlp_kernel(x_ref, w1_ref, b1_ref, w2_ref, b2_ref, w3_ref, b3_ref, o_ref):
    # x arrives in its native dtype; cast to bf16 in VMEM right before the MXU
    # matmul so the wrapper never makes an extra HBM pass over x.
    x = x_ref[...].astype(jnp.bfloat16)                                  # (tB, 2048)

    # Layer 1: bf16 MXU matmul with f32 accumulation; bias + ReLU on the VPU.
    h1 = jnp.dot(x, w1_ref[...], preferred_element_type=jnp.float32)    # (tB, 512)
    h1 = jnp.maximum(h1 + b1_ref[...], 0.0)

    # Layer 2.
    h2 = jnp.dot(h1.astype(jnp.bfloat16), w2_ref[...],
                 preferred_element_type=jnp.float32)                    # (tB, 256)
    h2 = jnp.maximum(h2 + b2_ref[...], 0.0)

    # Layer 3 (256 -> 1): contract the feature dim of h2 against the (1,256)
    # weight row.  Contracting the LAST dim of both operands yields a
    # lane-dense (1, tile_B) row directly (no narrow (tB,1) masked stores).
    out_row = lax.dot_general(w3_ref[...], h2, (((1,), (1,)), ((), ())),
                              preferred_element_type=jnp.float32)       # (1, tB)
    o_ref[...] = (out_row + b3_ref[...]).astype(o_ref.dtype)


def _choose_tile(B):
    if B <= 256:
        # Single block whose batch dim equals the full array dim (always a
        # legal block shape) — no padding, no partial blocks for small batches.
        return B
    if B <= 1024:
        # Exactly two grid steps so a v7x megacore can shard one tile per
        # TensorCore; keep the tile a multiple of 128 so the lane-dense output
        # block stays (8,128)-aligned.
        return _round_up(pl.cdiv(B, 2), 128)
    # Large batches: 512-row tiles amortize the ~0.35us/step pipeline overhead
    # to ~10% while keeping the footprint (f32 x tile x2 buffers + resident
    # bf16 weights + f32 temps ~ 16-18 MiB) safe on every generation.  On
    # v6e/v7x this could be raised to 1024 under the explicit VMEM limit below.
    return 512


def prepare_params(params):
    """One-time conversion of f32 (torch-layout) params into kernel operands:
    bf16 weights for the two big matmuls, f32 bias rows and final weight row.
    Call once at init — NOT per forward — so the forward adds no extra HBM
    passes over the weights."""
    w1, b1, w2, b2, w3, b3 = params
    return (w1.astype(jnp.bfloat16),                         # (2048, 512) bf16
            jnp.reshape(b1, (1, 512)).astype(jnp.float32),   # (1, 512)
            w2.astype(jnp.bfloat16),                         # (512, 256) bf16
            jnp.reshape(b2, (1, 256)).astype(jnp.float32),   # (1, 256)
            jnp.reshape(w3, (1, 256)).astype(jnp.float32),   # (1, 256)
            jnp.reshape(b3, (1, 1)).astype(jnp.float32))     # (1, 1)


def classifier_forward(x, prepared):
    """x: (B, 2048, 1, 1) or (B, 2048) float32. Returns (B, 1) float32."""
    B = x.shape[0]
    x2d = jnp.reshape(x, (B, -1))        # metadata-only; stays in native dtype
    w1b, b1f, w2b, b2f, w3r, b3f = prepared

    tile_B = _choose_tile(B)
    num_tiles = pl.cdiv(B, tile_B)
    grid = (num_tiles,)

    const = lambda i: (0, 0)
    # Weights / biases are the same block every grid step -> VMEM resident;
    # single-buffer them instead of wasting VMEM on a second copy.
    resident = dict(pipeline_mode=pl.Buffered(1))

    flops = 2 * B * (2048 * 512 + 512 * 256 + 256)
    bytes_accessed = (B * 2048 * x2d.dtype.itemsize            # x (native dtype)
                      + 2048 * 512 * 2 + 512 * 256 * 2         # bf16 weights
                      + (512 + 256 + 256 + 1) * 4              # biases / w3 row
                      + num_tiles * tile_B * 4)                # output row

    out_row = pl.pallas_call(
        mlp_kernel,
        out_shape=jax.ShapeDtypeStruct((1, num_tiles * tile_B), jnp.float32),
        grid_spec=pltpu.PrefetchScalarGridSpec(
            num_scalar_prefetch=0,
            grid=grid,
            in_specs=[
                pl.BlockSpec((tile_B, 2048), lambda i: (i, 0)),   # x tile (native dtype)
                pl.BlockSpec((2048, 512), const, **resident),     # w1 (bf16)
                pl.BlockSpec((1, 512), const, **resident),        # b1 (f32)
                pl.BlockSpec((512, 256), const, **resident),      # w2 (bf16)
                pl.BlockSpec((1, 256), const, **resident),        # b2 (f32)
                pl.BlockSpec((1, 256), const, **resident),        # w3 row (f32)
                pl.BlockSpec((1, 1), const, **resident),          # b3 (f32)
            ],
            out_specs=pl.BlockSpec((1, tile_B), lambda i: (0, i)),  # lane-dense row
        ),
        compiler_params=pltpu.CompilerParams(
            dimension_semantics=("parallel",),
            vmem_limit_bytes=48 * 1024 * 1024,
        ),
        cost_estimate=pl.CostEstimate(flops=flops, transcendentals=0,
                                      bytes_accessed=bytes_accessed),
    )(x2d, w1b, b1f, w2b, b2f, w3r, b3f)

    # TODO(synk): torch's x.squeeze() with B == 1 would also drop the batch dim
    # (output shape (1,) instead of (1, 1)); we keep explicit (B, 1) semantics.
    return out_row[0, :B].reshape(B, 1)


def init_params(key):
    """Deterministic init matching nn.Linear default (uniform +/- 1/sqrt(fan_in)).
    Weights stored as (in, out); biases as (1, out). Kept in f32 like torch."""
    dims = [(2048, 512), (512, 256), (256, 1)]
    params = []
    for i, (fin, fout) in enumerate(dims):
        kw, kb = jax.random.split(jax.random.fold_in(key, i))
        bound = 1.0 / (fin ** 0.5)
        w = jax.random.uniform(kw, (fin, fout), jnp.float32, -bound, bound)
        b = jax.random.uniform(kb, (1, fout), jnp.float32, -bound, bound)
        params += [w, b]
    return tuple(params)


if __name__ == "__main__":
    key = jax.random.PRNGKey(0)
    k_x, k_p = jax.random.split(key)

    # Small example input consistent with the module: (batch=2, 2048, 1, 1)
    x = jax.random.normal(k_x, (2, 2048, 1, 1), dtype=jnp.float32)
    params = init_params(k_p)
    prepared = prepare_params(params)   # one-time bf16 cast / reshape of weights

    fwd = jax.jit(classifier_forward)
    out = fwd(x, prepared)
    jax.block_until_ready(out)

    # Reference with the same numerics policy (bf16 inputs to the two big
    # matmuls, f32 accumulation, f32 final layer), in plain XLA ops.
    w1, b1, w2, b2, w3, b3 = params
    x2d = jnp.reshape(x, (2, -1))
    h1 = jnp.maximum(
        jnp.dot(x2d.astype(jnp.bfloat16), w1.astype(jnp.bfloat16),
                preferred_element_type=jnp.float32) + b1.reshape(1, -1), 0.0)
    h2 = jnp.maximum(
        jnp.dot(h1.astype(jnp.bfloat16), w2.astype(jnp.bfloat16),
                preferred_element_type=jnp.float32) + b2.reshape(1, -1), 0.0)
    ref = h2 @ w3.reshape(256, 1) + b3.reshape(1, 1)

    assert out.shape == (2, 1), out.shape
    assert jnp.allclose(out, ref, atol=2e-2, rtol=2e-2), (out, ref)

    print("KERNEL_OK")
</pallas_src>

<mosaic_0001>
module attributes {stable_mosaic.version = 11 : i64} {
  func.func @mlp_kernel(%arg0: i32, %arg1: memref<2x2048xf32, #tpu.memory_space<vmem>>, %arg2: memref<2048x512xbf16, #tpu.memory_space<vmem>>, %arg3: memref<1x512xf32, #tpu.memory_space<vmem>>, %arg4: memref<512x256xbf16, #tpu.memory_space<vmem>>, %arg5: memref<1x256xf32, #tpu.memory_space<vmem>>, %arg6: memref<1x256xf32, #tpu.memory_space<vmem>>, %arg7: memref<1x1xf32, #tpu.memory_space<vmem>>, %arg8: memref<1x2xf32, #tpu.memory_space<vmem>>) attributes {dimension_semantics = [#tpu.dimension_semantics<parallel>], iteration_bounds = array<i64: 1>, scalar_prefetch = 0 : i64, scratch_operands = 0 : i64, tpu.core_type = #tpu.core_type<tc>, window_params = [{transform_indices = @transform_0, window_bounds = array<i64: 2, 2048>}, {pipeline_mode = #tpu.pipeline_mode<synchronous>, transform_indices = @transform_1, window_bounds = array<i64: 2048, 512>}, {pipeline_mode = #tpu.pipeline_mode<synchronous>, transform_indices = @transform_2, window_bounds = array<i64: 1, 512>}, {pipeline_mode = #tpu.pipeline_mode<synchronous>, transform_indices = @transform_3, window_bounds = array<i64: 512, 256>}, {pipeline_mode = #tpu.pipeline_mode<synchronous>, transform_indices = @transform_4, window_bounds = array<i64: 1, 256>}, {pipeline_mode = #tpu.pipeline_mode<synchronous>, transform_indices = @transform_5, window_bounds = array<i64: 1, 256>}, {pipeline_mode = #tpu.pipeline_mode<synchronous>, transform_indices = @transform_6, window_bounds = array<i64: 1, 1>}, {transform_indices = @transform_7, window_bounds = array<i64: 1, 2>}]} {
    %c0 = arith.constant 0 : index
    %c0_0 = arith.constant 0 : index
    %0 = vector.load %arg1[%c0, %c0_0] : memref<2x2048xf32, #tpu.memory_space<vmem>>, vector<2x2048xf32>
    %1 = arith.truncf %0 : vector<2x2048xf32> to vector<2x2048xbf16>
    %c0_1 = arith.constant 0 : index
    %c0_2 = arith.constant 0 : index
    %2 = vector.load %arg2[%c0_1, %c0_2] : memref<2048x512xbf16, #tpu.memory_space<vmem>>, vector<2048x512xbf16>
    %cst = arith.constant dense<0.000000e+00> : vector<2x512xf32>
    %3 = tpu.matmul %1, %2, %cst {dimension_numbers = #tpu.dot_dimension_numbers<[1], [0], [0], [1], [0, 0, 1, 1], [], []>} : vector<2x2048xbf16>, vector<2048x512xbf16>, vector<2x512xf32> -> vector<2x512xf32>
    %c0_3 = arith.constant 0 : index
    %c0_4 = arith.constant 0 : index
    %4 = vector.load %arg3[%c0_3, %c0_4] : memref<1x512xf32, #tpu.memory_space<vmem>>, vector<1x512xf32>
    %5 = vector.broadcast %4 : vector<1x512xf32> to vector<2x512xf32>
    %6 = arith.addf %3, %5 : vector<2x512xf32>
    %cst_5 = arith.constant 0.000000e+00 : f32
    %7 = vector.broadcast %cst_5 : f32 to vector<2x512xf32>
    %8 = arith.maximumf %6, %7 : vector<2x512xf32>
    %9 = arith.truncf %8 : vector<2x512xf32> to vector<2x512xbf16>
    %c0_6 = arith.constant 0 : index
    %c0_7 = arith.constant 0 : index
    %10 = vector.load %arg4[%c0_6, %c0_7] : memref<512x256xbf16, #tpu.memory_space<vmem>>, vector<512x256xbf16>
    %cst_8 = arith.constant dense<0.000000e+00> : vector<2x256xf32>
    %11 = tpu.matmul %9, %10, %cst_8 {dimension_numbers = #tpu.dot_dimension_numbers<[1], [0], [0], [1], [0, 0, 1, 1], [], []>} : vector<2x512xbf16>, vector<512x256xbf16>, vector<2x256xf32> -> vector<2x256xf32>
    %c0_9 = arith.constant 0 : index
    %c0_10 = arith.constant 0 : index
    %12 = vector.load %arg5[%c0_9, %c0_10] : memref<1x256xf32, #tpu.memory_space<vmem>>, vector<1x256xf32>
    %13 = vector.broadcast %12 : vector<1x256xf32> to vector<2x256xf32>
    %14 = arith.addf %11, %13 : vector<2x256xf32>
    %cst_11 = arith.constant 0.000000e+00 : f32
    %15 = vector.broadcast %cst_11 : f32 to vector<2x256xf32>
    %16 = arith.maximumf %14, %15 : vector<2x256xf32>
    %c0_12 = arith.constant 0 : index
    %c0_13 = arith.constant 0 : index
    %17 = vector.load %arg6[%c0_12, %c0_13] : memref<1x256xf32, #tpu.memory_space<vmem>>, vector<1x256xf32>
    %cst_14 = arith.constant dense<0.000000e+00> : vector<1x2xf32>
    %18 = tpu.matmul %17, %16, %cst_14 {dimension_numbers = #tpu.dot_dimension_numbers<[1], [1], [0], [0], [0, 0, 1, 0], [], []>} : vector<1x256xf32>, vector<2x256xf32>, vector<1x2xf32> -> vector<1x2xf32>
    %c0_15 = arith.constant 0 : index
    %c0_16 = arith.constant 0 : index
    %19 = vector.load %arg7[%c0_15, %c0_16] : memref<1x1xf32, #tpu.memory_space<vmem>>, vector<1x1xf32>
    %20 = vector.broadcast %19 : vector<1x1xf32> to vector<1x2xf32>
    %21 = arith.addf %18, %20 : vector<1x2xf32>
    %c0_17 = arith.constant 0 : index
    %c0_18 = arith.constant 0 : index
    %22 = vector.load %arg8[%c0_17, %c0_18] : memref<1x2xf32, #tpu.memory_space<vmem>>, vector<1x2xf32>
    tpu.vector_store %arg8[%c0_17, %c0_18], %21 {strides = array<i32>} : memref<1x2xf32, #tpu.memory_space<vmem>>, vector<1x2xf32>,
    return
  }
  func.func @transform_0(%arg0: i32) -> (i32, i32) {
    %c0_i32 = arith.constant 0 : i32
    %c0_i32_0 = arith.constant 0 : i32
    return %arg0, %c0_i32 : i32, i32
  }
  func.func @transform_1(%arg0: i32) -> (i32, i32) {
    %c0_i32 = arith.constant 0 : i32
    %c0_i32_0 = arith.constant 0 : i32
    %c0_i32_1 = arith.constant 0 : i32
    return %c0_i32, %c0_i32_0 : i32, i32
  }
  func.func @transform_2(%arg0: i32) -> (i32, i32) {
    %c0_i32 = arith.constant 0 : i32
    %c0_i32_0 = arith.constant 0 : i32
    %c0_i32_1 = arith.constant 0 : i32
    return %c0_i32, %c0_i32_0 : i32, i32
  }
  func.func @transform_3(%arg0: i32) -> (i32, i32) {
    %c0_i32 = arith.constant 0 : i32
    %c0_i32_0 = arith.constant 0 : i32
    %c0_i32_1 = arith.constant 0 : i32
    return %c0_i32, %c0_i32_0 : i32, i32
  }
  func.func @transform_4(%arg0: i32) -> (i32, i32) {
    %c0_i32 = arith.constant 0 : i32
    %c0_i32_0 = arith.constant 0 : i32
    %c0_i32_1 = arith.constant 0 : i32
    return %c0_i32, %c0_i32_0 : i32, i32
  }
  func.func @transform_5(%arg0: i32) -> (i32, i32) {
    %c0_i32 = arith.constant 0 : i32
    %c0_i32_0 = arith.constant 0 : i32
    %c0_i32_1 = arith.constant 0 : i32
    return %c0_i32, %c0_i32_0 : i32, i32
  }
  func.func @transform_6(%arg0: i32) -> (i32, i32) {
    %c0_i32 = arith.constant 0 : i32
    %c0_i32_0 = arith.constant 0 : i32
    %c0_i32_1 = arith.constant 0 : i32
    return %c0_i32, %c0_i32_0 : i32, i32
  }
  func.func @transform_7(%arg0: i32) -> (i32, i32) {
    %c0_i32 = arith.constant 0 : i32
    %c0_i32_0 = arith.constant 0 : i32
    return %c0_i32, %arg0 : i32, i32
  }
}

</mosaic_0001>

<llo_original>
// kernel: classifier_forward.1
$region0: #{classifier_forward.1}
  #allocation0 [shape = 'u32[]', space=smem, size = 0x4, offset = 0x4, fixed_abs, tag = 'smem constant byte address 0x4 - core index']
  #allocation1 [shape = 'u32[72,128]{1,0:T(1,128)}', space=vmem, size = 0x9000, scoped, tag = 'internal scratch']
  #allocation2 [shape = 'f32[1,1]{1,0:T(1,128)S(1)}', space=vmem, size = 0x200, scoped, tag = 'scoped memory for classifier_forward.1']
  %s0 = inlined_call_operand.vmem [shape: f32[2,2048], index: 0, kind: input, shape index: {}]
  %s1 = inlined_call_operand.hbm [shape: bf16[2048,512], index: 1, kind: input, shape index: {}]
  %s2 = inlined_call_operand.hbm [shape: f32[1,512], index: 2, kind: input, shape index: {}]
  %s3 = inlined_call_operand.hbm [shape: bf16[512,256], index: 3, kind: input, shape index: {}]
  %s4 = inlined_call_operand.hbm [shape: f32[1,256], index: 4, kind: input, shape index: {}]
  %s5 = inlined_call_operand.hbm [shape: f32[1,256], index: 5, kind: input, shape index: {}]
  %s6 = inlined_call_operand.<no memory space> [shape: f32[1,1], index: 6, kind: input, shape index: {}]
  %s7 = inlined_call_operand.hbm [shape: f32[1,2], index: 7, kind: output, shape index: {}]
  %s8 = sld [smem:[#allocation0]]
  $region58: #{classifier_forward.1} parent=0
    _
  %s10 = ssub.s32 1, %s8
  %s11 = scalar_select 0, %s10, %s8
  %v12 = vstv %s6
  %13 = vst [vmem:[#allocation2] sm:$0x1] %v12
  $region1: #{classifier_forward.1} parent=0
    #allocation3 [shape = 'u8[2097152]{0}', space=vmem, size = 0x200000, scoped, tag = 'input window, operand 1, single buffered']
    #allocation4 [shape = 's32[1]{0}', space=sflag, size = 0x4, scoped, tag = 'scoped memory for classifier_forward.1']
    #allocation5 [shape = 's32[1]{0}', space=sflag, size = 0x4, scoped, tag = 'scoped memory for classifier_forward.1']
    #allocation6 [shape = 'u8[2048]{0}', space=vmem, size = 0x800, scoped, tag = 'input window, operand 2, single buffered']
    #allocation7 [shape = 's32[1]{0}', space=sflag, size = 0x4, scoped, tag = 'scoped memory for classifier_forward.1']
    #allocation8 [shape = 'u8[262144]{0}', space=vmem, size = 0x40000, scoped, tag = 'input window, operand 3, single buffered']
    #allocation9 [shape = 'u8[1024]{0}', space=vmem, size = 0x400, scoped, tag = 'input window, operand 4, single buffered']
    #allocation10 [shape = 's32[1]{0}', space=sflag, size = 0x4, scoped, tag = 'scoped memory for classifier_forward.1']
    #allocation11 [shape = 'u8[1024]{0}', space=vmem, size = 0x400, scoped, tag = 'input window, operand 5, single buffered']
    #allocation12 [shape = 'u8[512]{0}', space=vmem, size = 0x400, scoped, tag = 'output window, operand 0, single buffered']
    %14 = vsyncpa [#allocation4], 0
    %15 = vsyncpa [#allocation7], 0
    %16 = vsyncpa [#allocation10], 0
    %17 = vsyncpa [#allocation5], 0
    // Predicated region
    $region2: #{classifier_forward.1} parent=1 // pred_check
      _
    $region3: #{classifier_forward.1} parent=1 // pred_check_branch
      %19 = sbr.rel (0) target = $region5
    $region4: #{classifier_forward.1} parent=1 // pred_region
      _
    $region5: #{classifier_forward.1} parent=1 // pred_fallthru
      _
    // Predicated region
    $region6: #{classifier_forward.1} parent=1 // pred_check
      _
    $region7: #{classifier_forward.1} parent=1 // pred_check_branch
      %21 = sbr.rel (0) target = $region9
    $region8: #{classifier_forward.1} parent=1 // pred_region
      %23 = vsyncadd [#allocation4], 0
      %s24 = sshll.u32 %s1, 4
      %s25 = int_to_ptr.hbm [resolvable:$true] %s24
      %s26 = sshll.u32 [#allocation3], 4
      %s27 = int_to_ptr.vmem [resolvable:$true] %s26
      %32 = dma.hbm_to_vmem [thread:$0]  %s25, 65536, %s27, [#allocation4], 256, 256, 16
    $region9: #{classifier_forward.1} parent=1 // pred_fallthru
      _
    // Predicated region
    $region10: #{classifier_forward.1} parent=1 // pred_check
      _
    $region11: #{classifier_forward.1} parent=1 // pred_check_branch
      %34 = sbr.rel (0) target = $region13
    $region12: #{classifier_forward.1} parent=1 // pred_region
      %36 = vsyncadd [#allocation7], 0
      %s38 = sshll.u32 %s2, 4
      %s39 = int_to_ptr.hbm [resolvable:$true] %s38
      %s40 = sshll.u32 [#allocation6], 4
      %s41 = int_to_ptr.vmem [resolvable:$true] %s40
      %43 = dma.hbm_to_vmem [thread:$0]  %s39, 64, %s41, [#allocation7]
    $region13: #{classifier_forward.1} parent=1 // pred_fallthru
      _
    // Predicated region
    $region14: #{classifier_forward.1} parent=1 // pred_check
      _
    $region15: #{classifier_forward.1} parent=1 // pred_check_branch
      %45 = sbr.rel (0) target = $region17
    $region16: #{classifier_forward.1} parent=1 // pred_region
      %47 = vsyncadd [#allocation7], 0
      %s48 = sshll.u32 %s3, 4
      %s49 = int_to_ptr.hbm [resolvable:$true] %s48
      %s50 = sshll.u32 [#allocation8], 4
      %s51 = int_to_ptr.vmem [resolvable:$true] %s50
      %56 = dma.hbm_to_vmem [thread:$0]  %s49, 8192, %s51, [#allocation7], 128, 128, 8
    $region17: #{classifier_forward.1} parent=1 // pred_fallthru
      _
    // Predicated region
    $region18: #{classifier_forward.1} parent=1 // pred_check
      _
    $region19: #{classifier_forward.1} parent=1 // pred_check_branch
      %58 = sbr.rel (0) target = $region21
    $region20: #{classifier_forward.1} parent=1 // pred_region
      %60 = vsyncadd [#allocation10], 0
      %s62 = sshll.u32 %s4, 4
      %s63 = int_to_ptr.hbm [resolvable:$true] %s62
      %s64 = sshll.u32 [#allocation9], 4
      %s65 = int_to_ptr.vmem [resolvable:$true] %s64
      %67 = dma.hbm_to_vmem [thread:$0]  %s63, 32, %s65, [#allocation10]
    $region21: #{classifier_forward.1} parent=1 // pred_fallthru
      _
    // Predicated region
    $region22: #{classifier_forward.1} parent=1 // pred_check
      _
    $region23: #{classifier_forward.1} parent=1 // pred_check_branch
      %69 = sbr.rel (0) target = $region25
    $region24: #{classifier_forward.1} parent=1 // pred_region
      %71 = vsyncadd [#allocation10], 0
      %s73 = sshll.u32 %s5, 4
      %s74 = int_to_ptr.hbm [resolvable:$true] %s73
      %s75 = sshll.u32 [#allocation11], 4
      %s76 = int_to_ptr.vmem [resolvable:$true] %s75
      %78 = dma.hbm_to_vmem [thread:$0]  %s74, 32, %s76, [#allocation10]
    $region25: #{classifier_forward.1} parent=1 // pred_fallthru
      _
    // Predicated region
    $region26: #{classifier_forward.1} parent=1 // pred_check
      _
    $region27: #{classifier_forward.1} parent=1 // pred_check_branch
      %80 = sbr.rel (0) target = $region29
    $region28: #{classifier_forward.1} parent=1 // pred_region
      _
    $region29: #{classifier_forward.1} parent=1 // pred_fallthru
      _
    // Predicated region
    $region30: #{classifier_forward.1} parent=1 // pred_check
      _
    $region31: #{classifier_forward.1} parent=1 // pred_check_branch
      %82 = sbr.rel (0) target = $region33
    $region32: #{classifier_forward.1} parent=1 // pred_region
      %84 = dma.done [#allocation4], 65536
    $region33: #{classifier_forward.1} parent=1 // pred_fallthru
      _
    // Predicated region
    $region34: #{classifier_forward.1} parent=1 // pred_check
      _
    $region35: #{classifier_forward.1} parent=1 // pred_check_branch
      %86 = sbr.rel (0) target = $region37
    $region36: #{classifier_forward.1} parent=1 // pred_region
      %88 = dma.done [#allocation7], 64
    $region37: #{classifier_forward.1} parent=1 // pred_fallthru
      _
    // Predicated region
    $region38: #{classifier_forward.1} parent=1 // pred_check
      _
    $region39: #{classifier_forward.1} parent=1 // pred_check_branch
      %90 = sbr.rel (0) target = $region41
    $region40: #{classifier_forward.1} parent=1 // pred_region
      %92 = dma.done [#allocation7], 8192
    $region41: #{classifier_forward.1} parent=1 // pred_fallthru
      _
    // Predicated region
    $region42: #{classifier_forward.1} parent=1 // pred_check
      _
    $region43: #{classifier_forward.1} parent=1 // pred_check_branch
      %94 = sbr.rel (0) target = $region45
    $region44: #{classifier_forward.1} parent=1 // pred_region
      %96 = dma.done [#allocation10], 32
    $region45: #{classifier_forward.1} parent=1 // pred_fallthru
      _
    // Predicated region
    $region46: #{classifier_forward.1} parent=1 // pred_check
      _
    $region47: #{classifier_forward.1} parent=1 // pred_check_branch
      %98 = sbr.rel (0) target = $region49
    $region48: #{classifier_forward.1} parent=1 // pred_region
      %100 = dma.done [#allocation10], 32
    $region49: #{classifier_forward.1} parent=1 // pred_fallthru
      _
    %v101 = vld [vmem:[%s0] sm:$0xff]
    %v102 = vld [vmem:[%s0 + $0x8] sm:$0xff]
    %v103 = vld [vmem:[%s0 + $0x10] sm:$0xff]
    %v104 = vld [vmem:[%s0 + $0x18] sm:$0xff]
    %109 = vst [vmem:[#allocation1] ss:$4 sm:$0xff] %v101
    %s110 = scalar_lea.vmem [#allocation1], 32
    %111 = vst [vmem:[%s110] ss:$4 sm:$0xff] %v102
    %v112 = vld.sshfl [vmem:[#allocation1] sm:$0xff pattern:$0x73625140]
    %v113 = vld.sshfl [vmem:[#allocation1 + $0x8] sm:$0xff pattern:$0x73625140]
    %v114 = vld.sshfl [vmem:[#allocation1 + $0x10] sm:$0xff pattern:$0x73625140]
    %v115 = vld.sshfl [vmem:[#allocation1 + $0x18] sm:$0xff pattern:$0x73625140]
    %v116 = vld.sshfl [vmem:[#allocation1 + $0x20] sm:$0xff pattern:$0x73625140]
    %v117 = vld.sshfl [vmem:[#allocation1 + $0x28] sm:$0xff pattern:$0x73625140]
    %v118 = vld.sshfl [vmem:[#allocation1 + $0x30] sm:$0xff pattern:$0x73625140]
    %v119 = vld.sshfl [vmem:[#allocation1 + $0x38] sm:$0xff pattern:$0x73625140]
    %120 = vst [vmem:[#allocation1] ss:$4 sm:$0xff] %v103
    %121 = vst [vmem:[%s110] ss:$4 sm:$0xff] %v104
    %v122 = vld.sshfl [vmem:[#allocation1] sm:$0xff pattern:$0x73625140]
    %v123 = vld.sshfl [vmem:[#allocation1 + $0x8] sm:$0xff pattern:$0x73625140]
    %v124 = vld.sshfl [vmem:[#allocation1 + $0x10] sm:$0xff pattern:$0x73625140]
    %v125 = vld.sshfl [vmem:[#allocation1 + $0x18] sm:$0xff pattern:$0x73625140]
    %v126 = vld.sshfl [vmem:[#allocation1 + $0x20] sm:$0xff pattern:$0x73625140]
    %v127 = vld.sshfl [vmem:[#allocation1 + $0x28] sm:$0xff pattern:$0x73625140]
    %v128 = vld.sshfl [vmem:[#allocation1 + $0x30] sm:$0xff pattern:$0x73625140]
    %v129 = vld.sshfl [vmem:[#allocation1 + $0x38] sm:$0xff pattern:$0x73625140]
    %v146 = vpack.c.bf16 %v112, %v112
    %v147 = vpack.c.bf16 %v113, %v113
    %v148 = vpack.c.bf16 %v114, %v114
    %v149 = vpack.c.bf16 %v115, %v115
    %v150 = vpack.c.bf16 %v116, %v116
    %v151 = vpack.c.bf16 %v117, %v117
    %v152 = vpack.c.bf16 %v118, %v118
    %v153 = vpack.c.bf16 %v119, %v119
    %v154 = vpack.c.bf16 %v122, %v122
    %v155 = vpack.c.bf16 %v123, %v123
    %v156 = vpack.c.bf16 %v124, %v124
    %v157 = vpack.c.bf16 %v125, %v125
    %v158 = vpack.c.bf16 %v126, %v126
    %v159 = vpack.c.bf16 %v127, %v127
    %v160 = vpack.c.bf16 %v128, %v128
    %v161 = vpack.c.bf16 %v129, %v129
    %v162 = vld [vmem:[#allocation3] sm:$0xff]
    %v163 = vld [vmem:[#allocation3 + $0x8] sm:$0xff]
    %v164 = vld [vmem:[#allocation3 + $0x10] sm:$0xff]
    %v165 = vld [vmem:[#allocation3 + $0x18] sm:$0xff]
    %v166 = vld [vmem:[#allocation3 + $0x20] sm:$0xff]
    %v167 = vld [vmem:[#allocation3 + $0x28] sm:$0xff]
    %v168 = vld [vmem:[#allocation3 + $0x30] sm:$0xff]
    %v169 = vld [vmem:[#allocation3 + $0x38] sm:$0xff]
    %v170 = vld [vmem:[#allocation3 + $0x40] sm:$0xff]
    %v171 = vld [vmem:[#allocation3 + $0x48] sm:$0xff]
    %v172 = vld [vmem:[#allocation3 + $0x50] sm:$0xff]
    %v173 = vld [vmem:[#allocation3 + $0x58] sm:$0xff]
    %v174 = vld [vmem:[#allocation3 + $0x60] sm:$0xff]
    %v175 = vld [vmem:[#allocation3 + $0x68] sm:$0xff]
    %v176 = vld [vmem:[#allocation3 + $0x70] sm:$0xff]
    %v177 = vld [vmem:[#allocation3 + $0x78] sm:$0xff]
    %v178 = vld [vmem:[#allocation3 + $0x80] sm:$0xff]
    %v179 = vld [vmem:[#allocation3 + $0x88] sm:$0xff]
    %v180 = vld [vmem:[#allocation3 + $0x90] sm:$0xff]
    %v181 = vld [vmem:[#allocation3 + $0x98] sm:$0xff]
    %v182 = vld [vmem:[#allocation3 + $0xa0] sm:$0xff]
    %v183 = vld [vmem:[#allocation3 + $0xa8] sm:$0xff]
    %v184 = vld [vmem:[#allocation3 + $0xb0] sm:$0xff]
    %v185 = vld [vmem:[#allocation3 + $0xb8] sm:$0xff]
    %v186 = vld [vmem:[#allocation3 + $0xc0] sm:$0xff]
    %v187 = vld [vmem:[#allocation3 + $0xc8] sm:$0xff]
    %v188 = vld [vmem:[#allocation3 + $0xd0] sm:$0xff]
    %v189 = vld [vmem:[#allocation3 + $0xd8] sm:$0xff]
    %v190 = vld [vmem:[#allocation3 + $0xe0] sm:$0xff]
    %v191 = vld [vmem:[#allocation3 + $0xe8] sm:$0xff]
    %v192 = vld [vmem:[#allocation3 + $0xf0] sm:$0xff]
    %v193 = vld [vmem:[#allocation3 + $0xf8] sm:$0xff]
    %v194 = vld [vmem:[#allocation3 + $0x100] sm:$0xff]
    %v195 = vld [vmem:[#allocation3 + $0x108] sm:$0xff]
    %v196 = vld [vmem:[#allocation3 + $0x110] sm:$0xff]
    %v197 = vld [vmem:[#allocation3 + $0x118] sm:$0xff]
    %v198 = vld [vmem:[#allocation3 + $0x120] sm:$0xff]
    %v199 = vld [vmem:[#allocation3 + $0x128] sm:$0xff]
    %v200 = vld [vmem:[#allocation3 + $0x130] sm:$0xff]
    %v201 = vld [vmem:[#allocation3 + $0x138] sm:$0xff]
    %v202 = vld [vmem:[#allocation3 + $0x140] sm:$0xff]
    %v203 = vld [vmem:[#allocation3 + $0x148] sm:$0xff]
    %v204 = vld [vmem:[#allocation3 + $0x150] sm:$0xff]
    %v205 = vld [vmem:[#allocation3 + $0x158] sm:$0xff]
    %v206 = vld [vmem:[#allocation3 + $0x160] sm:$0xff]
    %v207 = vld [vmem:[#allocation3 + $0x168] sm:$0xff]
    %v208 = vld [vmem:[#allocation3 + $0x170] sm:$0xff]
    %v209 = vld [vmem:[#allocation3 + $0x178] sm:$0xff]
    %v210 = vld [vmem:[#allocation3 + $0x180] sm:$0xff]
    %v211 = vld [vmem:[#allocation3 + $0x188] sm:$0xff]
    %v212 = vld [vmem:[#allocation3 + $0x190] sm:$0xff]
    %v213 = vld [vmem:[#allocation3 + $0x198] sm:$0xff]
    %v214 = vld [vmem:[#allocation3 + $0x1a0] sm:$0xff]
    %v215 = vld [vmem:[#allocation3 + $0x1a8] sm:$0xff]
    %v216 = vld [vmem:[#allocation3 + $0x1b0] sm:$0xff]
    %v217 = vld [vmem:[#allocation3 + $0x1b8] sm:$0xff]
    %v218 = vld [vmem:[#allocation3 + $0x1c0] sm:$0xff]
    %v219 = vld [vmem:[#allocation3 + $0x1c8] sm:$0xff]
    %v220 = vld [vmem:[#allocation3 + $0x1d0] sm:$0xff]
    %v221 = vld [vmem:[#allocation3 + $0x1d8] sm:$0xff]
    %v222 = vld [vmem:[#allocation3 + $0x1e0] sm:$0xff]
    %v223 = vld [vmem:[#allocation3 + $0x1e8] sm:$0xff]
    %v224 = vld [vmem:[#allocation3 + $0x1f0] sm:$0xff]
    %v225 = vld [vmem:[#allocation3 + $0x1f8] sm:$0xff]
    %v226 = vld [vmem:[#allocation3 + $0x200] sm:$0xff]
    %v227 = vld [vmem:[#allocation3 + $0x208] sm:$0xff]
    %v228 = vld [vmem:[#allocation3 + $0x210] sm:$0xff]
    %v229 = vld [vmem:[#allocation3 + $0x218] sm:$0xff]
    %v230 = vld [vmem:[#allocation3 + $0x220] sm:$0xff]
    %v231 = vld [vmem:[#allocation3 + $0x228] sm:$0xff]
    %v232 = vld [vmem:[#allocation3 + $0x230] sm:$0xff]
    %v233 = vld [vmem:[#allocation3 + $0x238] sm:$0xff]
    %v234 = vld [vmem:[#allocation3 + $0x240] sm:$0xff]
    %v235 = vld [vmem:[#allocation3 + $0x248] sm:$0xff]
    %v236 = vld [vmem:[#allocation3 + $0x250] sm:$0xff]
    %v237 = vld [vmem:[#allocation3 + $0x258] sm:$0xff]
    %v238 = vld [vmem:[#allocation3 + $0x260] sm:$0xff]
    %v239 = vld [vmem:[#allocation3 + $0x268] sm:$0xff]
    %v240 = vld [vmem:[#allocation3 + $0x270] sm:$0xff]
    %v241 = vld [vmem:[#allocation3 + $0x278] sm:$0xff]
    %v242 = vld [vmem:[#allocation3 + $0x280] sm:$0xff]
    %v243 = vld [vmem:[#allocation3 + $0x288] sm:$0xff]
    %v244 = vld [vmem:[#allocation3 + $0x290] sm:$0xff]
    %v245 = vld [vmem:[#allocation3 + $0x298] sm:$0xff]
    %v246 = vld [vmem:[#allocation3 + $0x2a0] sm:$0xff]
    %v247 = vld [vmem:[#allocation3 + $0x2a8] sm:$0xff]
    %v248 = vld [vmem:[#allocation3 + $0x2b0] sm:$0xff]
    %v249 = vld [vmem:[#allocation3 + $0x2b8] sm:$0xff]
    %v250 = vld [vmem:[#allocation3 + $0x2c0] sm:$0xff]
    %v251 = vld [vmem:[#allocation3 + $0x2c8] sm:$0xff]
    %v252 = vld [vmem:[#allocation3 + $0x2d0] sm:$0xff]
    %v253 = vld [vmem:[#allocation3 + $0x2d8] sm:$0xff]
    %v254 = vld [vmem:[#allocation3 + $0x2e0] sm:$0xff]
    %v255 = vld [vmem:[#allocation3 + $0x2e8] sm:$0xff]
    %v256 = vld [vmem:[#allocation3 + $0x2f0] sm:$0xff]
    %v257 = vld [vmem:[#allocation3 + $0x2f8] sm:$0xff]
    %v258 = vld [vmem:[#allocation3 + $0x300] sm:$0xff]
    %v259 = vld [vmem:[#allocation3 + $0x308] sm:$0xff]
    %v260 = vld [vmem:[#allocation3 + $0x310] sm:$0xff]
    %v261 = vld [vmem:[#allocation3 + $0x318] sm:$0xff]
    %v262 = vld [vmem:[#allocation3 + $0x320] sm:$0xff]
    %v263 = vld [vmem:[#allocation3 + $0x328] sm:$0xff]
    %v264 = vld [vmem:[#allocation3 + $0x330] sm:$0xff]
    %v265 = vld [vmem:[#allocation3 + $0x338] sm:$0xff]
    %v266 = vld [vmem:[#allocation3 + $0x340] sm:$0xff]
    %v267 = vld [vmem:[#allocation3 + $0x348] sm:$0xff]
    %v268 = vld [vmem:[#allocation3 + $0x350] sm:$0xff]
    %v269 = vld [vmem:[#allocation3 + $0x358] sm:$0xff]
    %v270 = vld [vmem:[#allocation3 + $0x360] sm:$0xff]
    %v271 = vld [vmem:[#allocation3 + $0x368] sm:$0xff]
    %v272 = vld [vmem:[#allocation3 + $0x370] sm:$0xff]
    %v273 = vld [vmem:[#allocation3 + $0x378] sm:$0xff]
    %v274 = vld [vmem:[#allocation3 + $0x380] sm:$0xff]
    %v275 = vld [vmem:[#allocation3 + $0x388] sm:$0xff]
    %v276 = vld [vmem:[#allocation3 + $0x390] sm:$0xff]
    %v277 = vld [vmem:[#allocation3 + $0x398] sm:$0xff]
    %v278 = vld [vmem:[#allocation3 + $0x3a0] sm:$0xff]
    %v279 = vld [vmem:[#allocation3 + $0x3a8] sm:$0xff]
    %v280 = vld [vmem:[#allocation3 + $0x3b0] sm:$0xff]
    %v281 = vld [vmem:[#allocation3 + $0x3b8] sm:$0xff]
    %v282 = vld [vmem:[#allocation3 + $0x3c0] sm:$0xff]
    %v283 = vld [vmem:[#allocation3 + $0x3c8] sm:$0xff]
    %v284 = vld [vmem:[#allocation3 + $0x3d0] sm:$0xff]
    %v285 = vld [vmem:[#allocation3 + $0x3d8] sm:$0xff]
    %v286 = vld [vmem:[#allocation3 + $0x3e0] sm:$0xff]
    %v287 = vld [vmem:[#allocation3 + $0x3e8] sm:$0xff]
    %v288 = vld [vmem:[#allocation3 + $0x3f0] sm:$0xff]
    %v289 = vld [vmem:[#allocation3 + $0x3f8] sm:$0xff]
    %v290 = vld [vmem:[#allocation3 + $0x400] sm:$0xff]
    %v291 = vld [vmem:[#allocation3 + $0x408] sm:$0xff]
    %v292 = vld [vmem:[#allocation3 + $0x410] sm:$0xff]
    %v293 = vld [vmem:[#allocation3 + $0x418] sm:$0xff]
    %v294 = vld [vmem:[#allocation3 + $0x420] sm:$0xff]
    %v295 = vld [vmem:[#allocation3 + $0x428] sm:$0xff]
    %v296 = vld [vmem:[#allocation3 + $0x430] sm:$0xff]
    %v297 = vld [vmem:[#allocation3 + $0x438] sm:$0xff]
    %v298 = vld [vmem:[#allocation3 + $0x440] sm:$0xff]
    %v299 = vld [vmem:[#allocation3 + $0x448] sm:$0xff]
    %v300 = vld [vmem:[#allocation3 + $0x450] sm:$0xff]
    %v301 = vld [vmem:[#allocation3 + $0x458] sm:$0xff]
    %v302 = vld [vmem:[#allocation3 + $0x460] sm:$0xff]
    %v303 = vld [vmem:[#allocation3 + $0x468] sm:$0xff]
    %v304 = vld [vmem:[#allocation3 + $0x470] sm:$0xff]
    %v305 = vld [vmem:[#allocation3 + $0x478] sm:$0xff]
    %v306 = vld [vmem:[#allocation3 + $0x480] sm:$0xff]
    %v307 = vld [vmem:[#allocation3 + $0x488] sm:$0xff]
    %v308 = vld [vmem:[#allocation3 + $0x490] sm:$0xff]
    %v309 = vld [vmem:[#allocation3 + $0x498] sm:$0xff]
    %v310 = vld [vmem:[#allocation3 + $0x4a0] sm:$0xff]
    %v311 = vld [vmem:[#allocation3 + $0x4a8] sm:$0xff]
    %v312 = vld [vmem:[#allocation3 + $0x4b0] sm:$0xff]
    %v313 = vld [vmem:[#allocation3 + $0x4b8] sm:$0xff]
    %v314 = vld [vmem:[#allocation3 + $0x4c0] sm:$0xff]
    %v315 = vld [vmem:[#allocation3 + $0x4c8] sm:$0xff]
    %v316 = vld [vmem:[#allocation3 + $0x4d0] sm:$0xff]
    %v317 = vld [vmem:[#allocation3 + $0x4d8] sm:$0xff]
    %v318 = vld [vmem:[#allocation3 + $0x4e0] sm:$0xff]
    %v319 = vld [vmem:[#allocation3 + $0x4e8] sm:$0xff]
    %v320 = vld [vmem:[#allocation3 + $0x4f0] sm:$0xff]
    %v321 = vld [vmem:[#allocation3 + $0x4f8] sm:$0xff]
    %v322 = vld [vmem:[#allocation3 + $0x500] sm:$0xff]
    %v323 = vld [vmem:[#allocation3 + $0x508] sm:$0xff]
    %v324 = vld [vmem:[#allocation3 + $0x510] sm:$0xff]
    %v325 = vld [vmem:[#allocation3 + $0x518] sm:$0xff]
    %v326 = vld [vmem:[#allocation3 + $0x520] sm:$0xff]
    %v327 = vld [vmem:[#allocation3 + $0x528] sm:$0xff]
    %v328 = vld [vmem:[#allocation3 + $0x530] sm:$0xff]
    %v329 = vld [vmem:[#allocation3 + $0x538] sm:$0xff]
    %v330 = vld [vmem:[#allocation3 + $0x540] sm:$0xff]
    %v331 = vld [vmem:[#allocation3 + $0x548] sm:$0xff]
    %v332 = vld [vmem:[#allocation3 + $0x550] sm:$0xff]
    %v333 = vld [vmem:[#allocation3 + $0x558] sm:$0xff]
    %v334 = vld [vmem:[#allocation3 + $0x560] sm:$0xff]
    %v335 = vld [vmem:[#allocation3 + $0x568] sm:$0xff]
    %v336 = vld [vmem:[#allocation3 + $0x570] sm:$0xff]
    %v337 = vld [vmem:[#allocation3 + $0x578] sm:$0xff]
    %v338 = vld [vmem:[#allocation3 + $0x580] sm:$0xff]
    %v339 = vld [vmem:[#allocation3 + $0x588] sm:$0xff]
    %v340 = vld [vmem:[#allocation3 + $0x590] sm:$0xff]
    %v341 = vld [vmem:[#allocation3 + $0x598] sm:$0xff]
    %v342 = vld [vmem:[#allocation3 + $0x5a0] sm:$0xff]
    %v343 = vld [vmem:[#allocation3 + $0x5a8] sm:$0xff]
    %v344 = vld [vmem:[#allocation3 + $0x5b0] sm:$0xff]
    %v345 = vld [vmem:[#allocation3 + $0x5b8] sm:$0xff]
    %v346 = vld [vmem:[#allocation3 + $0x5c0] sm:$0xff]
    %v347 = vld [vmem:[#allocation3 + $0x5c8] sm:$0xff]
    %v348 = vld [vmem:[#allocation3 + $0x5d0] sm:$0xff]
    %v349 = vld [vmem:[#allocation3 + $0x5d8] sm:$0xff]
    %v350 = vld [vmem:[#allocation3 + $0x5e0] sm:$0xff]
    %v351 = vld [vmem:[#allocation3 + $0x5e8] sm:$0xff]
    %v352 = vld [vmem:[#allocation3 + $0x5f0] sm:$0xff]
    %v353 = vld [vmem:[#allocation3 + $0x5f8] sm:$0xff]
    %v354 = vld [vmem:[#allocation3 + $0x600] sm:$0xff]
    %v355 = vld [vmem:[#allocation3 + $0x608] sm:$0xff]
    %v356 = vld [vmem:[#allocation3 + $0x610] sm:$0xff]
    %v357 = vld [vmem:[#allocation3 + $0x618] sm:$0xff]
    %v358 = vld [vmem:[#allocation3 + $0x620] sm:$0xff]
    %v359 = vld [vmem:[#allocation3 + $0x628] sm:$0xff]
    %v360 = vld [vmem:[#allocation3 + $0x630] sm:$0xff]
    %v361 = vld [vmem:[#allocation3 + $0x638] sm:$0xff]
    %v362 = vld [vmem:[#allocation3 + $0x640] sm:$0xff]
    %v363 = vld [vmem:[#allocation3 + $0x648] sm:$0xff]
    %v364 = vld [vmem:[#allocation3 + $0x650] sm:$0xff]
    %v365 = vld [vmem:[#allocation3 + $0x658] sm:$0xff]
    %v366 = vld [vmem:[#allocation3 + $0x660] sm:$0xff]
    %v367 = vld [vmem:[#allocation3 + $0x668] sm:$0xff]
    %v368 = vld [vmem:[#allocation3 + $0x670] sm:$0xff]
    %v369 = vld [vmem:[#allocation3 + $0x678] sm:$0xff]
    %v370 = vld [vmem:[#allocation3 + $0x680] sm:$0xff]
    %v371 = vld [vmem:[#allocation3 + $0x688] sm:$0xff]
    %v372 = vld [vmem:[#allocation3 + $0x690] sm:$0xff]
    %v373 = vld [vmem:[#allocation3 + $0x698] sm:$0xff]
    %v374 = vld [vmem:[#allocation3 + $0x6a0] sm:$0xff]
    %v375 = vld [vmem:[#allocation3 + $0x6a8] sm:$0xff]
    %v376 = vld [vmem:[#allocation3 + $0x6b0] sm:$0xff]
    %v377 = vld [vmem:[#allocation3 + $0x6b8] sm:$0xff]
    %v378 = vld [vmem:[#allocation3 + $0x6c0] sm:$0xff]
    %v379 = vld [vmem:[#allocation3 + $0x6c8] sm:$0xff]
    %v380 = vld [vmem:[#allocation3 + $0x6d0] sm:$0xff]
    %v381 = vld [vmem:[#allocation3 + $0x6d8] sm:$0xff]
    %v382 = vld [vmem:[#allocation3 + $0x6e0] sm:$0xff]
    %v383 = vld [vmem:[#allocation3 + $0x6e8] sm:$0xff]
    %v384 = vld [vmem:[#allocation3 + $0x6f0] sm:$0xff]
    %v385 = vld [vmem:[#allocation3 + $0x6f8] sm:$0xff]
    %v386 = vld [vmem:[#allocation3 + $0x700] sm:$0xff]
    %v387 = vld [vmem:[#allocation3 + $0x708] sm:$0xff]
    %v388 = vld [vmem:[#allocation3 + $0x710] sm:$0xff]
    %v389 = vld [vmem:[#allocation3 + $0x718] sm:$0xff]
    %v390 = vld [vmem:[#allocation3 + $0x720] sm:$0xff]
    %v391 = vld [vmem:[#allocation3 + $0x728] sm:$0xff]
    %v392 = vld [vmem:[#allocation3 + $0x730] sm:$0xff]
    %v393 = vld [vmem:[#allocation3 + $0x738] sm:$0xff]
    %v394 = vld [vmem:[#allocation3 + $0x740] sm:$0xff]
    %v395 = vld [vmem:[#allocation3 + $0x748] sm:$0xff]
    %v396 = vld [vmem:[#allocation3 + $0x750] sm:$0xff]
    %v397 = vld [vmem:[#allocation3 + $0x758] sm:$0xff]
    %v398 = vld [vmem:[#allocation3 + $0x760] sm:$0xff]
    %v399 = vld [vmem:[#allocation3 + $0x768] sm:$0xff]
    %v400 = vld [vmem:[#allocation3 + $0x770] sm:$0xff]
    %v401 = vld [vmem:[#allocation3 + $0x778] sm:$0xff]
    %v402 = vld [vmem:[#allocation3 + $0x780] sm:$0xff]
    %v403 = vld [vmem:[#allocation3 + $0x788] sm:$0xff]
    %v404 = vld [vmem:[#allocation3 + $0x790] sm:$0xff]
    %v405 = vld [vmem:[#allocation3 + $0x798] sm:$0xff]
    %v406 = vld [vmem:[#allocation3 + $0x7a0] sm:$0xff]
    %v407 = vld [vmem:[#allocation3 + $0x7a8] sm:$0xff]
    %v408 = vld [vmem:[#allocation3 + $0x7b0] sm:$0xff]
    %v409 = vld [vmem:[#allocation3 + $0x7b8] sm:$0xff]
    %v410 = vld [vmem:[#allocation3 + $0x7c0] sm:$0xff]
    %v411 = vld [vmem:[#allocation3 + $0x7c8] sm:$0xff]
    %v412 = vld [vmem:[#allocation3 + $0x7d0] sm:$0xff]
    %v413 = vld [vmem:[#allocation3 + $0x7d8] sm:$0xff]
    %v414 = vld [vmem:[#allocation3 + $0x7e0] sm:$0xff]
    %v415 = vld [vmem:[#allocation3 + $0x7e8] sm:$0xff]
    %v416 = vld [vmem:[#allocation3 + $0x7f0] sm:$0xff]
    %v417 = vld [vmem:[#allocation3 + $0x7f8] sm:$0xff]
    %v418 = vld [vmem:[#allocation3 + $0x800] sm:$0xff]
    %v419 = vld [vmem:[#allocation3 + $0x808] sm:$0xff]
    %v420 = vld [vmem:[#allocation3 + $0x810] sm:$0xff]
    %v421 = vld [vmem:[#allocation3 + $0x818] sm:$0xff]
    %v422 = vld [vmem:[#allocation3 + $0x820] sm:$0xff]
    %v423 = vld [vmem:[#allocation3 + $0x828] sm:$0xff]
    %v424 = vld [vmem:[#allocation3 + $0x830] sm:$0xff]
    %v425 = vld [vmem:[#allocation3 + $0x838] sm:$0xff]
    %v426 = vld [vmem:[#allocation3 + $0x840] sm:$0xff]
    %v427 = vld [vmem:[#allocation3 + $0x848] sm:$0xff]
    %v428 = vld [vmem:[#allocation3 + $0x850] sm:$0xff]
    %v429 = vld [vmem:[#allocation3 + $0x858] sm:$0xff]
    %v430 = vld [vmem:[#allocation3 + $0x860] sm:$0xff]
    %v431 = vld [vmem:[#allocation3 + $0x868] sm:$0xff]
    %v432 = vld [vmem:[#allocation3 + $0x870] sm:$0xff]
    %v433 = vld [vmem:[#allocation3 + $0x878] sm:$0xff]
    %v434 = vld [vmem:[#allocation3 + $0x880] sm:$0xff]
    %v435 = vld [vmem:[#allocation3 + $0x888] sm:$0xff]
    %v436 = vld [vmem:[#allocation3 + $0x890] sm:$0xff]
    %v437 = vld [vmem:[#allocation3 + $0x898] sm:$0xff]
    %v438 = vld [vmem:[#allocation3 + $0x8a0] sm:$0xff]
    %v439 = vld [vmem:[#allocation3 + $0x8a8] sm:$0xff]
    %v440 = vld [vmem:[#allocation3 + $0x8b0] sm:$0xff]
    %v441 = vld [vmem:[#allocation3 + $0x8b8] sm:$0xff]
    %v442 = vld [vmem:[#allocation3 + $0x8c0] sm:$0xff]
    %v443 = vld [vmem:[#allocation3 + $0x8c8] sm:$0xff]
    %v444 = vld [vmem:[#allocation3 + $0x8d0] sm:$0xff]
    %v445 = vld [vmem:[#allocation3 + $0x8d8] sm:$0xff]
    %v446 = vld [vmem:[#allocation3 + $0x8e0] sm:$0xff]
    %v447 = vld [vmem:[#allocation3 + $0x8e8] sm:$0xff]
    %v448 = vld [vmem:[#allocation3 + $0x8f0] sm:$0xff]
    %v449 = vld [vmem:[#allocation3 + $0x8f8] sm:$0xff]
    %v450 = vld [vmem:[#allocation3 + $0x900] sm:$0xff]
    %v451 = vld [vmem:[#allocation3 + $0x908] sm:$0xff]
    %v452 = vld [vmem:[#allocation3 + $0x910] sm:$0xff]
    %v453 = vld [vmem:[#allocation3 + $0x918] sm:$0xff]
    %v454 = vld [vmem:[#allocation3 + $0x920] sm:$0xff]
    %v455 = vld [vmem:[#allocation3 + $0x928] sm:$0xff]
    %v456 = vld [vmem:[#allocation3 + $0x930] sm:$0xff]
    %v457 = vld [vmem:[#allocation3 + $0x938] sm:$0xff]
    %v458 = vld [vmem:[#allocation3 + $0x940] sm:$0xff]
    %v459 = vld [vmem:[#allocation3 + $0x948] sm:$0xff]
    %v460 = vld [vmem:[#allocation3 + $0x950] sm:$0xff]
    %v461 = vld [vmem:[#allocation3 + $0x958] sm:$0xff]
    %v462 = vld [vmem:[#allocation3 + $0x960] sm:$0xff]
    %v463 = vld [vmem:[#allocation3 + $0x968] sm:$0xff]
    %v464 = vld [vmem:[#allocation3 + $0x970] sm:$0xff]
    %v465 = vld [vmem:[#allocation3 + $0x978] sm:$0xff]
    %v466 = vld [vmem:[#allocation3 + $0x980] sm:$0xff]
    %v467 = vld [vmem:[#allocation3 + $0x988] sm:$0xff]
    %v468 = vld [vmem:[#allocation3 + $0x990] sm:$0xff]
    %v469 = vld [vmem:[#allocation3 + $0x998] sm:$0xff]
    %v470 = vld [vmem:[#allocation3 + $0x9a0] sm:$0xff]
    %v471 = vld [vmem:[#allocation3 + $0x9a8] sm:$0xff]
    %v472 = vld [vmem:[#allocation3 + $0x9b0] sm:$0xff]
    %v473 = vld [vmem:[#allocation3 + $0x9b8] sm:$0xff]
    %v474 = vld [vmem:[#allocation3 + $0x9c0] sm:$0xff]
    %v475 = vld [vmem:[#allocation3 + $0x9c8] sm:$0xff]
    %v476 = vld [vmem:[#allocation3 + $0x9d0] sm:$0xff]
    %v477 = vld [vmem:[#allocation3 + $0x9d8] sm:$0xff]
    %v478 = vld [vmem:[#allocation3 + $0x9e0] sm:$0xff]
    %v479 = vld [vmem:[#allocation3 + $0x9e8] sm:$0xff]
    %v480 = vld [vmem:[#allocation3 + $0x9f0] sm:$0xff]
    %v481 = vld [vmem:[#allocation3 + $0x9f8] sm:$0xff]
    %v482 = vld [vmem:[#allocation3 + $0xa00] sm:$0xff]
    %v483 = vld [vmem:[#allocation3 + $0xa08] sm:$0xff]
    %v484 = vld [vmem:[#allocation3 + $0xa10] sm:$0xff]
    %v485 = vld [vmem:[#allocation3 + $0xa18] sm:$0xff]
    %v486 = vld [vmem:[#allocation3 + $0xa20] sm:$0xff]
    %v487 = vld [vmem:[#allocation3 + $0xa28] sm:$0xff]
    %v488 = vld [vmem:[#allocation3 + $0xa30] sm:$0xff]
    %v489 = vld [vmem:[#allocation3 + $0xa38] sm:$0xff]
    %v490 = vld [vmem:[#allocation3 + $0xa40] sm:$0xff]
    %v491 = vld [vmem:[#allocation3 + $0xa48] sm:$0xff]
    %v492 = vld [vmem:[#allocation3 + $0xa50] sm:$0xff]
    %v493 = vld [vmem:[#allocation3 + $0xa58] sm:$0xff]
    %v494 = vld [vmem:[#allocation3 + $0xa60] sm:$0xff]
    %v495 = vld [vmem:[#allocation3 + $0xa68] sm:$0xff]
    %v496 = vld [vmem:[#allocation3 + $0xa70] sm:$0xff]
    %v497 = vld [vmem:[#allocation3 + $0xa78] sm:$0xff]
    %v498 = vld [vmem:[#allocation3 + $0xa80] sm:$0xff]
    %v499 = vld [vmem:[#allocation3 + $0xa88] sm:$0xff]
    %v500 = vld [vmem:[#allocation3 + $0xa90] sm:$0xff]
    %v501 = vld [vmem:[#allocation3 + $0xa98] sm:$0xff]
    %v502 = vld [vmem:[#allocation3 + $0xaa0] sm:$0xff]
    %v503 = vld [vmem:[#allocation3 + $0xaa8] sm:$0xff]
    %v504 = vld [vmem:[#allocation3 + $0xab0] sm:$0xff]
    %v505 = vld [vmem:[#allocation3 + $0xab8] sm:$0xff]
    %v506 = vld [vmem:[#allocation3 + $0xac0] sm:$0xff]
    %v507 = vld [vmem:[#allocation3 + $0xac8] sm:$0xff]
    %v508 = vld [vmem:[#allocation3 + $0xad0] sm:$0xff]
    %v509 = vld [vmem:[#allocation3 + $0xad8] sm:$0xff]
    %v510 = vld [vmem:[#allocation3 + $0xae0] sm:$0xff]
    %v511 = vld [vmem:[#allocation3 + $0xae8] sm:$0xff]
    %v512 = vld [vmem:[#allocation3 + $0xaf0] sm:$0xff]
    %v513 = vld [vmem:[#allocation3 + $0xaf8] sm:$0xff]
    %v514 = vld [vmem:[#allocation3 + $0xb00] sm:$0xff]
    %v515 = vld [vmem:[#allocation3 + $0xb08] sm:$0xff]
    %v516 = vld [vmem:[#allocation3 + $0xb10] sm:$0xff]
    %v517 = vld [vmem:[#allocation3 + $0xb18] sm:$0xff]
    %v518 = vld [vmem:[#allocation3 + $0xb20] sm:$0xff]
    %v519 = vld [vmem:[#allocation3 + $0xb28] sm:$0xff]
    %v520 = vld [vmem:[#allocation3 + $0xb30] sm:$0xff]
    %v521 = vld [vmem:[#allocation3 + $0xb38] sm:$0xff]
    %v522 = vld [vmem:[#allocation3 + $0xb40] sm:$0xff]
    %v523 = vld [vmem:[#allocation3 + $0xb48] sm:$0xff]
    %v524 = vld [vmem:[#allocation3 + $0xb50] sm:$0xff]
    %v525 = vld [vmem:[#allocation3 + $0xb58] sm:$0xff]
    %v526 = vld [vmem:[#allocation3 + $0xb60] sm:$0xff]
    %v527 = vld [vmem:[#allocation3 + $0xb68] sm:$0xff]
    %v528 = vld [vmem:[#allocation3 + $0xb70] sm:$0xff]
    %v529 = vld [vmem:[#allocation3 + $0xb78] sm:$0xff]
    %v530 = vld [vmem:[#allocation3 + $0xb80] sm:$0xff]
    %v531 = vld [vmem:[#allocation3 + $0xb88] sm:$0xff]
    %v532 = vld [vmem:[#allocation3 + $0xb90] sm:$0xff]
    %v533 = vld [vmem:[#allocation3 + $0xb98] sm:$0xff]
    %v534 = vld [vmem:[#allocation3 + $0xba0] sm:$0xff]
    %v535 = vld [vmem:[#allocation3 + $0xba8] sm:$0xff]
    %v536 = vld [vmem:[#allocation3 + $0xbb0] sm:$0xff]
    %v537 = vld [vmem:[#allocation3 + $0xbb8] sm:$0xff]
    %v538 = vld [vmem:[#allocation3 + $0xbc0] sm:$0xff]
    %v539 = vld [vmem:[#allocation3 + $0xbc8] sm:$0xff]
    %v540 = vld [vmem:[#allocation3 + $0xbd0] sm:$0xff]
    %v541 = vld [vmem:[#allocation3 + $0xbd8] sm:$0xff]
    %v542 = vld [vmem:[#allocation3 + $0xbe0] sm:$0xff]
    %v543 = vld [vmem:[#allocation3 + $0xbe8] sm:$0xff]
    %v544 = vld [vmem:[#allocation3 + $0xbf0] sm:$0xff]
    %v545 = vld [vmem:[#allocation3 + $0xbf8] sm:$0xff]
    %v546 = vld [vmem:[#allocation3 + $0xc00] sm:$0xff]
    %v547 = vld [vmem:[#allocation3 + $0xc08] sm:$0xff]
    %v548 = vld [vmem:[#allocation3 + $0xc10] sm:$0xff]
    %v549 = vld [vmem:[#allocation3 + $0xc18] sm:$0xff]
    %v550 = vld [vmem:[#allocation3 + $0xc20] sm:$0xff]
    %v551 = vld [vmem:[#allocation3 + $0xc28] sm:$0xff]
    %v552 = vld [vmem:[#allocation3 + $0xc30] sm:$0xff]
    %v553 = vld [vmem:[#allocation3 + $0xc38] sm:$0xff]
    %v554 = vld [vmem:[#allocation3 + $0xc40] sm:$0xff]
    %v555 = vld [vmem:[#allocation3 + $0xc48] sm:$0xff]
    %v556 = vld [vmem:[#allocation3 + $0xc50] sm:$0xff]
    %v557 = vld [vmem:[#allocation3 + $0xc58] sm:$0xff]
    %v558 = vld [vmem:[#allocation3 + $0xc60] sm:$0xff]
    %v559 = vld [vmem:[#allocation3 + $0xc68] sm:$0xff]
    %v560 = vld [vmem:[#allocation3 + $0xc70] sm:$0xff]
    %v561 = vld [vmem:[#allocation3 + $0xc78] sm:$0xff]
    %v562 = vld [vmem:[#allocation3 + $0xc80] sm:$0xff]
    %v563 = vld [vmem:[#allocation3 + $0xc88] sm:$0xff]
    %v564 = vld [vmem:[#allocation3 + $0xc90] sm:$0xff]
    %v565 = vld [vmem:[#allocation3 + $0xc98] sm:$0xff]
    %v566 = vld [vmem:[#allocation3 + $0xca0] sm:$0xff]
    %v567 = vld [vmem:[#allocation3 + $0xca8] sm:$0xff]
    %v568 = vld [vmem:[#allocation3 + $0xcb0] sm:$0xff]
    %v569 = vld [vmem:[#allocation3 + $0xcb8] sm:$0xff]
    %v570 = vld [vmem:[#allocation3 + $0xcc0] sm:$0xff]
    %v571 = vld [vmem:[#allocation3 + $0xcc8] sm:$0xff]
    %v572 = vld [vmem:[#allocation3 + $0xcd0] sm:$0xff]
    %v573 = vld [vmem:[#allocation3 + $0xcd8] sm:$0xff]
    %v574 = vld [vmem:[#allocation3 + $0xce0] sm:$0xff]
    %v575 = vld [vmem:[#allocation3 + $0xce8] sm:$0xff]
    %v576 = vld [vmem:[#allocation3 + $0xcf0] sm:$0xff]
    %v577 = vld [vmem:[#allocation3 + $0xcf8] sm:$0xff]
    %v578 = vld [vmem:[#allocation3 + $0xd00] sm:$0xff]
    %v579 = vld [vmem:[#allocation3 + $0xd08] sm:$0xff]
    %v580 = vld [vmem:[#allocation3 + $0xd10] sm:$0xff]
    %v581 = vld [vmem:[#allocation3 + $0xd18] sm:$0xff]
    %v582 = vld [vmem:[#allocation3 + $0xd20] sm:$0xff]
    %v583 = vld [vmem:[#allocation3 + $0xd28] sm:$0xff]
    %v584 = vld [vmem:[#allocation3 + $0xd30] sm:$0xff]
    %v585 = vld [vmem:[#allocation3 + $0xd38] sm:$0xff]
    %v586 = vld [vmem:[#allocation3 + $0xd40] sm:$0xff]
    %v587 = vld [vmem:[#allocation3 + $0xd48] sm:$0xff]
    %v588 = vld [vmem:[#allocation3 + $0xd50] sm:$0xff]
    %v589 = vld [vmem:[#allocation3 + $0xd58] sm:$0xff]
    %v590 = vld [vmem:[#allocation3 + $0xd60] sm:$0xff]
    %v591 = vld [vmem:[#allocation3 + $0xd68] sm:$0xff]
    %v592 = vld [vmem:[#allocation3 + $0xd70] sm:$0xff]
    %v593 = vld [vmem:[#allocation3 + $0xd78] sm:$0xff]
    %v594 = vld [vmem:[#allocation3 + $0xd80] sm:$0xff]
    %v595 = vld [vmem:[#allocation3 + $0xd88] sm:$0xff]
    %v596 = vld [vmem:[#allocation3 + $0xd90] sm:$0xff]
    %v597 = vld [vmem:[#allocation3 + $0xd98] sm:$0xff]
    %v598 = vld [vmem:[#allocation3 + $0xda0] sm:$0xff]
    %v599 = vld [vmem:[#allocation3 + $0xda8] sm:$0xff]
    %v600 = vld [vmem:[#allocation3 + $0xdb0] sm:$0xff]
    %v601 = vld [vmem:[#allocation3 + $0xdb8] sm:$0xff]
    %v602 = vld [vmem:[#allocation3 + $0xdc0] sm:$0xff]
    %v603 = vld [vmem:[#allocation3 + $0xdc8] sm:$0xff]
    %v604 = vld [vmem:[#allocation3 + $0xdd0] sm:$0xff]
    %v605 = vld [vmem:[#allocation3 + $0xdd8] sm:$0xff]
    %v606 = vld [vmem:[#allocation3 + $0xde0] sm:$0xff]
    %v607 = vld [vmem:[#allocation3 + $0xde8] sm:$0xff]
    %v608 = vld [vmem:[#allocation3 + $0xdf0] sm:$0xff]
    %v609 = vld [vmem:[#allocation3 + $0xdf8] sm:$0xff]
    %v610 = vld [vmem:[#allocation3 + $0xe00] sm:$0xff]
    %v611 = vld [vmem:[#allocation3 + $0xe08] sm:$0xff]
    %v612 = vld [vmem:[#allocation3 + $0xe10] sm:$0xff]
    %v613 = vld [vmem:[#allocation3 + $0xe18] sm:$0xff]
    %v614 = vld [vmem:[#allocation3 + $0xe20] sm:$0xff]
    %v615 = vld [vmem:[#allocation3 + $0xe28] sm:$0xff]
    %v616 = vld [vmem:[#allocation3 + $0xe30] sm:$0xff]
    %v617 = vld [vmem:[#allocation3 + $0xe38] sm:$0xff]
    %v618 = vld [vmem:[#allocation3 + $0xe40] sm:$0xff]
    %v619 = vld [vmem:[#allocation3 + $0xe48] sm:$0xff]
    %v620 = vld [vmem:[#allocation3 + $0xe50] sm:$0xff]
    %v621 = vld [vmem:[#allocation3 + $0xe58] sm:$0xff]
    %v622 = vld [vmem:[#allocation3 + $0xe60] sm:$0xff]
    %v623 = vld [vmem:[#allocation3 + $0xe68] sm:$0xff]
    %v624 = vld [vmem:[#allocation3 + $0xe70] sm:$0xff]
    %v625 = vld [vmem:[#allocation3 + $0xe78] sm:$0xff]
    %v626 = vld [vmem:[#allocation3 + $0xe80] sm:$0xff]
    %v627 = vld [vmem:[#allocation3 + $0xe88] sm:$0xff]
    %v628 = vld [vmem:[#allocation3 + $0xe90] sm:$0xff]
    %v629 = vld [vmem:[#allocation3 + $0xe98] sm:$0xff]
    %v630 = vld [vmem:[#allocation3 + $0xea0] sm:$0xff]
    %v631 = vld [vmem:[#allocation3 + $0xea8] sm:$0xff]
    %v632 = vld [vmem:[#allocation3 + $0xeb0] sm:$0xff]
    %v633 = vld [vmem:[#allocation3 + $0xeb8] sm:$0xff]
    %v634 = vld [vmem:[#allocation3 + $0xec0] sm:$0xff]
    %v635 = vld [vmem:[#allocation3 + $0xec8] sm:$0xff]
    %v636 = vld [vmem:[#allocation3 + $0xed0] sm:$0xff]
    %v637 = vld [vmem:[#allocation3 + $0xed8] sm:$0xff]
    %v638 = vld [vmem:[#allocation3 + $0xee0] sm:$0xff]
    %v639 = vld [vmem:[#allocation3 + $0xee8] sm:$0xff]
    %v640 = vld [vmem:[#allocation3 + $0xef0] sm:$0xff]
    %v641 = vld [vmem:[#allocation3 + $0xef8] sm:$0xff]
    %v642 = vld [vmem:[#allocation3 + $0xf00] sm:$0xff]
    %v643 = vld [vmem:[#allocation3 + $0xf08] sm:$0xff]
    %v644 = vld [vmem:[#allocation3 + $0xf10] sm:$0xff]
    %v645 = vld [vmem:[#allocation3 + $0xf18] sm:$0xff]
    %v646 = vld [vmem:[#allocation3 + $0xf20] sm:$0xff]
    %v647 = vld [vmem:[#allocation3 + $0xf28] sm:$0xff]
    %v648 = vld [vmem:[#allocation3 + $0xf30] sm:$0xff]
    %v649 = vld [vmem:[#allocation3 + $0xf38] sm:$0xff]
    %v650 = vld [vmem:[#allocation3 + $0xf40] sm:$0xff]
    %v651 = vld [vmem:[#allocation3 + $0xf48] sm:$0xff]
    %v652 = vld [vmem:[#allocation3 + $0xf50] sm:$0xff]
    %v653 = vld [vmem:[#allocation3 + $0xf58] sm:$0xff]
    %v654 = vld [vmem:[#allocation3 + $0xf60] sm:$0xff]
    %v655 = vld [vmem:[#allocation3 + $0xf68] sm:$0xff]
    %v656 = vld [vmem:[#allocation3 + $0xf70] sm:$0xff]
    %v657 = vld [vmem:[#allocation3 + $0xf78] sm:$0xff]
    %v658 = vld [vmem:[#allocation3 + $0xf80] sm:$0xff]
    %v659 = vld [vmem:[#allocation3 + $0xf88] sm:$0xff]
    %v660 = vld [vmem:[#allocation3 + $0xf90] sm:$0xff]
    %v661 = vld [vmem:[#allocation3 + $0xf98] sm:$0xff]
    %v662 = vld [vmem:[#allocation3 + $0xfa0] sm:$0xff]
    %v663 = vld [vmem:[#allocation3 + $0xfa8] sm:$0xff]
    %v664 = vld [vmem:[#allocation3 + $0xfb0] sm:$0xff]
    %v665 = vld [vmem:[#allocation3 + $0xfb8] sm:$0xff]
    %v666 = vld [vmem:[#allocation3 + $0xfc0] sm:$0xff]
    %v667 = vld [vmem:[#allocation3 + $0xfc8] sm:$0xff]
    %v668 = vld [vmem:[#allocation3 + $0xfd0] sm:$0xff]
    %v669 = vld [vmem:[#allocation3 + $0xfd8] sm:$0xff]
    %v670 = vld [vmem:[#allocation3 + $0xfe0] sm:$0xff]
    %v671 = vld [vmem:[#allocation3 + $0xfe8] sm:$0xff]
    %v672 = vld [vmem:[#allocation3 + $0xff0] sm:$0xff]
    %v673 = vld [vmem:[#allocation3 + $0xff8] sm:$0xff]
    %v674 = vld [vmem:[#allocation6] sm:$0xf]
    %v676 = vperm.slane %v674, 0
    %v677 = vperm.slane %v674, 1
    %v678 = vperm.slane %v674, 2
    %v679 = vperm.slane %v674, 3
    %v1196 = vunpack.c.l.b16 %v162
    %v1197 = vunpack.c.h.b16 %v162
    %v1198 = vunpack.c.l.b16 %v163
    %v1199 = vunpack.c.h.b16 %v163
    %v1200 = vunpack.c.l.b16 %v164
    %v1201 = vunpack.c.h.b16 %v164
    %v1202 = vunpack.c.l.b16 %v165
    %v1203 = vunpack.c.h.b16 %v165
    %v1204 = vunpack.c.l.b16 %v166
    %v1205 = vunpack.c.h.b16 %v166
    %v1206 = vunpack.c.l.b16 %v167
    %v1207 = vunpack.c.h.b16 %v167
    %v1208 = vunpack.c.l.b16 %v168
    %v1209 = vunpack.c.h.b16 %v168
    %v1210 = vunpack.c.l.b16 %v169
    %v1211 = vunpack.c.h.b16 %v169
    %v1212 = vunpack.c.l.b16 %v170
    %v1213 = vunpack.c.h.b16 %v170
    %v1214 = vunpack.c.l.b16 %v171
    %v1215 = vunpack.c.h.b16 %v171
    %v1216 = vunpack.c.l.b16 %v172
    %v1217 = vunpack.c.h.b16 %v172
    %v1218 = vunpack.c.l.b16 %v173
    %v1219 = vunpack.c.h.b16 %v173
    %v1220 = vunpack.c.l.b16 %v174
    %v1221 = vunpack.c.h.b16 %v174
    %v1222 = vunpack.c.l.b16 %v175
    %v1223 = vunpack.c.h.b16 %v175
    %v1224 = vunpack.c.l.b16 %v176
    %v1225 = vunpack.c.h.b16 %v176
    %v1226 = vunpack.c.l.b16 %v177
    %v1227 = vunpack.c.h.b16 %v177
    %v1228 = vunpack.c.l.b16 %v178
    %v1229 = vunpack.c.h.b16 %v178
    %v1230 = vunpack.c.l.b16 %v179
    %v1231 = vunpack.c.h.b16 %v179
    %v1232 = vunpack.c.l.b16 %v180
    %v1233 = vunpack.c.h.b16 %v180
    %v1234 = vunpack.c.l.b16 %v181
    %v1235 = vunpack.c.h.b16 %v181
    %v1236 = vunpack.c.l.b16 %v182
    %v1237 = vunpack.c.h.b16 %v182
    %v1238 = vunpack.c.l.b16 %v183
    %v1239 = vunpack.c.h.b16 %v183
    %v1240 = vunpack.c.l.b16 %v184
    %v1241 = vunpack.c.h.b16 %v184
    %v1242 = vunpack.c.l.b16 %v185
    %v1243 = vunpack.c.h.b16 %v185
    %v1244 = vunpack.c.l.b16 %v186
    %v1245 = vunpack.c.h.b16 %v186
    %v1246 = vunpack.c.l.b16 %v187
    %v1247 = vunpack.c.h.b16 %v187
    %v1248 = vunpack.c.l.b16 %v188
    %v1249 = vunpack.c.h.b16 %v188
    %v1250 = vunpack.c.l.b16 %v189
    %v1251 = vunpack.c.h.b16 %v189
    %v1252 = vunpack.c.l.b16 %v190
    %v1253 = vunpack.c.h.b16 %v190
    %v1254 = vunpack.c.l.b16 %v191
    %v1255 = vunpack.c.h.b16 %v191
    %v1256 = vunpack.c.l.b16 %v192
    %v1257 = vunpack.c.h.b16 %v192
    %v1258 = vunpack.c.l.b16 %v193
    %v1259 = vunpack.c.h.b16 %v193
    %v1260 = vunpack.c.l.b16 %v194
    %v1261 = vunpack.c.h.b16 %v194
    %v1262 = vunpack.c.l.b16 %v195
    %v1263 = vunpack.c.h.b16 %v195
    %v1264 = vunpack.c.l.b16 %v196
    %v1265 = vunpack.c.h.b16 %v196
    %v1266 = vunpack.c.l.b16 %v197
    %v1267 = vunpack.c.h.b16 %v197
    %v1268 = vunpack.c.l.b16 %v198
    %v1269 = vunpack.c.h.b16 %v198
    %v1270 = vunpack.c.l.b16 %v199
    %v1271 = vunpack.c.h.b16 %v199
    %v1272 = vunpack.c.l.b16 %v200
    %v1273 = vunpack.c.h.b16 %v200
    %v1274 = vunpack.c.l.b16 %v201
    %v1275 = vunpack.c.h.b16 %v201
    %v1276 = vunpack.c.l.b16 %v202
    %v1277 = vunpack.c.h.b16 %v202
    %v1278 = vunpack.c.l.b16 %v203
    %v1279 = vunpack.c.h.b16 %v203
    %v1280 = vunpack.c.l.b16 %v204
    %v1281 = vunpack.c.h.b16 %v204
    %v1282 = vunpack.c.l.b16 %v205
    %v1283 = vunpack.c.h.b16 %v205
    %v1284 = vunpack.c.l.b16 %v206
    %v1285 = vunpack.c.h.b16 %v206
    %v1286 = vunpack.c.l.b16 %v207
    %v1287 = vunpack.c.h.b16 %v207
    %v1288 = vunpack.c.l.b16 %v208
    %v1289 = vunpack.c.h.b16 %v208
    %v1290 = vunpack.c.l.b16 %v209
    %v1291 = vunpack.c.h.b16 %v209
    %v1292 = vunpack.c.l.b16 %v210
    %v1293 = vunpack.c.h.b16 %v210
    %v1294 = vunpack.c.l.b16 %v211
    %v1295 = vunpack.c.h.b16 %v211
    %v1296 = vunpack.c.l.b16 %v212
    %v1297 = vunpack.c.h.b16 %v212
    %v1298 = vunpack.c.l.b16 %v213
    %v1299 = vunpack.c.h.b16 %v213
    %v1300 = vunpack.c.l.b16 %v214
    %v1301 = vunpack.c.h.b16 %v214
    %v1302 = vunpack.c.l.b16 %v215
    %v1303 = vunpack.c.h.b16 %v215
    %v1304 = vunpack.c.l.b16 %v216
    %v1305 = vunpack.c.h.b16 %v216
    %v1306 = vunpack.c.l.b16 %v217
    %v1307 = vunpack.c.h.b16 %v217
    %v1308 = vunpack.c.l.b16 %v218
    %v1309 = vunpack.c.h.b16 %v218
    %v1310 = vunpack.c.l.b16 %v219
    %v1311 = vunpack.c.h.b16 %v219
    %v1312 = vunpack.c.l.b16 %v220
    %v1313 = vunpack.c.h.b16 %v220
    %v1314 = vunpack.c.l.b16 %v221
    %v1315 = vunpack.c.h.b16 %v221
    %v1316 = vunpack.c.l.b16 %v222
    %v1317 = vunpack.c.h.b16 %v222
    %v1318 = vunpack.c.l.b16 %v223
    %v1319 = vunpack.c.h.b16 %v223
    %v1320 = vunpack.c.l.b16 %v224
    %v1321 = vunpack.c.h.b16 %v224
    %v1322 = vunpack.c.l.b16 %v225
    %v1323 = vunpack.c.h.b16 %v225
    %v1324 = vunpack.c.l.b16 %v226
    %v1325 = vunpack.c.h.b16 %v226
    %v1326 = vunpack.c.l.b16 %v227
    %v1327 = vunpack.c.h.b16 %v227
    %v1328 = vunpack.c.l.b16 %v228
    %v1329 = vunpack.c.h.b16 %v228
    %v1330 = vunpack.c.l.b16 %v229
    %v1331 = vunpack.c.h.b16 %v229
    %v1332 = vunpack.c.l.b16 %v230
    %v1333 = vunpack.c.h.b16 %v230
    %v1334 = vunpack.c.l.b16 %v231
    %v1335 = vunpack.c.h.b16 %v231
    %v1336 = vunpack.c.l.b16 %v232
    %v1337 = vunpack.c.h.b16 %v232
    %v1338 = vunpack.c.l.b16 %v233
    %v1339 = vunpack.c.h.b16 %v233
    %v1340 = vunpack.c.l.b16 %v234
    %v1341 = vunpack.c.h.b16 %v234
    %v1342 = vunpack.c.l.b16 %v235
    %v1343 = vunpack.c.h.b16 %v235
    %v1344 = vunpack.c.l.b16 %v236
    %v1345 = vunpack.c.h.b16 %v236
    %v1346 = vunpack.c.l.b16 %v237
    %v1347 = vunpack.c.h.b16 %v237
    %v1348 = vunpack.c.l.b16 %v238
    %v1349 = vunpack.c.h.b16 %v238
    %v1350 = vunpack.c.l.b16 %v239
    %v1351 = vunpack.c.h.b16 %v239
    %v1352 = vunpack.c.l.b16 %v240
    %v1353 = vunpack.c.h.b16 %v240
    %v1354 = vunpack.c.l.b16 %v241
    %v1355 = vunpack.c.h.b16 %v241
    %v1356 = vunpack.c.l.b16 %v242
    %v1357 = vunpack.c.h.b16 %v242
    %v1358 = vunpack.c.l.b16 %v243
    %v1359 = vunpack.c.h.b16 %v243
    %v1360 = vunpack.c.l.b16 %v244
    %v1361 = vunpack.c.h.b16 %v244
    %v1362 = vunpack.c.l.b16 %v245
    %v1363 = vunpack.c.h.b16 %v245
    %v1364 = vunpack.c.l.b16 %v246
    %v1365 = vunpack.c.h.b16 %v246
    %v1366 = vunpack.c.l.b16 %v247
    %v1367 = vunpack.c.h.b16 %v247
    %v1368 = vunpack.c.l.b16 %v248
    %v1369 = vunpack.c.h.b16 %v248
    %v1370 = vunpack.c.l.b16 %v249
    %v1371 = vunpack.c.h.b16 %v249
    %v1372 = vunpack.c.l.b16 %v250
    %v1373 = vunpack.c.h.b16 %v250
    %v1374 = vunpack.c.l.b16 %v251
    %v1375 = vunpack.c.h.b16 %v251
    %v1376 = vunpack.c.l.b16 %v252
    %v1377 = vunpack.c.h.b16 %v252
    %v1378 = vunpack.c.l.b16 %v253
    %v1379 = vunpack.c.h.b16 %v253
    %v1380 = vunpack.c.l.b16 %v254
    %v1381 = vunpack.c.h.b16 %v254
    %v1382 = vunpack.c.l.b16 %v255
    %v1383 = vunpack.c.h.b16 %v255
    %v1384 = vunpack.c.l.b16 %v256
    %v1385 = vunpack.c.h.b16 %v256
    %v1386 = vunpack.c.l.b16 %v257
    %v1387 = vunpack.c.h.b16 %v257
    %v1388 = vunpack.c.l.b16 %v258
    %v1389 = vunpack.c.h.b16 %v258
    %v1390 = vunpack.c.l.b16 %v259
    %v1391 = vunpack.c.h.b16 %v259
    %v1392 = vunpack.c.l.b16 %v260
    %v1393 = vunpack.c.h.b16 %v260
    %v1394 = vunpack.c.l.b16 %v261
    %v1395 = vunpack.c.h.b16 %v261
    %v1396 = vunpack.c.l.b16 %v262
    %v1397 = vunpack.c.h.b16 %v262
    %v1398 = vunpack.c.l.b16 %v263
    %v1399 = vunpack.c.h.b16 %v263
    %v1400 = vunpack.c.l.b16 %v264
    %v1401 = vunpack.c.h.b16 %v264
    %v1402 = vunpack.c.l.b16 %v265
    %v1403 = vunpack.c.h.b16 %v265
    %v1404 = vunpack.c.l.b16 %v266
    %v1405 = vunpack.c.h.b16 %v266
    %v1406 = vunpack.c.l.b16 %v267
    %v1407 = vunpack.c.h.b16 %v267
    %v1408 = vunpack.c.l.b16 %v268
    %v1409 = vunpack.c.h.b16 %v268
    %v1410 = vunpack.c.l.b16 %v269
    %v1411 = vunpack.c.h.b16 %v269
    %v1412 = vunpack.c.l.b16 %v270
    %v1413 = vunpack.c.h.b16 %v270
    %v1414 = vunpack.c.l.b16 %v271
    %v1415 = vunpack.c.h.b16 %v271
    %v1416 = vunpack.c.l.b16 %v272
    %v1417 = vunpack.c.h.b16 %v272
    %v1418 = vunpack.c.l.b16 %v273
    %v1419 = vunpack.c.h.b16 %v273
    %v1420 = vunpack.c.l.b16 %v274
    %v1421 = vunpack.c.h.b16 %v274
    %v1422 = vunpack.c.l.b16 %v275
    %v1423 = vunpack.c.h.b16 %v275
    %v1424 = vunpack.c.l.b16 %v276
    %v1425 = vunpack.c.h.b16 %v276
    %v1426 = vunpack.c.l.b16 %v277
    %v1427 = vunpack.c.h.b16 %v277
    %v1428 = vunpack.c.l.b16 %v278
    %v1429 = vunpack.c.h.b16 %v278
    %v1430 = vunpack.c.l.b16 %v279
    %v1431 = vunpack.c.h.b16 %v279
    %v1432 = vunpack.c.l.b16 %v280
    %v1433 = vunpack.c.h.b16 %v280
    %v1434 = vunpack.c.l.b16 %v281
    %v1435 = vunpack.c.h.b16 %v281
    %v1436 = vunpack.c.l.b16 %v282
    %v1437 = vunpack.c.h.b16 %v282
    %v1438 = vunpack.c.l.b16 %v283
    %v1439 = vunpack.c.h.b16 %v283
    %v1440 = vunpack.c.l.b16 %v284
    %v1441 = vunpack.c.h.b16 %v284
    %v1442 = vunpack.c.l.b16 %v285
    %v1443 = vunpack.c.h.b16 %v285
    %v1444 = vunpack.c.l.b16 %v286
    %v1445 = vunpack.c.h.b16 %v286
    %v1446 = vunpack.c.l.b16 %v287
    %v1447 = vunpack.c.h.b16 %v287
    %v1448 = vunpack.c.l.b16 %v288
    %v1449 = vunpack.c.h.b16 %v288
    %v1450 = vunpack.c.l.b16 %v289
    %v1451 = vunpack.c.h.b16 %v289
    %v1452 = vunpack.c.l.b16 %v290
    %v1453 = vunpack.c.h.b16 %v290
    %v1454 = vunpack.c.l.b16 %v291
    %v1455 = vunpack.c.h.b16 %v291
    %v1456 = vunpack.c.l.b16 %v292
    %v1457 = vunpack.c.h.b16 %v292
    %v1458 = vunpack.c.l.b16 %v293
    %v1459 = vunpack.c.h.b16 %v293
    %v1460 = vunpack.c.l.b16 %v294
    %v1461 = vunpack.c.h.b16 %v294
    %v1462 = vunpack.c.l.b16 %v295
    %v1463 = vunpack.c.h.b16 %v295
    %v1464 = vunpack.c.l.b16 %v296
    %v1465 = vunpack.c.h.b16 %v296
    %v1466 = vunpack.c.l.b16 %v297
    %v1467 = vunpack.c.h.b16 %v297
    %v1468 = vunpack.c.l.b16 %v298
    %v1469 = vunpack.c.h.b16 %v298
    %v1470 = vunpack.c.l.b16 %v299
    %v1471 = vunpack.c.h.b16 %v299
    %v1472 = vunpack.c.l.b16 %v300
    %v1473 = vunpack.c.h.b16 %v300
    %v1474 = vunpack.c.l.b16 %v301
    %v1475 = vunpack.c.h.b16 %v301
    %v1476 = vunpack.c.l.b16 %v302
    %v1477 = vunpack.c.h.b16 %v302
    %v1478 = vunpack.c.l.b16 %v303
    %v1479 = vunpack.c.h.b16 %v303
    %v1480 = vunpack.c.l.b16 %v304
    %v1481 = vunpack.c.h.b16 %v304
    %v1482 = vunpack.c.l.b16 %v305
    %v1483 = vunpack.c.h.b16 %v305
    %v1484 = vunpack.c.l.b16 %v306
    %v1485 = vunpack.c.h.b16 %v306
    %v1486 = vunpack.c.l.b16 %v307
    %v1487 = vunpack.c.h.b16 %v307
    %v1488 = vunpack.c.l.b16 %v308
    %v1489 = vunpack.c.h.b16 %v308
    %v1490 = vunpack.c.l.b16 %v309
    %v1491 = vunpack.c.h.b16 %v309
    %v1492 = vunpack.c.l.b16 %v310
    %v1493 = vunpack.c.h.b16 %v310
    %v1494 = vunpack.c.l.b16 %v311
    %v1495 = vunpack.c.h.b16 %v311
    %v1496 = vunpack.c.l.b16 %v312
    %v1497 = vunpack.c.h.b16 %v312
    %v1498 = vunpack.c.l.b16 %v313
    %v1499 = vunpack.c.h.b16 %v313
    %v1500 = vunpack.c.l.b16 %v314
    %v1501 = vunpack.c.h.b16 %v314
    %v1502 = vunpack.c.l.b16 %v315
    %v1503 = vunpack.c.h.b16 %v315
    %v1504 = vunpack.c.l.b16 %v316
    %v1505 = vunpack.c.h.b16 %v316
    %v1506 = vunpack.c.l.b16 %v317
    %v1507 = vunpack.c.h.b16 %v317
    %v1508 = vunpack.c.l.b16 %v318
    %v1509 = vunpack.c.h.b16 %v318
    %v1510 = vunpack.c.l.b16 %v319
    %v1511 = vunpack.c.h.b16 %v319
    %v1512 = vunpack.c.l.b16 %v320
    %v1513 = vunpack.c.h.b16 %v320
    %v1514 = vunpack.c.l.b16 %v321
    %v1515 = vunpack.c.h.b16 %v321
    %v1516 = vunpack.c.l.b16 %v322
    %v1517 = vunpack.c.h.b16 %v322
    %v1518 = vunpack.c.l.b16 %v323
    %v1519 = vunpack.c.h.b16 %v323
    %v1520 = vunpack.c.l.b16 %v324
    %v1521 = vunpack.c.h.b16 %v324
    %v1522 = vunpack.c.l.b16 %v325
    %v1523 = vunpack.c.h.b16 %v325
    %v1524 = vunpack.c.l.b16 %v326
    %v1525 = vunpack.c.h.b16 %v326
    %v1526 = vunpack.c.l.b16 %v327
    %v1527 = vunpack.c.h.b16 %v327
    %v1528 = vunpack.c.l.b16 %v328
    %v1529 = vunpack.c.h.b16 %v328
    %v1530 = vunpack.c.l.b16 %v329
    %v1531 = vunpack.c.h.b16 %v329
    %v1532 = vunpack.c.l.b16 %v330
    %v1533 = vunpack.c.h.b16 %v330
    %v1534 = vunpack.c.l.b16 %v331
    %v1535 = vunpack.c.h.b16 %v331
    %v1536 = vunpack.c.l.b16 %v332
    %v1537 = vunpack.c.h.b16 %v332
    %v1538 = vunpack.c.l.b16 %v333
    %v1539 = vunpack.c.h.b16 %v333
    %v1540 = vunpack.c.l.b16 %v334
    %v1541 = vunpack.c.h.b16 %v334
    %v1542 = vunpack.c.l.b16 %v335
    %v1543 = vunpack.c.h.b16 %v335
    %v1544 = vunpack.c.l.b16 %v336
    %v1545 = vunpack.c.h.b16 %v336
    %v1546 = vunpack.c.l.b16 %v337
    %v1547 = vunpack.c.h.b16 %v337
    %v1548 = vunpack.c.l.b16 %v338
    %v1549 = vunpack.c.h.b16 %v338
    %v1550 = vunpack.c.l.b16 %v339
    %v1551 = vunpack.c.h.b16 %v339
    %v1552 = vunpack.c.l.b16 %v340
    %v1553 = vunpack.c.h.b16 %v340
    %v1554 = vunpack.c.l.b16 %v341
    %v1555 = vunpack.c.h.b16 %v341
    %v1556 = vunpack.c.l.b16 %v342
    %v1557 = vunpack.c.h.b16 %v342
    %v1558 = vunpack.c.l.b16 %v343
    %v1559 = vunpack.c.h.b16 %v343
    %v1560 = vunpack.c.l.b16 %v344
    %v1561 = vunpack.c.h.b16 %v344
    %v1562 = vunpack.c.l.b16 %v345
    %v1563 = vunpack.c.h.b16 %v345
    %v1564 = vunpack.c.l.b16 %v346
    %v1565 = vunpack.c.h.b16 %v346
    %v1566 = vunpack.c.l.b16 %v347
    %v1567 = vunpack.c.h.b16 %v347
    %v1568 = vunpack.c.l.b16 %v348
    %v1569 = vunpack.c.h.b16 %v348
    %v1570 = vunpack.c.l.b16 %v349
    %v1571 = vunpack.c.h.b16 %v349
    %v1572 = vunpack.c.l.b16 %v350
    %v1573 = vunpack.c.h.b16 %v350
    %v1574 = vunpack.c.l.b16 %v351
    %v1575 = vunpack.c.h.b16 %v351
    %v1576 = vunpack.c.l.b16 %v352
    %v1577 = vunpack.c.h.b16 %v352
    %v1578 = vunpack.c.l.b16 %v353
    %v1579 = vunpack.c.h.b16 %v353
    %v1580 = vunpack.c.l.b16 %v354
    %v1581 = vunpack.c.h.b16 %v354
    %v1582 = vunpack.c.l.b16 %v355
    %v1583 = vunpack.c.h.b16 %v355
    %v1584 = vunpack.c.l.b16 %v356
    %v1585 = vunpack.c.h.b16 %v356
    %v1586 = vunpack.c.l.b16 %v357
    %v1587 = vunpack.c.h.b16 %v357
    %v1588 = vunpack.c.l.b16 %v358
    %v1589 = vunpack.c.h.b16 %v358
    %v1590 = vunpack.c.l.b16 %v359
    %v1591 = vunpack.c.h.b16 %v359
    %v1592 = vunpack.c.l.b16 %v360
    %v1593 = vunpack.c.h.b16 %v360
    %v1594 = vunpack.c.l.b16 %v361
    %v1595 = vunpack.c.h.b16 %v361
    %v1596 = vunpack.c.l.b16 %v362
    %v1597 = vunpack.c.h.b16 %v362
    %v1598 = vunpack.c.l.b16 %v363
    %v1599 = vunpack.c.h.b16 %v363
    %v1600 = vunpack.c.l.b16 %v364
    %v1601 = vunpack.c.h.b16 %v364
    %v1602 = vunpack.c.l.b16 %v365
    %v1603 = vunpack.c.h.b16 %v365
    %v1604 = vunpack.c.l.b16 %v366
    %v1605 = vunpack.c.h.b16 %v366
    %v1606 = vunpack.c.l.b16 %v367
    %v1607 = vunpack.c.h.b16 %v367
    %v1608 = vunpack.c.l.b16 %v368
    %v1609 = vunpack.c.h.b16 %v368
    %v1610 = vunpack.c.l.b16 %v369
    %v1611 = vunpack.c.h.b16 %v369
    %v1612 = vunpack.c.l.b16 %v370
    %v1613 = vunpack.c.h.b16 %v370
    %v1614 = vunpack.c.l.b16 %v371
    %v1615 = vunpack.c.h.b16 %v371
    %v1616 = vunpack.c.l.b16 %v372
    %v1617 = vunpack.c.h.b16 %v372
    %v1618 = vunpack.c.l.b16 %v373
    %v1619 = vunpack.c.h.b16 %v373
    %v1620 = vunpack.c.l.b16 %v374
    %v1621 = vunpack.c.h.b16 %v374
    %v1622 = vunpack.c.l.b16 %v375
    %v1623 = vunpack.c.h.b16 %v375
    %v1624 = vunpack.c.l.b16 %v376
    %v1625 = vunpack.c.h.b16 %v376
    %v1626 = vunpack.c.l.b16 %v377
    %v1627 = vunpack.c.h.b16 %v377
    %v1628 = vunpack.c.l.b16 %v378
    %v1629 = vunpack.c.h.b16 %v378
    %v1630 = vunpack.c.l.b16 %v379
    %v1631 = vunpack.c.h.b16 %v379
    %v1632 = vunpack.c.l.b16 %v380
    %v1633 = vunpack.c.h.b16 %v380
    %v1634 = vunpack.c.l.b16 %v381
    %v1635 = vunpack.c.h.b16 %v381
    %v1636 = vunpack.c.l.b16 %v382
    %v1637 = vunpack.c.h.b16 %v382
    %v1638 = vunpack.c.l.b16 %v383
    %v1639 = vunpack.c.h.b16 %v383
    %v1640 = vunpack.c.l.b16 %v384
    %v1641 = vunpack.c.h.b16 %v384
    %v1642 = vunpack.c.l.b16 %v385
    %v1643 = vunpack.c.h.b16 %v385
    %v1644 = vunpack.c.l.b16 %v386
    %v1645 = vunpack.c.h.b16 %v386
    %v1646 = vunpack.c.l.b16 %v387
    %v1647 = vunpack.c.h.b16 %v387
    %v1648 = vunpack.c.l.b16 %v388
    %v1649 = vunpack.c.h.b16 %v388
    %v1650 = vunpack.c.l.b16 %v389
    %v1651 = vunpack.c.h.b16 %v389
    %v1652 = vunpack.c.l.b16 %v390
    %v1653 = vunpack.c.h.b16 %v390
    %v1654 = vunpack.c.l.b16 %v391
    %v1655 = vunpack.c.h.b16 %v391
    %v1656 = vunpack.c.l.b16 %v392
    %v1657 = vunpack.c.h.b16 %v392
    %v1658 = vunpack.c.l.b16 %v393
    %v1659 = vunpack.c.h.b16 %v393
    %v1660 = vunpack.c.l.b16 %v394
    %v1661 = vunpack.c.h.b16 %v394
    %v1662 = vunpack.c.l.b16 %v395
    %v1663 = vunpack.c.h.b16 %v395
    %v1664 = vunpack.c.l.b16 %v396
    %v1665 = vunpack.c.h.b16 %v396
    %v1666 = vunpack.c.l.b16 %v397
    %v1667 = vunpack.c.h.b16 %v397
    %v1668 = vunpack.c.l.b16 %v398
    %v1669 = vunpack.c.h.b16 %v398
    %v1670 = vunpack.c.l.b16 %v399
    %v1671 = vunpack.c.h.b16 %v399
    %v1672 = vunpack.c.l.b16 %v400
    %v1673 = vunpack.c.h.b16 %v400
    %v1674 = vunpack.c.l.b16 %v401
    %v1675 = vunpack.c.h.b16 %v401
    %v1676 = vunpack.c.l.b16 %v402
    %v1677 = vunpack.c.h.b16 %v402
    %v1678 = vunpack.c.l.b16 %v403
    %v1679 = vunpack.c.h.b16 %v403
    %v1680 = vunpack.c.l.b16 %v404
    %v1681 = vunpack.c.h.b16 %v404
    %v1682 = vunpack.c.l.b16 %v405
    %v1683 = vunpack.c.h.b16 %v405
    %v1684 = vunpack.c.l.b16 %v406
    %v1685 = vunpack.c.h.b16 %v406
    %v1686 = vunpack.c.l.b16 %v407
    %v1687 = vunpack.c.h.b16 %v407
    %v1688 = vunpack.c.l.b16 %v408
    %v1689 = vunpack.c.h.b16 %v408
    %v1690 = vunpack.c.l.b16 %v409
    %v1691 = vunpack.c.h.b16 %v409
    %v1692 = vunpack.c.l.b16 %v410
    %v1693 = vunpack.c.h.b16 %v410
    %v1694 = vunpack.c.l.b16 %v411
    %v1695 = vunpack.c.h.b16 %v411
    %v1696 = vunpack.c.l.b16 %v412
    %v1697 = vunpack.c.h.b16 %v412
    %v1698 = vunpack.c.l.b16 %v413
    %v1699 = vunpack.c.h.b16 %v413
    %v1700 = vunpack.c.l.b16 %v414
    %v1701 = vunpack.c.h.b16 %v414
    %v1702 = vunpack.c.l.b16 %v415
    %v1703 = vunpack.c.h.b16 %v415
    %v1704 = vunpack.c.l.b16 %v416
    %v1705 = vunpack.c.h.b16 %v416
    %v1706 = vunpack.c.l.b16 %v417
    %v1707 = vunpack.c.h.b16 %v417
    %v1708 = vunpack.c.l.b16 %v418
    %v1709 = vunpack.c.h.b16 %v418
    %v1710 = vunpack.c.l.b16 %v419
    %v1711 = vunpack.c.h.b16 %v419
    %v1712 = vunpack.c.l.b16 %v420
    %v1713 = vunpack.c.h.b16 %v420
    %v1714 = vunpack.c.l.b16 %v421
    %v1715 = vunpack.c.h.b16 %v421
    %v1716 = vunpack.c.l.b16 %v422
    %v1717 = vunpack.c.h.b16 %v422
    %v1718 = vunpack.c.l.b16 %v423
    %v1719 = vunpack.c.h.b16 %v423
    %v1720 = vunpack.c.l.b16 %v424
    %v1721 = vunpack.c.h.b16 %v424
    %v1722 = vunpack.c.l.b16 %v425
    %v1723 = vunpack.c.h.b16 %v425
    %v1724 = vunpack.c.l.b16 %v426
    %v1725 = vunpack.c.h.b16 %v426
    %v1726 = vunpack.c.l.b16 %v427
    %v1727 = vunpack.c.h.b16 %v427
    %v1728 = vunpack.c.l.b16 %v428
    %v1729 = vunpack.c.h.b16 %v428
    %v1730 = vunpack.c.l.b16 %v429
    %v1731 = vunpack.c.h.b16 %v429
    %v1732 = vunpack.c.l.b16 %v430
    %v1733 = vunpack.c.h.b16 %v430
    %v1734 = vunpack.c.l.b16 %v431
    %v1735 = vunpack.c.h.b16 %v431
    %v1736 = vunpack.c.l.b16 %v432
    %v1737 = vunpack.c.h.b16 %v432
    %v1738 = vunpack.c.l.b16 %v433
    %v1739 = vunpack.c.h.b16 %v433
    %v1740 = vunpack.c.l.b16 %v434
    %v1741 = vunpack.c.h.b16 %v434
    %v1742 = vunpack.c.l.b16 %v435
    %v1743 = vunpack.c.h.b16 %v435
    %v1744 = vunpack.c.l.b16 %v436
    %v1745 = vunpack.c.h.b16 %v436
    %v1746 = vunpack.c.l.b16 %v437
    %v1747 = vunpack.c.h.b16 %v437
    %v1748 = vunpack.c.l.b16 %v438
    %v1749 = vunpack.c.h.b16 %v438
    %v1750 = vunpack.c.l.b16 %v439
    %v1751 = vunpack.c.h.b16 %v439
    %v1752 = vunpack.c.l.b16 %v440
    %v1753 = vunpack.c.h.b16 %v440
    %v1754 = vunpack.c.l.b16 %v441
    %v1755 = vunpack.c.h.b16 %v441
    %v1756 = vunpack.c.l.b16 %v442
    %v1757 = vunpack.c.h.b16 %v442
    %v1758 = vunpack.c.l.b16 %v443
    %v1759 = vunpack.c.h.b16 %v443
    %v1760 = vunpack.c.l.b16 %v444
    %v1761 = vunpack.c.h.b16 %v444
    %v1762 = vunpack.c.l.b16 %v445
    %v1763 = vunpack.c.h.b16 %v445
    %v1764 = vunpack.c.l.b16 %v446
    %v1765 = vunpack.c.h.b16 %v446
    %v1766 = vunpack.c.l.b16 %v447
    %v1767 = vunpack.c.h.b16 %v447
    %v1768 = vunpack.c.l.b16 %v448
    %v1769 = vunpack.c.h.b16 %v448
    %v1770 = vunpack.c.l.b16 %v449
    %v1771 = vunpack.c.h.b16 %v449
    %v1772 = vunpack.c.l.b16 %v450
    %v1773 = vunpack.c.h.b16 %v450
    %v1774 = vunpack.c.l.b16 %v451
    %v1775 = vunpack.c.h.b16 %v451
    %v1776 = vunpack.c.l.b16 %v452
    %v1777 = vunpack.c.h.b16 %v452
    %v1778 = vunpack.c.l.b16 %v453
    %v1779 = vunpack.c.h.b16 %v453
    %v1780 = vunpack.c.l.b16 %v454
    %v1781 = vunpack.c.h.b16 %v454
    %v1782 = vunpack.c.l.b16 %v455
    %v1783 = vunpack.c.h.b16 %v455
    %v1784 = vunpack.c.l.b16 %v456
    %v1785 = vunpack.c.h.b16 %v456
    %v1786 = vunpack.c.l.b16 %v457
    %v1787 = vunpack.c.h.b16 %v457
    %v1788 = vunpack.c.l.b16 %v458
    %v1789 = vunpack.c.h.b16 %v458
    %v1790 = vunpack.c.l.b16 %v459
    %v1791 = vunpack.c.h.b16 %v459
    %v1792 = vunpack.c.l.b16 %v460
    %v1793 = vunpack.c.h.b16 %v460
    %v1794 = vunpack.c.l.b16 %v461
    %v1795 = vunpack.c.h.b16 %v461
    %v1796 = vunpack.c.l.b16 %v462
    %v1797 = vunpack.c.h.b16 %v462
    %v1798 = vunpack.c.l.b16 %v463
    %v1799 = vunpack.c.h.b16 %v463
    %v1800 = vunpack.c.l.b16 %v464
    %v1801 = vunpack.c.h.b16 %v464
    %v1802 = vunpack.c.l.b16 %v465
    %v1803 = vunpack.c.h.b16 %v465
    %v1804 = vunpack.c.l.b16 %v466
    %v1805 = vunpack.c.h.b16 %v466
    %v1806 = vunpack.c.l.b16 %v467
    %v1807 = vunpack.c.h.b16 %v467
    %v1808 = vunpack.c.l.b16 %v468
    %v1809 = vunpack.c.h.b16 %v468
    %v1810 = vunpack.c.l.b16 %v469
    %v1811 = vunpack.c.h.b16 %v469
    %v1812 = vunpack.c.l.b16 %v470
    %v1813 = vunpack.c.h.b16 %v470
    %v1814 = vunpack.c.l.b16 %v471
    %v1815 = vunpack.c.h.b16 %v471
    %v1816 = vunpack.c.l.b16 %v472
    %v1817 = vunpack.c.h.b16 %v472
    %v1818 = vunpack.c.l.b16 %v473
    %v1819 = vunpack.c.h.b16 %v473
    %v1820 = vunpack.c.l.b16 %v474
    %v1821 = vunpack.c.h.b16 %v474
    %v1822 = vunpack.c.l.b16 %v475
    %v1823 = vunpack.c.h.b16 %v475
    %v1824 = vunpack.c.l.b16 %v476
    %v1825 = vunpack.c.h.b16 %v476
    %v1826 = vunpack.c.l.b16 %v477
    %v1827 = vunpack.c.h.b16 %v477
    %v1828 = vunpack.c.l.b16 %v478
    %v1829 = vunpack.c.h.b16 %v478
    %v1830 = vunpack.c.l.b16 %v479
    %v1831 = vunpack.c.h.b16 %v479
    %v1832 = vunpack.c.l.b16 %v480
    %v1833 = vunpack.c.h.b16 %v480
    %v1834 = vunpack.c.l.b16 %v481
    %v1835 = vunpack.c.h.b16 %v481
    %v1836 = vunpack.c.l.b16 %v482
    %v1837 = vunpack.c.h.b16 %v482
    %v1838 = vunpack.c.l.b16 %v483
    %v1839 = vunpack.c.h.b16 %v483
    %v1840 = vunpack.c.l.b16 %v484
    %v1841 = vunpack.c.h.b16 %v484
    %v1842 = vunpack.c.l.b16 %v485
    %v1843 = vunpack.c.h.b16 %v485
    %v1844 = vunpack.c.l.b16 %v486
    %v1845 = vunpack.c.h.b16 %v486
    %v1846 = vunpack.c.l.b16 %v487
    %v1847 = vunpack.c.h.b16 %v487
    %v1848 = vunpack.c.l.b16 %v488
    %v1849 = vunpack.c.h.b16 %v488
    %v1850 = vunpack.c.l.b16 %v489
    %v1851 = vunpack.c.h.b16 %v489
    %v1852 = vunpack.c.l.b16 %v490
    %v1853 = vunpack.c.h.b16 %v490
    %v1854 = vunpack.c.l.b16 %v491
    %v1855 = vunpack.c.h.b16 %v491
    %v1856 = vunpack.c.l.b16 %v492
    %v1857 = vunpack.c.h.b16 %v492
    %v1858 = vunpack.c.l.b16 %v493
    %v1859 = vunpack.c.h.b16 %v493
    %v1860 = vunpack.c.l.b16 %v494
    %v1861 = vunpack.c.h.b16 %v494
    %v1862 = vunpack.c.l.b16 %v495
    %v1863 = vunpack.c.h.b16 %v495
    %v1864 = vunpack.c.l.b16 %v496
    %v1865 = vunpack.c.h.b16 %v496
    %v1866 = vunpack.c.l.b16 %v497
    %v1867 = vunpack.c.h.b16 %v497
    %v1868 = vunpack.c.l.b16 %v498
    %v1869 = vunpack.c.h.b16 %v498
    %v1870 = vunpack.c.l.b16 %v499
    %v1871 = vunpack.c.h.b16 %v499
    %v1872 = vunpack.c.l.b16 %v500
    %v1873 = vunpack.c.h.b16 %v500
    %v1874 = vunpack.c.l.b16 %v501
    %v1875 = vunpack.c.h.b16 %v501
    %v1876 = vunpack.c.l.b16 %v502
    %v1877 = vunpack.c.h.b16 %v502
    %v1878 = vunpack.c.l.b16 %v503
    %v1879 = vunpack.c.h.b16 %v503
    %v1880 = vunpack.c.l.b16 %v504
    %v1881 = vunpack.c.h.b16 %v504
    %v1882 = vunpack.c.l.b16 %v505
    %v1883 = vunpack.c.h.b16 %v505
    %v1884 = vunpack.c.l.b16 %v506
    %v1885 = vunpack.c.h.b16 %v506
    %v1886 = vunpack.c.l.b16 %v507
    %v1887 = vunpack.c.h.b16 %v507
    %v1888 = vunpack.c.l.b16 %v508
    %v1889 = vunpack.c.h.b16 %v508
    %v1890 = vunpack.c.l.b16 %v509
    %v1891 = vunpack.c.h.b16 %v509
    %v1892 = vunpack.c.l.b16 %v510
    %v1893 = vunpack.c.h.b16 %v510
    %v1894 = vunpack.c.l.b16 %v511
    %v1895 = vunpack.c.h.b16 %v511
    %v1896 = vunpack.c.l.b16 %v512
    %v1897 = vunpack.c.h.b16 %v512
    %v1898 = vunpack.c.l.b16 %v513
    %v1899 = vunpack.c.h.b16 %v513
    %v1900 = vunpack.c.l.b16 %v514
    %v1901 = vunpack.c.h.b16 %v514
    %v1902 = vunpack.c.l.b16 %v515
    %v1903 = vunpack.c.h.b16 %v515
    %v1904 = vunpack.c.l.b16 %v516
    %v1905 = vunpack.c.h.b16 %v516
    %v1906 = vunpack.c.l.b16 %v517
    %v1907 = vunpack.c.h.b16 %v517
    %v1908 = vunpack.c.l.b16 %v518
    %v1909 = vunpack.c.h.b16 %v518
    %v1910 = vunpack.c.l.b16 %v519
    %v1911 = vunpack.c.h.b16 %v519
    %v1912 = vunpack.c.l.b16 %v520
    %v1913 = vunpack.c.h.b16 %v520
    %v1914 = vunpack.c.l.b16 %v521
    %v1915 = vunpack.c.h.b16 %v521
    %v1916 = vunpack.c.l.b16 %v522
    %v1917 = vunpack.c.h.b16 %v522
    %v1918 = vunpack.c.l.b16 %v523
    %v1919 = vunpack.c.h.b16 %v523
    %v1920 = vunpack.c.l.b16 %v524
    %v1921 = vunpack.c.h.b16 %v524
    %v1922 = vunpack.c.l.b16 %v525
    %v1923 = vunpack.c.h.b16 %v525
    %v1924 = vunpack.c.l.b16 %v526
    %v1925 = vunpack.c.h.b16 %v526
    %v1926 = vunpack.c.l.b16 %v527
    %v1927 = vunpack.c.h.b16 %v527
    %v1928 = vunpack.c.l.b16 %v528
    %v1929 = vunpack.c.h.b16 %v528
    %v1930 = vunpack.c.l.b16 %v529
    %v1931 = vunpack.c.h.b16 %v529
    %v1932 = vunpack.c.l.b16 %v530
    %v1933 = vunpack.c.h.b16 %v530
    %v1934 = vunpack.c.l.b16 %v531
    %v1935 = vunpack.c.h.b16 %v531
    %v1936 = vunpack.c.l.b16 %v532
    %v1937 = vunpack.c.h.b16 %v532
    %v1938 = vunpack.c.l.b16 %v533
    %v1939 = vunpack.c.h.b16 %v533
    %v1940 = vunpack.c.l.b16 %v534
    %v1941 = vunpack.c.h.b16 %v534
    %v1942 = vunpack.c.l.b16 %v535
    %v1943 = vunpack.c.h.b16 %v535
    %v1944 = vunpack.c.l.b16 %v536
    %v1945 = vunpack.c.h.b16 %v536
    %v1946 = vunpack.c.l.b16 %v537
    %v1947 = vunpack.c.h.b16 %v537
    %v1948 = vunpack.c.l.b16 %v538
    %v1949 = vunpack.c.h.b16 %v538
    %v1950 = vunpack.c.l.b16 %v539
    %v1951 = vunpack.c.h.b16 %v539
    %v1952 = vunpack.c.l.b16 %v540
    %v1953 = vunpack.c.h.b16 %v540
    %v1954 = vunpack.c.l.b16 %v541
    %v1955 = vunpack.c.h.b16 %v541
    %v1956 = vunpack.c.l.b16 %v542
    %v1957 = vunpack.c.h.b16 %v542
    %v1958 = vunpack.c.l.b16 %v543
    %v1959 = vunpack.c.h.b16 %v543
    %v1960 = vunpack.c.l.b16 %v544
    %v1961 = vunpack.c.h.b16 %v544
    %v1962 = vunpack.c.l.b16 %v545
    %v1963 = vunpack.c.h.b16 %v545
    %v1964 = vunpack.c.l.b16 %v546
    %v1965 = vunpack.c.h.b16 %v546
    %v1966 = vunpack.c.l.b16 %v547
    %v1967 = vunpack.c.h.b16 %v547
    %v1968 = vunpack.c.l.b16 %v548
    %v1969 = vunpack.c.h.b16 %v548
    %v1970 = vunpack.c.l.b16 %v549
    %v1971 = vunpack.c.h.b16 %v549
    %v1972 = vunpack.c.l.b16 %v550
    %v1973 = vunpack.c.h.b16 %v550
    %v1974 = vunpack.c.l.b16 %v551
    %v1975 = vunpack.c.h.b16 %v551
    %v1976 = vunpack.c.l.b16 %v552
    %v1977 = vunpack.c.h.b16 %v552
    %v1978 = vunpack.c.l.b16 %v553
    %v1979 = vunpack.c.h.b16 %v553
    %v1980 = vunpack.c.l.b16 %v554
    %v1981 = vunpack.c.h.b16 %v554
    %v1982 = vunpack.c.l.b16 %v555
    %v1983 = vunpack.c.h.b16 %v555
    %v1984 = vunpack.c.l.b16 %v556
    %v1985 = vunpack.c.h.b16 %v556
    %v1986 = vunpack.c.l.b16 %v557
    %v1987 = vunpack.c.h.b16 %v557
    %v1988 = vunpack.c.l.b16 %v558
    %v1989 = vunpack.c.h.b16 %v558
    %v1990 = vunpack.c.l.b16 %v559
    %v1991 = vunpack.c.h.b16 %v559
    %v1992 = vunpack.c.l.b16 %v560
    %v1993 = vunpack.c.h.b16 %v560
    %v1994 = vunpack.c.l.b16 %v561
    %v1995 = vunpack.c.h.b16 %v561
    %v1996 = vunpack.c.l.b16 %v562
    %v1997 = vunpack.c.h.b16 %v562
    %v1998 = vunpack.c.l.b16 %v563
    %v1999 = vunpack.c.h.b16 %v563
    %v2000 = vunpack.c.l.b16 %v564
    %v2001 = vunpack.c.h.b16 %v564
    %v2002 = vunpack.c.l.b16 %v565
    %v2003 = vunpack.c.h.b16 %v565
    %v2004 = vunpack.c.l.b16 %v566
    %v2005 = vunpack.c.h.b16 %v566
    %v2006 = vunpack.c.l.b16 %v567
    %v2007 = vunpack.c.h.b16 %v567
    %v2008 = vunpack.c.l.b16 %v568
    %v2009 = vunpack.c.h.b16 %v568
    %v2010 = vunpack.c.l.b16 %v569
    %v2011 = vunpack.c.h.b16 %v569
    %v2012 = vunpack.c.l.b16 %v570
    %v2013 = vunpack.c.h.b16 %v570
    %v2014 = vunpack.c.l.b16 %v571
    %v2015 = vunpack.c.h.b16 %v571
    %v2016 = vunpack.c.l.b16 %v572
    %v2017 = vunpack.c.h.b16 %v572
    %v2018 = vunpack.c.l.b16 %v573
    %v2019 = vunpack.c.h.b16 %v573
    %v2020 = vunpack.c.l.b16 %v574
    %v2021 = vunpack.c.h.b16 %v574
    %v2022 = vunpack.c.l.b16 %v575
    %v2023 = vunpack.c.h.b16 %v575
    %v2024 = vunpack.c.l.b16 %v576
    %v2025 = vunpack.c.h.b16 %v576
    %v2026 = vunpack.c.l.b16 %v577
    %v2027 = vunpack.c.h.b16 %v577
    %v2028 = vunpack.c.l.b16 %v578
    %v2029 = vunpack.c.h.b16 %v578
    %v2030 = vunpack.c.l.b16 %v579
    %v2031 = vunpack.c.h.b16 %v579
    %v2032 = vunpack.c.l.b16 %v580
    %v2033 = vunpack.c.h.b16 %v580
    %v2034 = vunpack.c.l.b16 %v581
    %v2035 = vunpack.c.h.b16 %v581
    %v2036 = vunpack.c.l.b16 %v582
    %v2037 = vunpack.c.h.b16 %v582
    %v2038 = vunpack.c.l.b16 %v583
    %v2039 = vunpack.c.h.b16 %v583
    %v2040 = vunpack.c.l.b16 %v584
    %v2041 = vunpack.c.h.b16 %v584
    %v2042 = vunpack.c.l.b16 %v585
    %v2043 = vunpack.c.h.b16 %v585
    %v2044 = vunpack.c.l.b16 %v586
    %v2045 = vunpack.c.h.b16 %v586
    %v2046 = vunpack.c.l.b16 %v587
    %v2047 = vunpack.c.h.b16 %v587
    %v2048 = vunpack.c.l.b16 %v588
    %v2049 = vunpack.c.h.b16 %v588
    %v2050 = vunpack.c.l.b16 %v589
    %v2051 = vunpack.c.h.b16 %v589
    %v2052 = vunpack.c.l.b16 %v590
    %v2053 = vunpack.c.h.b16 %v590
    %v2054 = vunpack.c.l.b16 %v591
    %v2055 = vunpack.c.h.b16 %v591
    %v2056 = vunpack.c.l.b16 %v592
    %v2057 = vunpack.c.h.b16 %v592
    %v2058 = vunpack.c.l.b16 %v593
    %v2059 = vunpack.c.h.b16 %v593
    %v2060 = vunpack.c.l.b16 %v594
    %v2061 = vunpack.c.h.b16 %v594
    %v2062 = vunpack.c.l.b16 %v595
    %v2063 = vunpack.c.h.b16 %v595
    %v2064 = vunpack.c.l.b16 %v596
    %v2065 = vunpack.c.h.b16 %v596
    %v2066 = vunpack.c.l.b16 %v597
    %v2067 = vunpack.c.h.b16 %v597
    %v2068 = vunpack.c.l.b16 %v598
    %v2069 = vunpack.c.h.b16 %v598
    %v2070 = vunpack.c.l.b16 %v599
    %v2071 = vunpack.c.h.b16 %v599
    %v2072 = vunpack.c.l.b16 %v600
    %v2073 = vunpack.c.h.b16 %v600
    %v2074 = vunpack.c.l.b16 %v601
    %v2075 = vunpack.c.h.b16 %v601
    %v2076 = vunpack.c.l.b16 %v602
    %v2077 = vunpack.c.h.b16 %v602
    %v2078 = vunpack.c.l.b16 %v603
    %v2079 = vunpack.c.h.b16 %v603
    %v2080 = vunpack.c.l.b16 %v604
    %v2081 = vunpack.c.h.b16 %v604
    %v2082 = vunpack.c.l.b16 %v605
    %v2083 = vunpack.c.h.b16 %v605
    %v2084 = vunpack.c.l.b16 %v606
    %v2085 = vunpack.c.h.b16 %v606
    %v2086 = vunpack.c.l.b16 %v607
    %v2087 = vunpack.c.h.b16 %v607
    %v2088 = vunpack.c.l.b16 %v608
    %v2089 = vunpack.c.h.b16 %v608
    %v2090 = vunpack.c.l.b16 %v609
    %v2091 = vunpack.c.h.b16 %v609
    %v2092 = vunpack.c.l.b16 %v610
    %v2093 = vunpack.c.h.b16 %v610
    %v2094 = vunpack.c.l.b16 %v611
    %v2095 = vunpack.c.h.b16 %v611
    %v2096 = vunpack.c.l.b16 %v612
    %v2097 = vunpack.c.h.b16 %v612
    %v2098 = vunpack.c.l.b16 %v613
    %v2099 = vunpack.c.h.b16 %v613
    %v2100 = vunpack.c.l.b16 %v614
    %v2101 = vunpack.c.h.b16 %v614
    %v2102 = vunpack.c.l.b16 %v615
    %v2103 = vunpack.c.h.b16 %v615
    %v2104 = vunpack.c.l.b16 %v616
    %v2105 = vunpack.c.h.b16 %v616
    %v2106 = vunpack.c.l.b16 %v617
    %v2107 = vunpack.c.h.b16 %v617
    %v2108 = vunpack.c.l.b16 %v618
    %v2109 = vunpack.c.h.b16 %v618
    %v2110 = vunpack.c.l.b16 %v619
    %v2111 = vunpack.c.h.b16 %v619
    %v2112 = vunpack.c.l.b16 %v620
    %v2113 = vunpack.c.h.b16 %v620
    %v2114 = vunpack.c.l.b16 %v621
    %v2115 = vunpack.c.h.b16 %v621
    %v2116 = vunpack.c.l.b16 %v622
    %v2117 = vunpack.c.h.b16 %v622
    %v2118 = vunpack.c.l.b16 %v623
    %v2119 = vunpack.c.h.b16 %v623
    %v2120 = vunpack.c.l.b16 %v624
    %v2121 = vunpack.c.h.b16 %v624
    %v2122 = vunpack.c.l.b16 %v625
    %v2123 = vunpack.c.h.b16 %v625
    %v2124 = vunpack.c.l.b16 %v626
    %v2125 = vunpack.c.h.b16 %v626
    %v2126 = vunpack.c.l.b16 %v627
    %v2127 = vunpack.c.h.b16 %v627
    %v2128 = vunpack.c.l.b16 %v628
    %v2129 = vunpack.c.h.b16 %v628
    %v2130 = vunpack.c.l.b16 %v629
    %v2131 = vunpack.c.h.b16 %v629
    %v2132 = vunpack.c.l.b16 %v630
    %v2133 = vunpack.c.h.b16 %v630
    %v2134 = vunpack.c.l.b16 %v631
    %v2135 = vunpack.c.h.b16 %v631
    %v2136 = vunpack.c.l.b16 %v632
    %v2137 = vunpack.c.h.b16 %v632
    %v2138 = vunpack.c.l.b16 %v633
    %v2139 = vunpack.c.h.b16 %v633
    %v2140 = vunpack.c.l.b16 %v634
    %v2141 = vunpack.c.h.b16 %v634
    %v2142 = vunpack.c.l.b16 %v635
    %v2143 = vunpack.c.h.b16 %v635
    %v2144 = vunpack.c.l.b16 %v636
    %v2145 = vunpack.c.h.b16 %v636
    %v2146 = vunpack.c.l.b16 %v637
    %v2147 = vunpack.c.h.b16 %v637
    %v2148 = vunpack.c.l.b16 %v638
    %v2149 = vunpack.c.h.b16 %v638
    %v2150 = vunpack.c.l.b16 %v639
    %v2151 = vunpack.c.h.b16 %v639
    %v2152 = vunpack.c.l.b16 %v640
    %v2153 = vunpack.c.h.b16 %v640
    %v2154 = vunpack.c.l.b16 %v641
    %v2155 = vunpack.c.h.b16 %v641
    %v2156 = vunpack.c.l.b16 %v642
    %v2157 = vunpack.c.h.b16 %v642
    %v2158 = vunpack.c.l.b16 %v643
    %v2159 = vunpack.c.h.b16 %v643
    %v2160 = vunpack.c.l.b16 %v644
    %v2161 = vunpack.c.h.b16 %v644
    %v2162 = vunpack.c.l.b16 %v645
    %v2163 = vunpack.c.h.b16 %v645
    %v2164 = vunpack.c.l.b16 %v646
    %v2165 = vunpack.c.h.b16 %v646
    %v2166 = vunpack.c.l.b16 %v647
    %v2167 = vunpack.c.h.b16 %v647
    %v2168 = vunpack.c.l.b16 %v648
    %v2169 = vunpack.c.h.b16 %v648
    %v2170 = vunpack.c.l.b16 %v649
    %v2171 = vunpack.c.h.b16 %v649
    %v2172 = vunpack.c.l.b16 %v650
    %v2173 = vunpack.c.h.b16 %v650
    %v2174 = vunpack.c.l.b16 %v651
    %v2175 = vunpack.c.h.b16 %v651
    %v2176 = vunpack.c.l.b16 %v652
    %v2177 = vunpack.c.h.b16 %v652
    %v2178 = vunpack.c.l.b16 %v653
    %v2179 = vunpack.c.h.b16 %v653
    %v2180 = vunpack.c.l.b16 %v654
    %v2181 = vunpack.c.h.b16 %v654
    %v2182 = vunpack.c.l.b16 %v655
    %v2183 = vunpack.c.h.b16 %v655
    %v2184 = vunpack.c.l.b16 %v656
    %v2185 = vunpack.c.h.b16 %v656
    %v2186 = vunpack.c.l.b16 %v657
    %v2187 = vunpack.c.h.b16 %v657
    %v2188 = vunpack.c.l.b16 %v658
    %v2189 = vunpack.c.h.b16 %v658
    %v2190 = vunpack.c.l.b16 %v659
    %v2191 = vunpack.c.h.b16 %v659
    %v2192 = vunpack.c.l.b16 %v660
    %v2193 = vunpack.c.h.b16 %v660
    %v2194 = vunpack.c.l.b16 %v661
    %v2195 = vunpack.c.h.b16 %v661
    %v2196 = vunpack.c.l.b16 %v662
    %v2197 = vunpack.c.h.b16 %v662
    %v2198 = vunpack.c.l.b16 %v663
    %v2199 = vunpack.c.h.b16 %v663
    %v2200 = vunpack.c.l.b16 %v664
    %v2201 = vunpack.c.h.b16 %v664
    %v2202 = vunpack.c.l.b16 %v665
    %v2203 = vunpack.c.h.b16 %v665
    %v2204 = vunpack.c.l.b16 %v666
    %v2205 = vunpack.c.h.b16 %v666
    %v2206 = vunpack.c.l.b16 %v667
    %v2207 = vunpack.c.h.b16 %v667
    %v2208 = vunpack.c.l.b16 %v668
    %v2209 = vunpack.c.h.b16 %v668
    %v2210 = vunpack.c.l.b16 %v669
    %v2211 = vunpack.c.h.b16 %v669
    %v2212 = vunpack.c.l.b16 %v670
    %v2213 = vunpack.c.h.b16 %v670
    %v2214 = vunpack.c.l.b16 %v671
    %v2215 = vunpack.c.h.b16 %v671
    %v2216 = vunpack.c.l.b16 %v672
    %v2217 = vunpack.c.h.b16 %v672
    %v2218 = vunpack.c.l.b16 %v673
    %v2219 = vunpack.c.h.b16 %v673
    %v2220 = vpack.c.b16 %v1200, %v1196
    %v2221 = vpack.c.b16 %v1201, %v1197
    %v2222 = vpack.c.b16 %v1202, %v1198
    %v2223 = vpack.c.b16 %v1203, %v1199
    %v2224 = vpack.c.b16 %v1208, %v1204
    %v2225 = vpack.c.b16 %v1209, %v1205
    %v2226 = vpack.c.b16 %v1210, %v1206
    %v2227 = vpack.c.b16 %v1211, %v1207
    %v2228 = vpack.c.b16 %v1216, %v1212
    %v2229 = vpack.c.b16 %v1217, %v1213
    %v2230 = vpack.c.b16 %v1218, %v1214
    %v2231 = vpack.c.b16 %v1219, %v1215
    %v2232 = vpack.c.b16 %v1224, %v1220
    %v2233 = vpack.c.b16 %v1225, %v1221
    %v2234 = vpack.c.b16 %v1226, %v1222
    %v2235 = vpack.c.b16 %v1227, %v1223
    %v2236 = vpack.c.b16 %v1232, %v1228
    %v2237 = vpack.c.b16 %v1233, %v1229
    %v2238 = vpack.c.b16 %v1234, %v1230
    %v2239 = vpack.c.b16 %v1235, %v1231
    %v2240 = vpack.c.b16 %v1240, %v1236
    %v2241 = vpack.c.b16 %v1241, %v1237
    %v2242 = vpack.c.b16 %v1242, %v1238
    %v2243 = vpack.c.b16 %v1243, %v1239
    %v2244 = vpack.c.b16 %v1248, %v1244
    %v2245 = vpack.c.b16 %v1249, %v1245
    %v2246 = vpack.c.b16 %v1250, %v1246
    %v2247 = vpack.c.b16 %v1251, %v1247
    %v2248 = vpack.c.b16 %v1256, %v1252
    %v2249 = vpack.c.b16 %v1257, %v1253
    %v2250 = vpack.c.b16 %v1258, %v1254
    %v2251 = vpack.c.b16 %v1259, %v1255
    %v2252 = vpack.c.b16 %v1264, %v1260
    %v2253 = vpack.c.b16 %v1265, %v1261
    %v2254 = vpack.c.b16 %v1266, %v1262
    %v2255 = vpack.c.b16 %v1267, %v1263
    %v2256 = vpack.c.b16 %v1272, %v1268
    %v2257 = vpack.c.b16 %v1273, %v1269
    %v2258 = vpack.c.b16 %v1274, %v1270
    %v2259 = vpack.c.b16 %v1275, %v1271
    %v2260 = vpack.c.b16 %v1280, %v1276
    %v2261 = vpack.c.b16 %v1281, %v1277
    %v2262 = vpack.c.b16 %v1282, %v1278
    %v2263 = vpack.c.b16 %v1283, %v1279
    %v2264 = vpack.c.b16 %v1288, %v1284
    %v2265 = vpack.c.b16 %v1289, %v1285
    %v2266 = vpack.c.b16 %v1290, %v1286
    %v2267 = vpack.c.b16 %v1291, %v1287
    %v2268 = vpack.c.b16 %v1296, %v1292
    %v2269 = vpack.c.b16 %v1297, %v1293
    %v2270 = vpack.c.b16 %v1298, %v1294
    %v2271 = vpack.c.b16 %v1299, %v1295
    %v2272 = vpack.c.b16 %v1304, %v1300
    %v2273 = vpack.c.b16 %v1305, %v1301
    %v2274 = vpack.c.b16 %v1306, %v1302
    %v2275 = vpack.c.b16 %v1307, %v1303
    %v2276 = vpack.c.b16 %v1312, %v1308
    %v2277 = vpack.c.b16 %v1313, %v1309
    %v2278 = vpack.c.b16 %v1314, %v1310
    %v2279 = vpack.c.b16 %v1315, %v1311
    %v2280 = vpack.c.b16 %v1320, %v1316
    %v2281 = vpack.c.b16 %v1321, %v1317
    %v2282 = vpack.c.b16 %v1322, %v1318
    %v2283 = vpack.c.b16 %v1323, %v1319
    %v2284 = vpack.c.b16 %v1328, %v1324
    %v2285 = vpack.c.b16 %v1329, %v1325
    %v2286 = vpack.c.b16 %v1330, %v1326
    %v2287 = vpack.c.b16 %v1331, %v1327
    %v2288 = vpack.c.b16 %v1336, %v1332
    %v2289 = vpack.c.b16 %v1337, %v1333
    %v2290 = vpack.c.b16 %v1338, %v1334
    %v2291 = vpack.c.b16 %v1339, %v1335
    %v2292 = vpack.c.b16 %v1344, %v1340
    %v2293 = vpack.c.b16 %v1345, %v1341
    %v2294 = vpack.c.b16 %v1346, %v1342
    %v2295 = vpack.c.b16 %v1347, %v1343
    %v2296 = vpack.c.b16 %v1352, %v1348
    %v2297 = vpack.c.b16 %v1353, %v1349
    %v2298 = vpack.c.b16 %v1354, %v1350
    %v2299 = vpack.c.b16 %v1355, %v1351
    %v2300 = vpack.c.b16 %v1360, %v1356
    %v2301 = vpack.c.b16 %v1361, %v1357
    %v2302 = vpack.c.b16 %v1362, %v1358
    %v2303 = vpack.c.b16 %v1363, %v1359
    %v2304 = vpack.c.b16 %v1368, %v1364
    %v2305 = vpack.c.b16 %v1369, %v1365
    %v2306 = vpack.c.b16 %v1370, %v1366
    %v2307 = vpack.c.b16 %v1371, %v1367
    %v2308 = vpack.c.b16 %v1376, %v1372
    %v2309 = vpack.c.b16 %v1377, %v1373
    %v2310 = vpack.c.b16 %v1378, %v1374
    %v2311 = vpack.c.b16 %v1379, %v1375
    %v2312 = vpack.c.b16 %v1384, %v1380
    %v2313 = vpack.c.b16 %v1385, %v1381
    %v2314 = vpack.c.b16 %v1386, %v1382
    %v2315 = vpack.c.b16 %v1387, %v1383
    %v2316 = vpack.c.b16 %v1392, %v1388
    %v2317 = vpack.c.b16 %v1393, %v1389
    %v2318 = vpack.c.b16 %v1394, %v1390
    %v2319 = vpack.c.b16 %v1395, %v1391
    %v2320 = vpack.c.b16 %v1400, %v1396
    %v2321 = vpack.c.b16 %v1401, %v1397
    %v2322 = vpack.c.b16 %v1402, %v1398
    %v2323 = vpack.c.b16 %v1403, %v1399
    %v2324 = vpack.c.b16 %v1408, %v1404
    %v2325 = vpack.c.b16 %v1409, %v1405
    %v2326 = vpack.c.b16 %v1410, %v1406
    %v2327 = vpack.c.b16 %v1411, %v1407
    %v2328 = vpack.c.b16 %v1416, %v1412
    %v2329 = vpack.c.b16 %v1417, %v1413
    %v2330 = vpack.c.b16 %v1418, %v1414
    %v2331 = vpack.c.b16 %v1419, %v1415
    %v2332 = vpack.c.b16 %v1424, %v1420
    %v2333 = vpack.c.b16 %v1425, %v1421
    %v2334 = vpack.c.b16 %v1426, %v1422
    %v2335 = vpack.c.b16 %v1427, %v1423
    %v2336 = vpack.c.b16 %v1432, %v1428
    %v2337 = vpack.c.b16 %v1433, %v1429
    %v2338 = vpack.c.b16 %v1434, %v1430
    %v2339 = vpack.c.b16 %v1435, %v1431
    %v2340 = vpack.c.b16 %v1440, %v1436
    %v2341 = vpack.c.b16 %v1441, %v1437
    %v2342 = vpack.c.b16 %v1442, %v1438
    %v2343 = vpack.c.b16 %v1443, %v1439
    %v2344 = vpack.c.b16 %v1448, %v1444
    %v2345 = vpack.c.b16 %v1449, %v1445
    %v2346 = vpack.c.b16 %v1450, %v1446
    %v2347 = vpack.c.b16 %v1451, %v1447
    %v2348 = vpack.c.b16 %v1456, %v1452
    %v2349 = vpack.c.b16 %v1457, %v1453
    %v2350 = vpack.c.b16 %v1458, %v1454
    %v2351 = vpack.c.b16 %v1459, %v1455
    %v2352 = vpack.c.b16 %v1464, %v1460
    %v2353 = vpack.c.b16 %v1465, %v1461
    %v2354 = vpack.c.b16 %v1466, %v1462
    %v2355 = vpack.c.b16 %v1467, %v1463
    %v2356 = vpack.c.b16 %v1472, %v1468
    %v2357 = vpack.c.b16 %v1473, %v1469
    %v2358 = vpack.c.b16 %v1474, %v1470
    %v2359 = vpack.c.b16 %v1475, %v1471
    %v2360 = vpack.c.b16 %v1480, %v1476
    %v2361 = vpack.c.b16 %v1481, %v1477
    %v2362 = vpack.c.b16 %v1482, %v1478
    %v2363 = vpack.c.b16 %v1483, %v1479
    %v2364 = vpack.c.b16 %v1488, %v1484
    %v2365 = vpack.c.b16 %v1489, %v1485
    %v2366 = vpack.c.b16 %v1490, %v1486
    %v2367 = vpack.c.b16 %v1491, %v1487
    %v2368 = vpack.c.b16 %v1496, %v1492
    %v2369 = vpack.c.b16 %v1497, %v1493
    %v2370 = vpack.c.b16 %v1498, %v1494
    %v2371 = vpack.c.b16 %v1499, %v1495
    %v2372 = vpack.c.b16 %v1504, %v1500
    %v2373 = vpack.c.b16 %v1505, %v1501
    %v2374 = vpack.c.b16 %v1506, %v1502
    %v2375 = vpack.c.b16 %v1507, %v1503
    %v2376 = vpack.c.b16 %v1512, %v1508
    %v2377 = vpack.c.b16 %v1513, %v1509
    %v2378 = vpack.c.b16 %v1514, %v1510
    %v2379 = vpack.c.b16 %v1515, %v1511
    %v2380 = vpack.c.b16 %v1520, %v1516
    %v2381 = vpack.c.b16 %v1521, %v1517
    %v2382 = vpack.c.b16 %v1522, %v1518
    %v2383 = vpack.c.b16 %v1523, %v1519
    %v2384 = vpack.c.b16 %v1528, %v1524
    %v2385 = vpack.c.b16 %v1529, %v1525
    %v2386 = vpack.c.b16 %v1530, %v1526
    %v2387 = vpack.c.b16 %v1531, %v1527
    %v2388 = vpack.c.b16 %v1536, %v1532
    %v2389 = vpack.c.b16 %v1537, %v1533
    %v2390 = vpack.c.b16 %v1538, %v1534
    %v2391 = vpack.c.b16 %v1539, %v1535
    %v2392 = vpack.c.b16 %v1544, %v1540
    %v2393 = vpack.c.b16 %v1545, %v1541
    %v2394 = vpack.c.b16 %v1546, %v1542
    %v2395 = vpack.c.b16 %v1547, %v1543
    %v2396 = vpack.c.b16 %v1552, %v1548
    %v2397 = vpack.c.b16 %v1553, %v1549
    %v2398 = vpack.c.b16 %v1554, %v1550
    %v2399 = vpack.c.b16 %v1555, %v1551
    %v2400 = vpack.c.b16 %v1560, %v1556
    %v2401 = vpack.c.b16 %v1561, %v1557
    %v2402 = vpack.c.b16 %v1562, %v1558
    %v2403 = vpack.c.b16 %v1563, %v1559
    %v2404 = vpack.c.b16 %v1568, %v1564
    %v2405 = vpack.c.b16 %v1569, %v1565
    %v2406 = vpack.c.b16 %v1570, %v1566
    %v2407 = vpack.c.b16 %v1571, %v1567
    %v2408 = vpack.c.b16 %v1576, %v1572
    %v2409 = vpack.c.b16 %v1577, %v1573
    %v2410 = vpack.c.b16 %v1578, %v1574
    %v2411 = vpack.c.b16 %v1579, %v1575
    %v2412 = vpack.c.b16 %v1584, %v1580
    %v2413 = vpack.c.b16 %v1585, %v1581
    %v2414 = vpack.c.b16 %v1586, %v1582
    %v2415 = vpack.c.b16 %v1587, %v1583
    %v2416 = vpack.c.b16 %v1592, %v1588
    %v2417 = vpack.c.b16 %v1593, %v1589
    %v2418 = vpack.c.b16 %v1594, %v1590
    %v2419 = vpack.c.b16 %v1595, %v1591
    %v2420 = vpack.c.b16 %v1600, %v1596
    %v2421 = vpack.c.b16 %v1601, %v1597
    %v2422 = vpack.c.b16 %v1602, %v1598
    %v2423 = vpack.c.b16 %v1603, %v1599
    %v2424 = vpack.c.b16 %v1608, %v1604
    %v2425 = vpack.c.b16 %v1609, %v1605
    %v2426 = vpack.c.b16 %v1610, %v1606
    %v2427 = vpack.c.b16 %v1611, %v1607
    %v2428 = vpack.c.b16 %v1616, %v1612
    %v2429 = vpack.c.b16 %v1617, %v1613
    %v2430 = vpack.c.b16 %v1618, %v1614
    %v2431 = vpack.c.b16 %v1619, %v1615
    %v2432 = vpack.c.b16 %v1624, %v1620
    %v2433 = vpack.c.b16 %v1625, %v1621
    %v2434 = vpack.c.b16 %v1626, %v1622
    %v2435 = vpack.c.b16 %v1627, %v1623
    %v2436 = vpack.c.b16 %v1632, %v1628
    %v2437 = vpack.c.b16 %v1633, %v1629
    %v2438 = vpack.c.b16 %v1634, %v1630
    %v2439 = vpack.c.b16 %v1635, %v1631
    %v2440 = vpack.c.b16 %v1640, %v1636
    %v2441 = vpack.c.b16 %v1641, %v1637
    %v2442 = vpack.c.b16 %v1642, %v1638
    %v2443 = vpack.c.b16 %v1643, %v1639
    %v2444 = vpack.c.b16 %v1648, %v1644
    %v2445 = vpack.c.b16 %v1649, %v1645
    %v2446 = vpack.c.b16 %v1650, %v1646
    %v2447 = vpack.c.b16 %v1651, %v1647
    %v2448 = vpack.c.b16 %v1656, %v1652
    %v2449 = vpack.c.b16 %v1657, %v1653
    %v2450 = vpack.c.b16 %v1658, %v1654
    %v2451 = vpack.c.b16 %v1659, %v1655
    %v2452 = vpack.c.b16 %v1664, %v1660
    %v2453 = vpack.c.b16 %v1665, %v1661
    %v2454 = vpack.c.b16 %v1666, %v1662
    %v2455 = vpack.c.b16 %v1667, %v1663
    %v2456 = vpack.c.b16 %v1672, %v1668
    %v2457 = vpack.c.b16 %v1673, %v1669
    %v2458 = vpack.c.b16 %v1674, %v1670
    %v2459 = vpack.c.b16 %v1675, %v1671
    %v2460 = vpack.c.b16 %v1680, %v1676
    %v2461 = vpack.c.b16 %v1681, %v1677
    %v2462 = vpack.c.b16 %v1682, %v1678
    %v2463 = vpack.c.b16 %v1683, %v1679
    %v2464 = vpack.c.b16 %v1688, %v1684
    %v2465 = vpack.c.b16 %v1689, %v1685
    %v2466 = vpack.c.b16 %v1690, %v1686
    %v2467 = vpack.c.b16 %v1691, %v1687
    %v2468 = vpack.c.b16 %v1696, %v1692
    %v2469 = vpack.c.b16 %v1697, %v1693
    %v2470 = vpack.c.b16 %v1698, %v1694
    %v2471 = vpack.c.b16 %v1699, %v1695
    %v2472 = vpack.c.b16 %v1704, %v1700
    %v2473 = vpack.c.b16 %v1705, %v1701
    %v2474 = vpack.c.b16 %v1706, %v1702
    %v2475 = vpack.c.b16 %v1707, %v1703
    %v2476 = vpack.c.b16 %v1712, %v1708
    %v2477 = vpack.c.b16 %v1713, %v1709
    %v2478 = vpack.c.b16 %v1714, %v1710
    %v2479 = vpack.c.b16 %v1715, %v1711
    %v2480 = vpack.c.b16 %v1720, %v1716
    %v2481 = vpack.c.b16 %v1721, %v1717
    %v2482 = vpack.c.b16 %v1722, %v1718
    %v2483 = vpack.c.b16 %v1723, %v1719
    %v2484 = vpack.c.b16 %v1728, %v1724
    %v2485 = vpack.c.b16 %v1729, %v1725
    %v2486 = vpack.c.b16 %v1730, %v1726
    %v2487 = vpack.c.b16 %v1731, %v1727
    %v2488 = vpack.c.b16 %v1736, %v1732
    %v2489 = vpack.c.b16 %v1737, %v1733
    %v2490 = vpack.c.b16 %v1738, %v1734
    %v2491 = vpack.c.b16 %v1739, %v1735
    %v2492 = vpack.c.b16 %v1744, %v1740
    %v2493 = vpack.c.b16 %v1745, %v1741
    %v2494 = vpack.c.b16 %v1746, %v1742
    %v2495 = vpack.c.b16 %v1747, %v1743
    %v2496 = vpack.c.b16 %v1752, %v1748
    %v2497 = vpack.c.b16 %v1753, %v1749
    %v2498 = vpack.c.b16 %v1754, %v1750
    %v2499 = vpack.c.b16 %v1755, %v1751
    %v2500 = vpack.c.b16 %v1760, %v1756
    %v2501 = vpack.c.b16 %v1761, %v1757
    %v2502 = vpack.c.b16 %v1762, %v1758
    %v2503 = vpack.c.b16 %v1763, %v1759
    %v2504 = vpack.c.b16 %v1768, %v1764
    %v2505 = vpack.c.b16 %v1769, %v1765
    %v2506 = vpack.c.b16 %v1770, %v1766
    %v2507 = vpack.c.b16 %v1771, %v1767
    %v2508 = vpack.c.b16 %v1776, %v1772
    %v2509 = vpack.c.b16 %v1777, %v1773
    %v2510 = vpack.c.b16 %v1778, %v1774
    %v2511 = vpack.c.b16 %v1779, %v1775
    %v2512 = vpack.c.b16 %v1784, %v1780
    %v2513 = vpack.c.b16 %v1785, %v1781
    %v2514 = vpack.c.b16 %v1786, %v1782
    %v2515 = vpack.c.b16 %v1787, %v1783
    %v2516 = vpack.c.b16 %v1792, %v1788
    %v2517 = vpack.c.b16 %v1793, %v1789
    %v2518 = vpack.c.b16 %v1794, %v1790
    %v2519 = vpack.c.b16 %v1795, %v1791
    %v2520 = vpack.c.b16 %v1800, %v1796
    %v2521 = vpack.c.b16 %v1801, %v1797
    %v2522 = vpack.c.b16 %v1802, %v1798
    %v2523 = vpack.c.b16 %v1803, %v1799
    %v2524 = vpack.c.b16 %v1808, %v1804
    %v2525 = vpack.c.b16 %v1809, %v1805
    %v2526 = vpack.c.b16 %v1810, %v1806
    %v2527 = vpack.c.b16 %v1811, %v1807
    %v2528 = vpack.c.b16 %v1816, %v1812
    %v2529 = vpack.c.b16 %v1817, %v1813
    %v2530 = vpack.c.b16 %v1818, %v1814
    %v2531 = vpack.c.b16 %v1819, %v1815
    %v2532 = vpack.c.b16 %v1824, %v1820
    %v2533 = vpack.c.b16 %v1825, %v1821
    %v2534 = vpack.c.b16 %v1826, %v1822
    %v2535 = vpack.c.b16 %v1827, %v1823
    %v2536 = vpack.c.b16 %v1832, %v1828
    %v2537 = vpack.c.b16 %v1833, %v1829
    %v2538 = vpack.c.b16 %v1834, %v1830
    %v2539 = vpack.c.b16 %v1835, %v1831
    %v2540 = vpack.c.b16 %v1840, %v1836
    %v2541 = vpack.c.b16 %v1841, %v1837
    %v2542 = vpack.c.b16 %v1842, %v1838
    %v2543 = vpack.c.b16 %v1843, %v1839
    %v2544 = vpack.c.b16 %v1848, %v1844
    %v2545 = vpack.c.b16 %v1849, %v1845
    %v2546 = vpack.c.b16 %v1850, %v1846
    %v2547 = vpack.c.b16 %v1851, %v1847
    %v2548 = vpack.c.b16 %v1856, %v1852
    %v2549 = vpack.c.b16 %v1857, %v1853
    %v2550 = vpack.c.b16 %v1858, %v1854
    %v2551 = vpack.c.b16 %v1859, %v1855
    %v2552 = vpack.c.b16 %v1864, %v1860
    %v2553 = vpack.c.b16 %v1865, %v1861
    %v2554 = vpack.c.b16 %v1866, %v1862
    %v2555 = vpack.c.b16 %v1867, %v1863
    %v2556 = vpack.c.b16 %v1872, %v1868
    %v2557 = vpack.c.b16 %v1873, %v1869
    %v2558 = vpack.c.b16 %v1874, %v1870
    %v2559 = vpack.c.b16 %v1875, %v1871
    %v2560 = vpack.c.b16 %v1880, %v1876
    %v2561 = vpack.c.b16 %v1881, %v1877
    %v2562 = vpack.c.b16 %v1882, %v1878
    %v2563 = vpack.c.b16 %v1883, %v1879
    %v2564 = vpack.c.b16 %v1888, %v1884
    %v2565 = vpack.c.b16 %v1889, %v1885
    %v2566 = vpack.c.b16 %v1890, %v1886
    %v2567 = vpack.c.b16 %v1891, %v1887
    %v2568 = vpack.c.b16 %v1896, %v1892
    %v2569 = vpack.c.b16 %v1897, %v1893
    %v2570 = vpack.c.b16 %v1898, %v1894
    %v2571 = vpack.c.b16 %v1899, %v1895
    %v2572 = vpack.c.b16 %v1904, %v1900
    %v2573 = vpack.c.b16 %v1905, %v1901
    %v2574 = vpack.c.b16 %v1906, %v1902
    %v2575 = vpack.c.b16 %v1907, %v1903
    %v2576 = vpack.c.b16 %v1912, %v1908
    %v2577 = vpack.c.b16 %v1913, %v1909
    %v2578 = vpack.c.b16 %v1914, %v1910
    %v2579 = vpack.c.b16 %v1915, %v1911
    %v2580 = vpack.c.b16 %v1920, %v1916
    %v2581 = vpack.c.b16 %v1921, %v1917
    %v2582 = vpack.c.b16 %v1922, %v1918
    %v2583 = vpack.c.b16 %v1923, %v1919
    %v2584 = vpack.c.b16 %v1928, %v1924
    %v2585 = vpack.c.b16 %v1929, %v1925
    %v2586 = vpack.c.b16 %v1930, %v1926
    %v2587 = vpack.c.b16 %v1931, %v1927
    %v2588 = vpack.c.b16 %v1936, %v1932
    %v2589 = vpack.c.b16 %v1937, %v1933
    %v2590 = vpack.c.b16 %v1938, %v1934
    %v2591 = vpack.c.b16 %v1939, %v1935
    %v2592 = vpack.c.b16 %v1944, %v1940
    %v2593 = vpack.c.b16 %v1945, %v1941
    %v2594 = vpack.c.b16 %v1946, %v1942
    %v2595 = vpack.c.b16 %v1947, %v1943
    %v2596 = vpack.c.b16 %v1952, %v1948
    %v2597 = vpack.c.b16 %v1953, %v1949
    %v2598 = vpack.c.b16 %v1954, %v1950
    %v2599 = vpack.c.b16 %v1955, %v1951
    %v2600 = vpack.c.b16 %v1960, %v1956
    %v2601 = vpack.c.b16 %v1961, %v1957
    %v2602 = vpack.c.b16 %v1962, %v1958
    %v2603 = vpack.c.b16 %v1963, %v1959
    %v2604 = vpack.c.b16 %v1968, %v1964
    %v2605 = vpack.c.b16 %v1969, %v1965
    %v2606 = vpack.c.b16 %v1970, %v1966
    %v2607 = vpack.c.b16 %v1971, %v1967
    %v2608 = vpack.c.b16 %v1976, %v1972
    %v2609 = vpack.c.b16 %v1977, %v1973
    %v2610 = vpack.c.b16 %v1978, %v1974
    %v2611 = vpack.c.b16 %v1979, %v1975
    %v2612 = vpack.c.b16 %v1984, %v1980
    %v2613 = vpack.c.b16 %v1985, %v1981
    %v2614 = vpack.c.b16 %v1986, %v1982
    %v2615 = vpack.c.b16 %v1987, %v1983
    %v2616 = vpack.c.b16 %v1992, %v1988
    %v2617 = vpack.c.b16 %v1993, %v1989
    %v2618 = vpack.c.b16 %v1994, %v1990
    %v2619 = vpack.c.b16 %v1995, %v1991
    %v2620 = vpack.c.b16 %v2000, %v1996
    %v2621 = vpack.c.b16 %v2001, %v1997
    %v2622 = vpack.c.b16 %v2002, %v1998
    %v2623 = vpack.c.b16 %v2003, %v1999
    %v2624 = vpack.c.b16 %v2008, %v2004
    %v2625 = vpack.c.b16 %v2009, %v2005
    %v2626 = vpack.c.b16 %v2010, %v2006
    %v2627 = vpack.c.b16 %v2011, %v2007
    %v2628 = vpack.c.b16 %v2016, %v2012
    %v2629 = vpack.c.b16 %v2017, %v2013
    %v2630 = vpack.c.b16 %v2018, %v2014
    %v2631 = vpack.c.b16 %v2019, %v2015
    %v2632 = vpack.c.b16 %v2024, %v2020
    %v2633 = vpack.c.b16 %v2025, %v2021
    %v2634 = vpack.c.b16 %v2026, %v2022
    %v2635 = vpack.c.b16 %v2027, %v2023
    %v2636 = vpack.c.b16 %v2032, %v2028
    %v2637 = vpack.c.b16 %v2033, %v2029
    %v2638 = vpack.c.b16 %v2034, %v2030
    %v2639 = vpack.c.b16 %v2035, %v2031
    %v2640 = vpack.c.b16 %v2040, %v2036
    %v2641 = vpack.c.b16 %v2041, %v2037
    %v2642 = vpack.c.b16 %v2042, %v2038
    %v2643 = vpack.c.b16 %v2043, %v2039
    %v2644 = vpack.c.b16 %v2048, %v2044
    %v2645 = vpack.c.b16 %v2049, %v2045
    %v2646 = vpack.c.b16 %v2050, %v2046
    %v2647 = vpack.c.b16 %v2051, %v2047
    %v2648 = vpack.c.b16 %v2056, %v2052
    %v2649 = vpack.c.b16 %v2057, %v2053
    %v2650 = vpack.c.b16 %v2058, %v2054
    %v2651 = vpack.c.b16 %v2059, %v2055
    %v2652 = vpack.c.b16 %v2064, %v2060
    %v2653 = vpack.c.b16 %v2065, %v2061
    %v2654 = vpack.c.b16 %v2066, %v2062
    %v2655 = vpack.c.b16 %v2067, %v2063
    %v2656 = vpack.c.b16 %v2072, %v2068
    %v2657 = vpack.c.b16 %v2073, %v2069
    %v2658 = vpack.c.b16 %v2074, %v2070
    %v2659 = vpack.c.b16 %v2075, %v2071
    %v2660 = vpack.c.b16 %v2080, %v2076
    %v2661 = vpack.c.b16 %v2081, %v2077
    %v2662 = vpack.c.b16 %v2082, %v2078
    %v2663 = vpack.c.b16 %v2083, %v2079
    %v2664 = vpack.c.b16 %v2088, %v2084
    %v2665 = vpack.c.b16 %v2089, %v2085
    %v2666 = vpack.c.b16 %v2090, %v2086
    %v2667 = vpack.c.b16 %v2091, %v2087
    %v2668 = vpack.c.b16 %v2096, %v2092
    %v2669 = vpack.c.b16 %v2097, %v2093
    %v2670 = vpack.c.b16 %v2098, %v2094
    %v2671 = vpack.c.b16 %v2099, %v2095
    %v2672 = vpack.c.b16 %v2104, %v2100
    %v2673 = vpack.c.b16 %v2105, %v2101
    %v2674 = vpack.c.b16 %v2106, %v2102
    %v2675 = vpack.c.b16 %v2107, %v2103
    %v2676 = vpack.c.b16 %v2112, %v2108
    %v2677 = vpack.c.b16 %v2113, %v2109
    %v2678 = vpack.c.b16 %v2114, %v2110
    %v2679 = vpack.c.b16 %v2115, %v2111
    %v2680 = vpack.c.b16 %v2120, %v2116
    %v2681 = vpack.c.b16 %v2121, %v2117
    %v2682 = vpack.c.b16 %v2122, %v2118
    %v2683 = vpack.c.b16 %v2123, %v2119
    %v2684 = vpack.c.b16 %v2128, %v2124
    %v2685 = vpack.c.b16 %v2129, %v2125
    %v2686 = vpack.c.b16 %v2130, %v2126
    %v2687 = vpack.c.b16 %v2131, %v2127
    %v2688 = vpack.c.b16 %v2136, %v2132
    %v2689 = vpack.c.b16 %v2137, %v2133
    %v2690 = vpack.c.b16 %v2138, %v2134
    %v2691 = vpack.c.b16 %v2139, %v2135
    %v2692 = vpack.c.b16 %v2144, %v2140
    %v2693 = vpack.c.b16 %v2145, %v2141
    %v2694 = vpack.c.b16 %v2146, %v2142
    %v2695 = vpack.c.b16 %v2147, %v2143
    %v2696 = vpack.c.b16 %v2152, %v2148
    %v2697 = vpack.c.b16 %v2153, %v2149
    %v2698 = vpack.c.b16 %v2154, %v2150
    %v2699 = vpack.c.b16 %v2155, %v2151
    %v2700 = vpack.c.b16 %v2160, %v2156
    %v2701 = vpack.c.b16 %v2161, %v2157
    %v2702 = vpack.c.b16 %v2162, %v2158
    %v2703 = vpack.c.b16 %v2163, %v2159
    %v2704 = vpack.c.b16 %v2168, %v2164
    %v2705 = vpack.c.b16 %v2169, %v2165
    %v2706 = vpack.c.b16 %v2170, %v2166
    %v2707 = vpack.c.b16 %v2171, %v2167
    %v2708 = vpack.c.b16 %v2176, %v2172
    %v2709 = vpack.c.b16 %v2177, %v2173
    %v2710 = vpack.c.b16 %v2178, %v2174
    %v2711 = vpack.c.b16 %v2179, %v2175
    %v2712 = vpack.c.b16 %v2184, %v2180
    %v2713 = vpack.c.b16 %v2185, %v2181
    %v2714 = vpack.c.b16 %v2186, %v2182
    %v2715 = vpack.c.b16 %v2187, %v2183
    %v2716 = vpack.c.b16 %v2192, %v2188
    %v2717 = vpack.c.b16 %v2193, %v2189
    %v2718 = vpack.c.b16 %v2194, %v2190
    %v2719 = vpack.c.b16 %v2195, %v2191
    %v2720 = vpack.c.b16 %v2200, %v2196
    %v2721 = vpack.c.b16 %v2201, %v2197
    %v2722 = vpack.c.b16 %v2202, %v2198
    %v2723 = vpack.c.b16 %v2203, %v2199
    %v2724 = vpack.c.b16 %v2208, %v2204
    %v2725 = vpack.c.b16 %v2209, %v2205
    %v2726 = vpack.c.b16 %v2210, %v2206
    %v2727 = vpack.c.b16 %v2211, %v2207
    %v2728 = vpack.c.b16 %v2216, %v2212
    %v2729 = vpack.c.b16 %v2217, %v2213
    %v2730 = vpack.c.b16 %v2218, %v2214
    %v2731 = vpack.c.b16 %v2219, %v2215
    %3244 = vmatpush.bf16.msra.mxu0 %v2248
    %3245 = vmatpush.bf16.msra.mxu0 %v2244
    %3246 = vmatpush.bf16.msra.mxu0 %v2240
    %3247 = vmatpush.bf16.msra.mxu0 %v2236
    %3248 = vmatpush.bf16.msra.mxu0 %v2232
    %3249 = vmatpush.bf16.msra.mxu0 %v2228
    %3250 = vmatpush.bf16.msra.mxu0 %v2224
    %3251 = vmatpush.bf16.msra.mxu0 %v2220
    %3252 = vmatmul.bf16.gmra.mxu0 %v146
    %v3253 = vpop.f32.mrf.mxu0
    %v3254 = vadd.f32 %v676, %v3253
    %v3255 = vpop.f32.mrf.mxu0
    %3256 = vdwg.mxu0
    %3257 = vmatpush.bf16.msra.mxu0 %v2280
    %3258 = vmatpush.bf16.msra.mxu0 %v2276
    %3259 = vmatpush.bf16.msra.mxu0 %v2272
    %3260 = vmatpush.bf16.msra.mxu0 %v2268
    %3261 = vmatpush.bf16.msra.mxu0 %v2264
    %3262 = vmatpush.bf16.msra.mxu0 %v2260
    %3263 = vmatpush.bf16.msra.mxu0 %v2256
    %3264 = vmatpush.bf16.msra.mxu0 %v2252
    %3265 = vmatmul.bf16.gmra.mxu0 %v147
    %v3266 = vpop.f32.mrf.mxu0
    %v3267 = vadd.f32 %v3254, %v3266
    %v3268 = vpop.f32.mrf.mxu0
    %3269 = vdwg.mxu0
    %3270 = vmatpush.bf16.msra.mxu0 %v2312
    %3271 = vmatpush.bf16.msra.mxu0 %v2308
    %3272 = vmatpush.bf16.msra.mxu0 %v2304
    %3273 = vmatpush.bf16.msra.mxu0 %v2300
    %3274 = vmatpush.bf16.msra.mxu0 %v2296
    %3275 = vmatpush.bf16.msra.mxu0 %v2292
    %3276 = vmatpush.bf16.msra.mxu0 %v2288
    %3277 = vmatpush.bf16.msra.mxu0 %v2284
    %3278 = vmatmul.bf16.gmra.mxu0 %v148
    %v3279 = vpop.f32.mrf.mxu0
    %v3280 = vadd.f32 %v3267, %v3279
    %v3281 = vpop.f32.mrf.mxu0
    %3282 = vdwg.mxu0
    %3283 = vmatpush.bf16.msra.mxu0 %v2344
    %3284 = vmatpush.bf16.msra.mxu0 %v2340
    %3285 = vmatpush.bf16.msra.mxu0 %v2336
    %3286 = vmatpush.bf16.msra.mxu0 %v2332
    %3287 = vmatpush.bf16.msra.mxu0 %v2328
    %3288 = vmatpush.bf16.msra.mxu0 %v2324
    %3289 = vmatpush.bf16.msra.mxu0 %v2320
    %3290 = vmatpush.bf16.msra.mxu0 %v2316
    %3291 = vmatmul.bf16.gmra.mxu0 %v149
    %v3292 = vpop.f32.mrf.mxu0
    %v3293 = vadd.f32 %v3280, %v3292
    %v3294 = vpop.f32.mrf.mxu0
    %3295 = vdwg.mxu0
    %3296 = vmatpush.bf16.msra.mxu0 %v2376
    %3297 = vmatpush.bf16.msra.mxu0 %v2372
    %3298 = vmatpush.bf16.msra.mxu0 %v2368
    %3299 = vmatpush.bf16.msra.mxu0 %v2364
    %3300 = vmatpush.bf16.msra.mxu0 %v2360
    %3301 = vmatpush.bf16.msra.mxu0 %v2356
    %3302 = vmatpush.bf16.msra.mxu0 %v2352
    %3303 = vmatpush.bf16.msra.mxu0 %v2348
    %3304 = vmatmul.bf16.gmra.mxu0 %v150
    %v3305 = vpop.f32.mrf.mxu0
    %v3306 = vadd.f32 %v3293, %v3305
    %v3307 = vpop.f32.mrf.mxu0
    %3308 = vdwg.mxu0
    %3309 = vmatpush.bf16.msra.mxu0 %v2408
    %3310 = vmatpush.bf16.msra.mxu0 %v2404
    %3311 = vmatpush.bf16.msra.mxu0 %v2400
    %3312 = vmatpush.bf16.msra.mxu0 %v2396
    %3313 = vmatpush.bf16.msra.mxu0 %v2392
    %3314 = vmatpush.bf16.msra.mxu0 %v2388
    %3315 = vmatpush.bf16.msra.mxu0 %v2384
    %3316 = vmatpush.bf16.msra.mxu0 %v2380
    %3317 = vmatmul.bf16.gmra.mxu0 %v151
    %v3318 = vpop.f32.mrf.mxu0
    %v3319 = vadd.f32 %v3306, %v3318
    %v3320 = vpop.f32.mrf.mxu0
    %3321 = vdwg.mxu0
    %3322 = vmatpush.bf16.msra.mxu0 %v2440
    %3323 = vmatpush.bf16.msra.mxu0 %v2436
    %3324 = vmatpush.bf16.msra.mxu0 %v2432
    %3325 = vmatpush.bf16.msra.mxu0 %v2428
    %3326 = vmatpush.bf16.msra.mxu0 %v2424
    %3327 = vmatpush.bf16.msra.mxu0 %v2420
    %3328 = vmatpush.bf16.msra.mxu0 %v2416
    %3329 = vmatpush.bf16.msra.mxu0 %v2412
    %3330 = vmatmul.bf16.gmra.mxu0 %v152
    %v3331 = vpop.f32.mrf.mxu0
    %v3332 = vadd.f32 %v3319, %v3331
    %v3333 = vpop.f32.mrf.mxu0
    %3334 = vdwg.mxu0
    %3335 = vmatpush.bf16.msra.mxu0 %v2472
    %3336 = vmatpush.bf16.msra.mxu0 %v2468
    %3337 = vmatpush.bf16.msra.mxu0 %v2464
    %3338 = vmatpush.bf16.msra.mxu0 %v2460
    %3339 = vmatpush.bf16.msra.mxu0 %v2456
    %3340 = vmatpush.bf16.msra.mxu0 %v2452
    %3341 = vmatpush.bf16.msra.mxu0 %v2448
    %3342 = vmatpush.bf16.msra.mxu0 %v2444
    %3343 = vmatmul.bf16.gmra.mxu0 %v153
    %v3344 = vpop.f32.mrf.mxu0
    %v3345 = vadd.f32 %v3332, %v3344
    %v3346 = vpop.f32.mrf.mxu0
    %3347 = vdwg.mxu0
    %3348 = vmatpush.bf16.msra.mxu0 %v2504
    %3349 = vmatpush.bf16.msra.mxu0 %v2500
    %3350 = vmatpush.bf16.msra.mxu0 %v2496
    %3351 = vmatpush.bf16.msra.mxu0 %v2492
    %3352 = vmatpush.bf16.msra.mxu0 %v2488
    %3353 = vmatpush.bf16.msra.mxu0 %v2484
    %3354 = vmatpush.bf16.msra.mxu0 %v2480
    %3355 = vmatpush.bf16.msra.mxu0 %v2476
    %3356 = vmatmul.bf16.gmra.mxu0 %v154
    %v3357 = vpop.f32.mrf.mxu0
    %v3358 = vadd.f32 %v3345, %v3357
    %v3359 = vpop.f32.mrf.mxu0
    %3360 = vdwg.mxu0
    %3361 = vmatpush.bf16.msra.mxu0 %v2536
    %3362 = vmatpush.bf16.msra.mxu0 %v2532
    %3363 = vmatpush.bf16.msra.mxu0 %v2528
    %3364 = vmatpush.bf16.msra.mxu0 %v2524
    %3365 = vmatpush.bf16.msra.mxu0 %v2520
    %3366 = vmatpush.bf16.msra.mxu0 %v2516
    %3367 = vmatpush.bf16.msra.mxu0 %v2512
    %3368 = vmatpush.bf16.msra.mxu0 %v2508
    %3369 = vmatmul.bf16.gmra.mxu0 %v155
    %v3370 = vpop.f32.mrf.mxu0
    %v3371 = vadd.f32 %v3358, %v3370
    %v3372 = vpop.f32.mrf.mxu0
    %3373 = vdwg.mxu0
    %3374 = vmatpush.bf16.msra.mxu0 %v2568
    %3375 = vmatpush.bf16.msra.mxu0 %v2564
    %3376 = vmatpush.bf16.msra.mxu0 %v2560
    %3377 = vmatpush.bf16.msra.mxu0 %v2556
    %3378 = vmatpush.bf16.msra.mxu0 %v2552
    %3379 = vmatpush.bf16.msra.mxu0 %v2548
    %3380 = vmatpush.bf16.msra.mxu0 %v2544
    %3381 = vmatpush.bf16.msra.mxu0 %v2540
    %3382 = vmatmul.bf16.gmra.mxu0 %v156
    %v3383 = vpop.f32.mrf.mxu0
    %v3384 = vadd.f32 %v3371, %v3383
    %v3385 = vpop.f32.mrf.mxu0
    %3386 = vdwg.mxu0
    %3387 = vmatpush.bf16.msra.mxu0 %v2600
    %3388 = vmatpush.bf16.msra.mxu0 %v2596
    %3389 = vmatpush.bf16.msra.mxu0 %v2592
    %3390 = vmatpush.bf16.msra.mxu0 %v2588
    %3391 = vmatpush.bf16.msra.mxu0 %v2584
    %3392 = vmatpush.bf16.msra.mxu0 %v2580
    %3393 = vmatpush.bf16.msra.mxu0 %v2576
    %3394 = vmatpush.bf16.msra.mxu0 %v2572
    %3395 = vmatmul.bf16.gmra.mxu0 %v157
    %v3396 = vpop.f32.mrf.mxu0
    %v3397 = vadd.f32 %v3384, %v3396
    %v3398 = vpop.f32.mrf.mxu0
    %3399 = vdwg.mxu0
    %3400 = vmatpush.bf16.msra.mxu0 %v2632
    %3401 = vmatpush.bf16.msra.mxu0 %v2628
    %3402 = vmatpush.bf16.msra.mxu0 %v2624
    %3403 = vmatpush.bf16.msra.mxu0 %v2620
    %3404 = vmatpush.bf16.msra.mxu0 %v2616
    %3405 = vmatpush.bf16.msra.mxu0 %v2612
    %3406 = vmatpush.bf16.msra.mxu0 %v2608
    %3407 = vmatpush.bf16.msra.mxu0 %v2604
    %3408 = vmatmul.bf16.gmra.mxu0 %v158
    %v3409 = vpop.f32.mrf.mxu0
    %v3410 = vadd.f32 %v3397, %v3409
    %v3411 = vpop.f32.mrf.mxu0
    %3412 = vdwg.mxu0
    %3413 = vmatpush.bf16.msra.mxu0 %v2664
    %3414 = vmatpush.bf16.msra.mxu0 %v2660
    %3415 = vmatpush.bf16.msra.mxu0 %v2656
    %3416 = vmatpush.bf16.msra.mxu0 %v2652
    %3417 = vmatpush.bf16.msra.mxu0 %v2648
    %3418 = vmatpush.bf16.msra.mxu0 %v2644
    %3419 = vmatpush.bf16.msra.mxu0 %v2640
    %3420 = vmatpush.bf16.msra.mxu0 %v2636
    %3421 = vmatmul.bf16.gmra.mxu0 %v159
    %v3422 = vpop.f32.mrf.mxu0
    %v3423 = vadd.f32 %v3410, %v3422
    %v3424 = vpop.f32.mrf.mxu0
    %3425 = vdwg.mxu0
    %3426 = vmatpush.bf16.msra.mxu0 %v2696
    %3427 = vmatpush.bf16.msra.mxu0 %v2692
    %3428 = vmatpush.bf16.msra.mxu0 %v2688
    %3429 = vmatpush.bf16.msra.mxu0 %v2684
    %3430 = vmatpush.bf16.msra.mxu0 %v2680
    %3431 = vmatpush.bf16.msra.mxu0 %v2676
    %3432 = vmatpush.bf16.msra.mxu0 %v2672
    %3433 = vmatpush.bf16.msra.mxu0 %v2668
    %3434 = vmatmul.bf16.gmra.mxu0 %v160
    %v3435 = vpop.f32.mrf.mxu0
    %v3436 = vadd.f32 %v3423, %v3435
    %v3437 = vpop.f32.mrf.mxu0
    %3438 = vdwg.mxu0
    %3439 = vmatpush.bf16.msra.mxu0 %v2728
    %3440 = vmatpush.bf16.msra.mxu0 %v2724
    %3441 = vmatpush.bf16.msra.mxu0 %v2720
    %3442 = vmatpush.bf16.msra.mxu0 %v2716
    %3443 = vmatpush.bf16.msra.mxu0 %v2712
    %3444 = vmatpush.bf16.msra.mxu0 %v2708
    %3445 = vmatpush.bf16.msra.mxu0 %v2704
    %3446 = vmatpush.bf16.msra.mxu0 %v2700
    %3447 = vmatmul.bf16.gmra.mxu0 %v161
    %v3448 = vpop.f32.mrf.mxu0
    %v3449 = vadd.f32 %v3436, %v3448
    %v3450 = vpop.f32.mrf.mxu0
    %3451 = vdwg.mxu0
    %3452 = vmatpush.bf16.msra.mxu0 %v2249
    %3453 = vmatpush.bf16.msra.mxu0 %v2245
    %3454 = vmatpush.bf16.msra.mxu0 %v2241
    %3455 = vmatpush.bf16.msra.mxu0 %v2237
    %3456 = vmatpush.bf16.msra.mxu0 %v2233
    %3457 = vmatpush.bf16.msra.mxu0 %v2229
    %3458 = vmatpush.bf16.msra.mxu0 %v2225
    %3459 = vmatpush.bf16.msra.mxu0 %v2221
    %3460 = vmatmul.bf16.gmra.mxu0 %v146
    %v3461 = vpop.f32.mrf.mxu0
    %v3462 = vadd.f32 %v677, %v3461
    %v3463 = vpop.f32.mrf.mxu0
    %3464 = vdwg.mxu0
    %3465 = vmatpush.bf16.msra.mxu0 %v2281
    %3466 = vmatpush.bf16.msra.mxu0 %v2277
    %3467 = vmatpush.bf16.msra.mxu0 %v2273
    %3468 = vmatpush.bf16.msra.mxu0 %v2269
    %3469 = vmatpush.bf16.msra.mxu0 %v2265
    %3470 = vmatpush.bf16.msra.mxu0 %v2261
    %3471 = vmatpush.bf16.msra.mxu0 %v2257
    %3472 = vmatpush.bf16.msra.mxu0 %v2253
    %3473 = vmatmul.bf16.gmra.mxu0 %v147
    %v3474 = vpop.f32.mrf.mxu0
    %v3475 = vadd.f32 %v3462, %v3474
    %v3476 = vpop.f32.mrf.mxu0
    %3477 = vdwg.mxu0
    %3478 = vmatpush.bf16.msra.mxu0 %v2313
    %3479 = vmatpush.bf16.msra.mxu0 %v2309
    %3480 = vmatpush.bf16.msra.mxu0 %v2305
    %3481 = vmatpush.bf16.msra.mxu0 %v2301
    %3482 = vmatpush.bf16.msra.mxu0 %v2297
    %3483 = vmatpush.bf16.msra.mxu0 %v2293
    %3484 = vmatpush.bf16.msra.mxu0 %v2289
    %3485 = vmatpush.bf16.msra.mxu0 %v2285
    %3486 = vmatmul.bf16.gmra.mxu0 %v148
    %v3487 = vpop.f32.mrf.mxu0
    %v3488 = vadd.f32 %v3475, %v3487
    %v3489 = vpop.f32.mrf.mxu0
    %3490 = vdwg.mxu0
    %3491 = vmatpush.bf16.msra.mxu0 %v2345
    %3492 = vmatpush.bf16.msra.mxu0 %v2341
    %3493 = vmatpush.bf16.msra.mxu0 %v2337
    %3494 = vmatpush.bf16.msra.mxu0 %v2333
    %3495 = vmatpush.bf16.msra.mxu0 %v2329
    %3496 = vmatpush.bf16.msra.mxu0 %v2325
    %3497 = vmatpush.bf16.msra.mxu0 %v2321
    %3498 = vmatpush.bf16.msra.mxu0 %v2317
    %3499 = vmatmul.bf16.gmra.mxu0 %v149
    %v3500 = vpop.f32.mrf.mxu0
    %v3501 = vadd.f32 %v3488, %v3500
    %v3502 = vpop.f32.mrf.mxu0
    %3503 = vdwg.mxu0
    %3504 = vmatpush.bf16.msra.mxu0 %v2377
    %3505 = vmatpush.bf16.msra.mxu0 %v2373
    %3506 = vmatpush.bf16.msra.mxu0 %v2369
    %3507 = vmatpush.bf16.msra.mxu0 %v2365
    %3508 = vmatpush.bf16.msra.mxu0 %v2361
    %3509 = vmatpush.bf16.msra.mxu0 %v2357
    %3510 = vmatpush.bf16.msra.mxu0 %v2353
    %3511 = vmatpush.bf16.msra.mxu0 %v2349
    %3512 = vmatmul.bf16.gmra.mxu0 %v150
    %v3513 = vpop.f32.mrf.mxu0
    %v3514 = vadd.f32 %v3501, %v3513
    %v3515 = vpop.f32.mrf.mxu0
    %3516 = vdwg.mxu0
    %3517 = vmatpush.bf16.msra.mxu0 %v2409
    %3518 = vmatpush.bf16.msra.mxu0 %v2405
    %3519 = vmatpush.bf16.msra.mxu0 %v2401
    %3520 = vmatpush.bf16.msra.mxu0 %v2397
    %3521 = vmatpush.bf16.msra.mxu0 %v2393
    %3522 = vmatpush.bf16.msra.mxu0 %v2389
    %3523 = vmatpush.bf16.msra.mxu0 %v2385
    %3524 = vmatpush.bf16.msra.mxu0 %v2381
    %3525 = vmatmul.bf16.gmra.mxu0 %v151
    %v3526 = vpop.f32.mrf.mxu0
    %v3527 = vadd.f32 %v3514, %v3526
    %v3528 = vpop.f32.mrf.mxu0
    %3529 = vdwg.mxu0
    %3530 = vmatpush.bf16.msra.mxu0 %v2441
    %3531 = vmatpush.bf16.msra.mxu0 %v2437
    %3532 = vmatpush.bf16.msra.mxu0 %v2433
    %3533 = vmatpush.bf16.msra.mxu0 %v2429
    %3534 = vmatpush.bf16.msra.mxu0 %v2425
    %3535 = vmatpush.bf16.msra.mxu0 %v2421
    %3536 = vmatpush.bf16.msra.mxu0 %v2417
    %3537 = vmatpush.bf16.msra.mxu0 %v2413
    %3538 = vmatmul.bf16.gmra.mxu0 %v152
    %v3539 = vpop.f32.mrf.mxu0
    %v3540 = vadd.f32 %v3527, %v3539
    %v3541 = vpop.f32.mrf.mxu0
    %3542 = vdwg.mxu0
    %3543 = vmatpush.bf16.msra.mxu0 %v2473
    %3544 = vmatpush.bf16.msra.mxu0 %v2469
    %3545 = vmatpush.bf16.msra.mxu0 %v2465
    %3546 = vmatpush.bf16.msra.mxu0 %v2461
    %3547 = vmatpush.bf16.msra.mxu0 %v2457
    %3548 = vmatpush.bf16.msra.mxu0 %v2453
    %3549 = vmatpush.bf16.msra.mxu0 %v2449
    %3550 = vmatpush.bf16.msra.mxu0 %v2445
    %3551 = vmatmul.bf16.gmra.mxu0 %v153
    %v3552 = vpop.f32.mrf.mxu0
    %v3553 = vadd.f32 %v3540, %v3552
    %v3554 = vpop.f32.mrf.mxu0
    %3555 = vdwg.mxu0
    %3556 = vmatpush.bf16.msra.mxu0 %v2505
    %3557 = vmatpush.bf16.msra.mxu0 %v2501
    %3558 = vmatpush.bf16.msra.mxu0 %v2497
    %3559 = vmatpush.bf16.msra.mxu0 %v2493
    %3560 = vmatpush.bf16.msra.mxu0 %v2489
    %3561 = vmatpush.bf16.msra.mxu0 %v2485
    %3562 = vmatpush.bf16.msra.mxu0 %v2481
    %3563 = vmatpush.bf16.msra.mxu0 %v2477
    %3564 = vmatmul.bf16.gmra.mxu0 %v154
    %v3565 = vpop.f32.mrf.mxu0
    %v3566 = vadd.f32 %v3553, %v3565
    %v3567 = vpop.f32.mrf.mxu0
    %3568 = vdwg.mxu0
    %3569 = vmatpush.bf16.msra.mxu0 %v2537
    %3570 = vmatpush.bf16.msra.mxu0 %v2533
    %3571 = vmatpush.bf16.msra.mxu0 %v2529
    %3572 = vmatpush.bf16.msra.mxu0 %v2525
    %3573 = vmatpush.bf16.msra.mxu0 %v2521
    %3574 = vmatpush.bf16.msra.mxu0 %v2517
    %3575 = vmatpush.bf16.msra.mxu0 %v2513
    %3576 = vmatpush.bf16.msra.mxu0 %v2509
    %3577 = vmatmul.bf16.gmra.mxu0 %v155
    %v3578 = vpop.f32.mrf.mxu0
    %v3579 = vadd.f32 %v3566, %v3578
    %v3580 = vpop.f32.mrf.mxu0
    %3581 = vdwg.mxu0
    %3582 = vmatpush.bf16.msra.mxu0 %v2569
    %3583 = vmatpush.bf16.msra.mxu0 %v2565
    %3584 = vmatpush.bf16.msra.mxu0 %v2561
    %3585 = vmatpush.bf16.msra.mxu0 %v2557
    %3586 = vmatpush.bf16.msra.mxu0 %v2553
    %3587 = vmatpush.bf16.msra.mxu0 %v2549
    %3588 = vmatpush.bf16.msra.mxu0 %v2545
    %3589 = vmatpush.bf16.msra.mxu0 %v2541
    %3590 = vmatmul.bf16.gmra.mxu0 %v156
    %v3591 = vpop.f32.mrf.mxu0
    %v3592 = vadd.f32 %v3579, %v3591
    %v3593 = vpop.f32.mrf.mxu0
    %3594 = vdwg.mxu0
    %3595 = vmatpush.bf16.msra.mxu0 %v2601
    %3596 = vmatpush.bf16.msra.mxu0 %v2597
    %3597 = vmatpush.bf16.msra.mxu0 %v2593
    %3598 = vmatpush.bf16.msra.mxu0 %v2589
    %3599 = vmatpush.bf16.msra.mxu0 %v2585
    %3600 = vmatpush.bf16.msra.mxu0 %v2581
    %3601 = vmatpush.bf16.msra.mxu0 %v2577
    %3602 = vmatpush.bf16.msra.mxu0 %v2573
    %3603 = vmatmul.bf16.gmra.mxu0 %v157
    %v3604 = vpop.f32.mrf.mxu0
    %v3605 = vadd.f32 %v3592, %v3604
    %v3606 = vpop.f32.mrf.mxu0
    %3607 = vdwg.mxu0
    %3608 = vmatpush.bf16.msra.mxu0 %v2633
    %3609 = vmatpush.bf16.msra.mxu0 %v2629
    %3610 = vmatpush.bf16.msra.mxu0 %v2625
    %3611 = vmatpush.bf16.msra.mxu0 %v2621
    %3612 = vmatpush.bf16.msra.mxu0 %v2617
    %3613 = vmatpush.bf16.msra.mxu0 %v2613
    %3614 = vmatpush.bf16.msra.mxu0 %v2609
    %3615 = vmatpush.bf16.msra.mxu0 %v2605
    %3616 = vmatmul.bf16.gmra.mxu0 %v158
    %v3617 = vpop.f32.mrf.mxu0
    %v3618 = vadd.f32 %v3605, %v3617
    %v3619 = vpop.f32.mrf.mxu0
    %3620 = vdwg.mxu0
    %3621 = vmatpush.bf16.msra.mxu0 %v2665
    %3622 = vmatpush.bf16.msra.mxu0 %v2661
    %3623 = vmatpush.bf16.msra.mxu0 %v2657
    %3624 = vmatpush.bf16.msra.mxu0 %v2653
    %3625 = vmatpush.bf16.msra.mxu0 %v2649
    %3626 = vmatpush.bf16.msra.mxu0 %v2645
    %3627 = vmatpush.bf16.msra.mxu0 %v2641
    %3628 = vmatpush.bf16.msra.mxu0 %v2637
    %3629 = vmatmul.bf16.gmra.mxu0 %v159
    %v3630 = vpop.f32.mrf.mxu0
    %v3631 = vadd.f32 %v3618, %v3630
    %v3632 = vpop.f32.mrf.mxu0
    %3633 = vdwg.mxu0
    %3634 = vmatpush.bf16.msra.mxu0 %v2697
    %3635 = vmatpush.bf16.msra.mxu0 %v2693
    %3636 = vmatpush.bf16.msra.mxu0 %v2689
    %3637 = vmatpush.bf16.msra.mxu0 %v2685
    %3638 = vmatpush.bf16.msra.mxu0 %v2681
    %3639 = vmatpush.bf16.msra.mxu0 %v2677
    %3640 = vmatpush.bf16.msra.mxu0 %v2673
    %3641 = vmatpush.bf16.msra.mxu0 %v2669
    %3642 = vmatmul.bf16.gmra.mxu0 %v160
    %v3643 = vpop.f32.mrf.mxu0
    %v3644 = vadd.f32 %v3631, %v3643
    %v3645 = vpop.f32.mrf.mxu0
    %3646 = vdwg.mxu0
    %3647 = vmatpush.bf16.msra.mxu0 %v2729
    %3648 = vmatpush.bf16.msra.mxu0 %v2725
    %3649 = vmatpush.bf16.msra.mxu0 %v2721
    %3650 = vmatpush.bf16.msra.mxu0 %v2717
    %3651 = vmatpush.bf16.msra.mxu0 %v2713
    %3652 = vmatpush.bf16.msra.mxu0 %v2709
    %3653 = vmatpush.bf16.msra.mxu0 %v2705
    %3654 = vmatpush.bf16.msra.mxu0 %v2701
    %3655 = vmatmul.bf16.gmra.mxu0 %v161
    %v3656 = vpop.f32.mrf.mxu0
    %v3657 = vadd.f32 %v3644, %v3656
    %v3658 = vpop.f32.mrf.mxu0
    %3659 = vdwg.mxu0
    %3660 = vmatpush.bf16.msra.mxu0 %v2250
    %3661 = vmatpush.bf16.msra.mxu0 %v2246
    %3662 = vmatpush.bf16.msra.mxu0 %v2242
    %3663 = vmatpush.bf16.msra.mxu0 %v2238
    %3664 = vmatpush.bf16.msra.mxu0 %v2234
    %3665 = vmatpush.bf16.msra.mxu0 %v2230
    %3666 = vmatpush.bf16.msra.mxu0 %v2226
    %3667 = vmatpush.bf16.msra.mxu0 %v2222
    %3668 = vmatmul.bf16.gmra.mxu0 %v146
    %v3669 = vpop.f32.mrf.mxu0
    %v3670 = vadd.f32 %v678, %v3669
    %v3671 = vpop.f32.mrf.mxu0
    %3672 = vdwg.mxu0
    %3673 = vmatpush.bf16.msra.mxu0 %v2282
    %3674 = vmatpush.bf16.msra.mxu0 %v2278
    %3675 = vmatpush.bf16.msra.mxu0 %v2274
    %3676 = vmatpush.bf16.msra.mxu0 %v2270
    %3677 = vmatpush.bf16.msra.mxu0 %v2266
    %3678 = vmatpush.bf16.msra.mxu0 %v2262
    %3679 = vmatpush.bf16.msra.mxu0 %v2258
    %3680 = vmatpush.bf16.msra.mxu0 %v2254
    %3681 = vmatmul.bf16.gmra.mxu0 %v147
    %v3682 = vpop.f32.mrf.mxu0
    %v3683 = vadd.f32 %v3670, %v3682
    %v3684 = vpop.f32.mrf.mxu0
    %3685 = vdwg.mxu0
    %3686 = vmatpush.bf16.msra.mxu0 %v2314
    %3687 = vmatpush.bf16.msra.mxu0 %v2310
    %3688 = vmatpush.bf16.msra.mxu0 %v2306
    %3689 = vmatpush.bf16.msra.mxu0 %v2302
    %3690 = vmatpush.bf16.msra.mxu0 %v2298
    %3691 = vmatpush.bf16.msra.mxu0 %v2294
    %3692 = vmatpush.bf16.msra.mxu0 %v2290
    %3693 = vmatpush.bf16.msra.mxu0 %v2286
    %3694 = vmatmul.bf16.gmra.mxu0 %v148
    %v3695 = vpop.f32.mrf.mxu0
    %v3696 = vadd.f32 %v3683, %v3695
    %v3697 = vpop.f32.mrf.mxu0
    %3698 = vdwg.mxu0
    %3699 = vmatpush.bf16.msra.mxu0 %v2346
    %3700 = vmatpush.bf16.msra.mxu0 %v2342
    %3701 = vmatpush.bf16.msra.mxu0 %v2338
    %3702 = vmatpush.bf16.msra.mxu0 %v2334
    %3703 = vmatpush.bf16.msra.mxu0 %v2330
    %3704 = vmatpush.bf16.msra.mxu0 %v2326
    %3705 = vmatpush.bf16.msra.mxu0 %v2322
    %3706 = vmatpush.bf16.msra.mxu0 %v2318
    %3707 = vmatmul.bf16.gmra.mxu0 %v149
    %v3708 = vpop.f32.mrf.mxu0
    %v3709 = vadd.f32 %v3696, %v3708
    %v3710 = vpop.f32.mrf.mxu0
    %3711 = vdwg.mxu0
    %3712 = vmatpush.bf16.msra.mxu0 %v2378
    %3713 = vmatpush.bf16.msra.mxu0 %v2374
    %3714 = vmatpush.bf16.msra.mxu0 %v2370
    %3715 = vmatpush.bf16.msra.mxu0 %v2366
    %3716 = vmatpush.bf16.msra.mxu0 %v2362
    %3717 = vmatpush.bf16.msra.mxu0 %v2358
    %3718 = vmatpush.bf16.msra.mxu0 %v2354
    %3719 = vmatpush.bf16.msra.mxu0 %v2350
    %3720 = vmatmul.bf16.gmra.mxu0 %v150
    %v3721 = vpop.f32.mrf.mxu0
    %v3722 = vadd.f32 %v3709, %v3721
    %v3723 = vpop.f32.mrf.mxu0
    %3724 = vdwg.mxu0
    %3725 = vmatpush.bf16.msra.mxu0 %v2410
    %3726 = vmatpush.bf16.msra.mxu0 %v2406
    %3727 = vmatpush.bf16.msra.mxu0 %v2402
    %3728 = vmatpush.bf16.msra.mxu0 %v2398
    %3729 = vmatpush.bf16.msra.mxu0 %v2394
    %3730 = vmatpush.bf16.msra.mxu0 %v2390
    %3731 = vmatpush.bf16.msra.mxu0 %v2386
    %3732 = vmatpush.bf16.msra.mxu0 %v2382
    %3733 = vmatmul.bf16.gmra.mxu0 %v151
    %v3734 = vpop.f32.mrf.mxu0
    %v3735 = vadd.f32 %v3722, %v3734
    %v3736 = vpop.f32.mrf.mxu0
    %3737 = vdwg.mxu0
    %3738 = vmatpush.bf16.msra.mxu0 %v2442
    %3739 = vmatpush.bf16.msra.mxu0 %v2438
    %3740 = vmatpush.bf16.msra.mxu0 %v2434
    %3741 = vmatpush.bf16.msra.mxu0 %v2430
    %3742 = vmatpush.bf16.msra.mxu0 %v2426
    %3743 = vmatpush.bf16.msra.mxu0 %v2422
    %3744 = vmatpush.bf16.msra.mxu0 %v2418
    %3745 = vmatpush.bf16.msra.mxu0 %v2414
    %3746 = vmatmul.bf16.gmra.mxu0 %v152
    %v3747 = vpop.f32.mrf.mxu0
    %v3748 = vadd.f32 %v3735, %v3747
    %v3749 = vpop.f32.mrf.mxu0
    %3750 = vdwg.mxu0
    %3751 = vmatpush.bf16.msra.mxu0 %v2474
    %3752 = vmatpush.bf16.msra.mxu0 %v2470
    %3753 = vmatpush.bf16.msra.mxu0 %v2466
    %3754 = vmatpush.bf16.msra.mxu0 %v2462
    %3755 = vmatpush.bf16.msra.mxu0 %v2458
    %3756 = vmatpush.bf16.msra.mxu0 %v2454
    %3757 = vmatpush.bf16.msra.mxu0 %v2450
    %3758 = vmatpush.bf16.msra.mxu0 %v2446
    %3759 = vmatmul.bf16.gmra.mxu0 %v153
    %v3760 = vpop.f32.mrf.mxu0
    %v3761 = vadd.f32 %v3748, %v3760
    %v3762 = vpop.f32.mrf.mxu0
    %3763 = vdwg.mxu0
    %3764 = vmatpush.bf16.msra.mxu0 %v2506
    %3765 = vmatpush.bf16.msra.mxu0 %v2502
    %3766 = vmatpush.bf16.msra.mxu0 %v2498
    %3767 = vmatpush.bf16.msra.mxu0 %v2494
    %3768 = vmatpush.bf16.msra.mxu0 %v2490
    %3769 = vmatpush.bf16.msra.mxu0 %v2486
    %3770 = vmatpush.bf16.msra.mxu0 %v2482
    %3771 = vmatpush.bf16.msra.mxu0 %v2478
    %3772 = vmatmul.bf16.gmra.mxu0 %v154
    %v3773 = vpop.f32.mrf.mxu0
    %v3774 = vadd.f32 %v3761, %v3773
    %v3775 = vpop.f32.mrf.mxu0
    %3776 = vdwg.mxu0
    %3777 = vmatpush.bf16.msra.mxu0 %v2538
    %3778 = vmatpush.bf16.msra.mxu0 %v2534
    %3779 = vmatpush.bf16.msra.mxu0 %v2530
    %3780 = vmatpush.bf16.msra.mxu0 %v2526
    %3781 = vmatpush.bf16.msra.mxu0 %v2522
    %3782 = vmatpush.bf16.msra.mxu0 %v2518
    %3783 = vmatpush.bf16.msra.mxu0 %v2514
    %3784 = vmatpush.bf16.msra.mxu0 %v2510
    %3785 = vmatmul.bf16.gmra.mxu0 %v155
    %v3786 = vpop.f32.mrf.mxu0
    %v3787 = vadd.f32 %v3774, %v3786
    %v3788 = vpop.f32.mrf.mxu0
    %3789 = vdwg.mxu0
    %3790 = vmatpush.bf16.msra.mxu0 %v2570
    %3791 = vmatpush.bf16.msra.mxu0 %v2566
    %3792 = vmatpush.bf16.msra.mxu0 %v2562
    %3793 = vmatpush.bf16.msra.mxu0 %v2558
    %3794 = vmatpush.bf16.msra.mxu0 %v2554
    %3795 = vmatpush.bf16.msra.mxu0 %v2550
    %3796 = vmatpush.bf16.msra.mxu0 %v2546
    %3797 = vmatpush.bf16.msra.mxu0 %v2542
    %3798 = vmatmul.bf16.gmra.mxu0 %v156
    %v3799 = vpop.f32.mrf.mxu0
    %v3800 = vadd.f32 %v3787, %v3799
    %v3801 = vpop.f32.mrf.mxu0
    %3802 = vdwg.mxu0
    %3803 = vmatpush.bf16.msra.mxu0 %v2602
    %3804 = vmatpush.bf16.msra.mxu0 %v2598
    %3805 = vmatpush.bf16.msra.mxu0 %v2594
    %3806 = vmatpush.bf16.msra.mxu0 %v2590
    %3807 = vmatpush.bf16.msra.mxu0 %v2586
    %3808 = vmatpush.bf16.msra.mxu0 %v2582
    %3809 = vmatpush.bf16.msra.mxu0 %v2578
    %3810 = vmatpush.bf16.msra.mxu0 %v2574
    %3811 = vmatmul.bf16.gmra.mxu0 %v157
    %v3812 = vpop.f32.mrf.mxu0
    %v3813 = vadd.f32 %v3800, %v3812
    %v3814 = vpop.f32.mrf.mxu0
    %3815 = vdwg.mxu0
    %3816 = vmatpush.bf16.msra.mxu0 %v2634
    %3817 = vmatpush.bf16.msra.mxu0 %v2630
    %3818 = vmatpush.bf16.msra.mxu0 %v2626
    %3819 = vmatpush.bf16.msra.mxu0 %v2622
    %3820 = vmatpush.bf16.msra.mxu0 %v2618
    %3821 = vmatpush.bf16.msra.mxu0 %v2614
    %3822 = vmatpush.bf16.msra.mxu0 %v2610
    %3823 = vmatpush.bf16.msra.mxu0 %v2606
    %3824 = vmatmul.bf16.gmra.mxu0 %v158
    %v3825 = vpop.f32.mrf.mxu0
    %v3826 = vadd.f32 %v3813, %v3825
    %v3827 = vpop.f32.mrf.mxu0
    %3828 = vdwg.mxu0
    %3829 = vmatpush.bf16.msra.mxu0 %v2666
    %3830 = vmatpush.bf16.msra.mxu0 %v2662
    %3831 = vmatpush.bf16.msra.mxu0 %v2658
    %3832 = vmatpush.bf16.msra.mxu0 %v2654
    %3833 = vmatpush.bf16.msra.mxu0 %v2650
    %3834 = vmatpush.bf16.msra.mxu0 %v2646
    %3835 = vmatpush.bf16.msra.mxu0 %v2642
    %3836 = vmatpush.bf16.msra.mxu0 %v2638
    %3837 = vmatmul.bf16.gmra.mxu0 %v159
    %v3838 = vpop.f32.mrf.mxu0
    %v3839 = vadd.f32 %v3826, %v3838
    %v3840 = vpop.f32.mrf.mxu0
    %3841 = vdwg.mxu0
    %3842 = vmatpush.bf16.msra.mxu0 %v2698
    %3843 = vmatpush.bf16.msra.mxu0 %v2694
    %3844 = vmatpush.bf16.msra.mxu0 %v2690
    %3845 = vmatpush.bf16.msra.mxu0 %v2686
    %3846 = vmatpush.bf16.msra.mxu0 %v2682
    %3847 = vmatpush.bf16.msra.mxu0 %v2678
    %3848 = vmatpush.bf16.msra.mxu0 %v2674
    %3849 = vmatpush.bf16.msra.mxu0 %v2670
    %3850 = vmatmul.bf16.gmra.mxu0 %v160
    %v3851 = vpop.f32.mrf.mxu0
    %v3852 = vadd.f32 %v3839, %v3851
    %v3853 = vpop.f32.mrf.mxu0
    %3854 = vdwg.mxu0
    %3855 = vmatpush.bf16.msra.mxu0 %v2730
    %3856 = vmatpush.bf16.msra.mxu0 %v2726
    %3857 = vmatpush.bf16.msra.mxu0 %v2722
    %3858 = vmatpush.bf16.msra.mxu0 %v2718
    %3859 = vmatpush.bf16.msra.mxu0 %v2714
    %3860 = vmatpush.bf16.msra.mxu0 %v2710
    %3861 = vmatpush.bf16.msra.mxu0 %v2706
    %3862 = vmatpush.bf16.msra.mxu0 %v2702
    %3863 = vmatmul.bf16.gmra.mxu0 %v161
    %v3864 = vpop.f32.mrf.mxu0
    %v3865 = vadd.f32 %v3852, %v3864
    %v3866 = vpop.f32.mrf.mxu0
    %3867 = vdwg.mxu0
    %3868 = vmatpush.bf16.msra.mxu0 %v2251
    %3869 = vmatpush.bf16.msra.mxu0 %v2247
    %3870 = vmatpush.bf16.msra.mxu0 %v2243
    %3871 = vmatpush.bf16.msra.mxu0 %v2239
    %3872 = vmatpush.bf16.msra.mxu0 %v2235
    %3873 = vmatpush.bf16.msra.mxu0 %v2231
    %3874 = vmatpush.bf16.msra.mxu0 %v2227
    %3875 = vmatpush.bf16.msra.mxu0 %v2223
    %3876 = vmatmul.bf16.gmra.mxu0 %v146
    %v3877 = vpop.f32.mrf.mxu0
    %v3878 = vadd.f32 %v679, %v3877
    %v3879 = vpop.f32.mrf.mxu0
    %3880 = vdwg.mxu0
    %3881 = vmatpush.bf16.msra.mxu0 %v2283
    %3882 = vmatpush.bf16.msra.mxu0 %v2279
    %3883 = vmatpush.bf16.msra.mxu0 %v2275
    %3884 = vmatpush.bf16.msra.mxu0 %v2271
    %3885 = vmatpush.bf16.msra.mxu0 %v2267
    %3886 = vmatpush.bf16.msra.mxu0 %v2263
    %3887 = vmatpush.bf16.msra.mxu0 %v2259
    %3888 = vmatpush.bf16.msra.mxu0 %v2255
    %3889 = vmatmul.bf16.gmra.mxu0 %v147
    %v3890 = vpop.f32.mrf.mxu0
    %v3891 = vadd.f32 %v3878, %v3890
    %v3892 = vpop.f32.mrf.mxu0
    %3893 = vdwg.mxu0
    %3894 = vmatpush.bf16.msra.mxu0 %v2315
    %3895 = vmatpush.bf16.msra.mxu0 %v2311
    %3896 = vmatpush.bf16.msra.mxu0 %v2307
    %3897 = vmatpush.bf16.msra.mxu0 %v2303
    %3898 = vmatpush.bf16.msra.mxu0 %v2299
    %3899 = vmatpush.bf16.msra.mxu0 %v2295
    %3900 = vmatpush.bf16.msra.mxu0 %v2291
    %3901 = vmatpush.bf16.msra.mxu0 %v2287
    %3902 = vmatmul.bf16.gmra.mxu0 %v148
    %v3903 = vpop.f32.mrf.mxu0
    %v3904 = vadd.f32 %v3891, %v3903
    %v3905 = vpop.f32.mrf.mxu0
    %3906 = vdwg.mxu0
    %3907 = vmatpush.bf16.msra.mxu0 %v2347
    %3908 = vmatpush.bf16.msra.mxu0 %v2343
    %3909 = vmatpush.bf16.msra.mxu0 %v2339
    %3910 = vmatpush.bf16.msra.mxu0 %v2335
    %3911 = vmatpush.bf16.msra.mxu0 %v2331
    %3912 = vmatpush.bf16.msra.mxu0 %v2327
    %3913 = vmatpush.bf16.msra.mxu0 %v2323
    %3914 = vmatpush.bf16.msra.mxu0 %v2319
    %3915 = vmatmul.bf16.gmra.mxu0 %v149
    %v3916 = vpop.f32.mrf.mxu0
    %v3917 = vadd.f32 %v3904, %v3916
    %v3918 = vpop.f32.mrf.mxu0
    %3919 = vdwg.mxu0
    %3920 = vmatpush.bf16.msra.mxu0 %v2379
    %3921 = vmatpush.bf16.msra.mxu0 %v2375
    %3922 = vmatpush.bf16.msra.mxu0 %v2371
    %3923 = vmatpush.bf16.msra.mxu0 %v2367
    %3924 = vmatpush.bf16.msra.mxu0 %v2363
    %3925 = vmatpush.bf16.msra.mxu0 %v2359
    %3926 = vmatpush.bf16.msra.mxu0 %v2355
    %3927 = vmatpush.bf16.msra.mxu0 %v2351
    %3928 = vmatmul.bf16.gmra.mxu0 %v150
    %v3929 = vpop.f32.mrf.mxu0
    %v3930 = vadd.f32 %v3917, %v3929
    %v3931 = vpop.f32.mrf.mxu0
    %3932 = vdwg.mxu0
    %3933 = vmatpush.bf16.msra.mxu0 %v2411
    %3934 = vmatpush.bf16.msra.mxu0 %v2407
    %3935 = vmatpush.bf16.msra.mxu0 %v2403
    %3936 = vmatpush.bf16.msra.mxu0 %v2399
    %3937 = vmatpush.bf16.msra.mxu0 %v2395
    %3938 = vmatpush.bf16.msra.mxu0 %v2391
    %3939 = vmatpush.bf16.msra.mxu0 %v2387
    %3940 = vmatpush.bf16.msra.mxu0 %v2383
    %3941 = vmatmul.bf16.gmra.mxu0 %v151
    %v3942 = vpop.f32.mrf.mxu0
    %v3943 = vadd.f32 %v3930, %v3942
    %v3944 = vpop.f32.mrf.mxu0
    %3945 = vdwg.mxu0
    %3946 = vmatpush.bf16.msra.mxu0 %v2443
    %3947 = vmatpush.bf16.msra.mxu0 %v2439
    %3948 = vmatpush.bf16.msra.mxu0 %v2435
    %3949 = vmatpush.bf16.msra.mxu0 %v2431
    %3950 = vmatpush.bf16.msra.mxu0 %v2427
    %3951 = vmatpush.bf16.msra.mxu0 %v2423
    %3952 = vmatpush.bf16.msra.mxu0 %v2419
    %3953 = vmatpush.bf16.msra.mxu0 %v2415
    %3954 = vmatmul.bf16.gmra.mxu0 %v152
    %v3955 = vpop.f32.mrf.mxu0
    %v3956 = vadd.f32 %v3943, %v3955
    %v3957 = vpop.f32.mrf.mxu0
    %3958 = vdwg.mxu0
    %3959 = vmatpush.bf16.msra.mxu0 %v2475
    %3960 = vmatpush.bf16.msra.mxu0 %v2471
    %3961 = vmatpush.bf16.msra.mxu0 %v2467
    %3962 = vmatpush.bf16.msra.mxu0 %v2463
    %3963 = vmatpush.bf16.msra.mxu0 %v2459
    %3964 = vmatpush.bf16.msra.mxu0 %v2455
    %3965 = vmatpush.bf16.msra.mxu0 %v2451
    %3966 = vmatpush.bf16.msra.mxu0 %v2447
    %3967 = vmatmul.bf16.gmra.mxu0 %v153
    %v3968 = vpop.f32.mrf.mxu0
    %v3969 = vadd.f32 %v3956, %v3968
    %v3970 = vpop.f32.mrf.mxu0
    %3971 = vdwg.mxu0
    %3972 = vmatpush.bf16.msra.mxu0 %v2507
    %3973 = vmatpush.bf16.msra.mxu0 %v2503
    %3974 = vmatpush.bf16.msra.mxu0 %v2499
    %3975 = vmatpush.bf16.msra.mxu0 %v2495
    %3976 = vmatpush.bf16.msra.mxu0 %v2491
    %3977 = vmatpush.bf16.msra.mxu0 %v2487
    %3978 = vmatpush.bf16.msra.mxu0 %v2483
    %3979 = vmatpush.bf16.msra.mxu0 %v2479
    %3980 = vmatmul.bf16.gmra.mxu0 %v154
    %v3981 = vpop.f32.mrf.mxu0
    %v3982 = vadd.f32 %v3969, %v3981
    %v3983 = vpop.f32.mrf.mxu0
    %3984 = vdwg.mxu0
    %3985 = vmatpush.bf16.msra.mxu0 %v2539
    %3986 = vmatpush.bf16.msra.mxu0 %v2535
    %3987 = vmatpush.bf16.msra.mxu0 %v2531
    %3988 = vmatpush.bf16.msra.mxu0 %v2527
    %3989 = vmatpush.bf16.msra.mxu0 %v2523
    %3990 = vmatpush.bf16.msra.mxu0 %v2519
    %3991 = vmatpush.bf16.msra.mxu0 %v2515
    %3992 = vmatpush.bf16.msra.mxu0 %v2511
    %3993 = vmatmul.bf16.gmra.mxu0 %v155
    %v3994 = vpop.f32.mrf.mxu0
    %v3995 = vadd.f32 %v3982, %v3994
    %v3996 = vpop.f32.mrf.mxu0
    %3997 = vdwg.mxu0
    %3998 = vmatpush.bf16.msra.mxu0 %v2571
    %3999 = vmatpush.bf16.msra.mxu0 %v2567
    %4000 = vmatpush.bf16.msra.mxu0 %v2563
    %4001 = vmatpush.bf16.msra.mxu0 %v2559
    %4002 = vmatpush.bf16.msra.mxu0 %v2555
    %4003 = vmatpush.bf16.msra.mxu0 %v2551
    %4004 = vmatpush.bf16.msra.mxu0 %v2547
    %4005 = vmatpush.bf16.msra.mxu0 %v2543
    %4006 = vmatmul.bf16.gmra.mxu0 %v156
    %v4007 = vpop.f32.mrf.mxu0
    %v4008 = vadd.f32 %v3995, %v4007
    %v4009 = vpop.f32.mrf.mxu0
    %4010 = vdwg.mxu0
    %4011 = vmatpush.bf16.msra.mxu0 %v2603
    %4012 = vmatpush.bf16.msra.mxu0 %v2599
    %4013 = vmatpush.bf16.msra.mxu0 %v2595
    %4014 = vmatpush.bf16.msra.mxu0 %v2591
    %4015 = vmatpush.bf16.msra.mxu0 %v2587
    %4016 = vmatpush.bf16.msra.mxu0 %v2583
    %4017 = vmatpush.bf16.msra.mxu0 %v2579
    %4018 = vmatpush.bf16.msra.mxu0 %v2575
    %4019 = vmatmul.bf16.gmra.mxu0 %v157
    %v4020 = vpop.f32.mrf.mxu0
    %v4021 = vadd.f32 %v4008, %v4020
    %v4022 = vpop.f32.mrf.mxu0
    %4023 = vdwg.mxu0
    %4024 = vmatpush.bf16.msra.mxu0 %v2635
    %4025 = vmatpush.bf16.msra.mxu0 %v2631
    %4026 = vmatpush.bf16.msra.mxu0 %v2627
    %4027 = vmatpush.bf16.msra.mxu0 %v2623
    %4028 = vmatpush.bf16.msra.mxu0 %v2619
    %4029 = vmatpush.bf16.msra.mxu0 %v2615
    %4030 = vmatpush.bf16.msra.mxu0 %v2611
    %4031 = vmatpush.bf16.msra.mxu0 %v2607
    %4032 = vmatmul.bf16.gmra.mxu0 %v158
    %v4033 = vpop.f32.mrf.mxu0
    %v4034 = vadd.f32 %v4021, %v4033
    %v4035 = vpop.f32.mrf.mxu0
    %4036 = vdwg.mxu0
    %4037 = vmatpush.bf16.msra.mxu0 %v2667
    %4038 = vmatpush.bf16.msra.mxu0 %v2663
    %4039 = vmatpush.bf16.msra.mxu0 %v2659
    %4040 = vmatpush.bf16.msra.mxu0 %v2655
    %4041 = vmatpush.bf16.msra.mxu0 %v2651
    %4042 = vmatpush.bf16.msra.mxu0 %v2647
    %4043 = vmatpush.bf16.msra.mxu0 %v2643
    %4044 = vmatpush.bf16.msra.mxu0 %v2639
    %4045 = vmatmul.bf16.gmra.mxu0 %v159
    %v4046 = vpop.f32.mrf.mxu0
    %v4047 = vadd.f32 %v4034, %v4046
    %v4048 = vpop.f32.mrf.mxu0
    %4049 = vdwg.mxu0
    %4050 = vmatpush.bf16.msra.mxu0 %v2699
    %4051 = vmatpush.bf16.msra.mxu0 %v2695
    %4052 = vmatpush.bf16.msra.mxu0 %v2691
    %4053 = vmatpush.bf16.msra.mxu0 %v2687
    %4054 = vmatpush.bf16.msra.mxu0 %v2683
    %4055 = vmatpush.bf16.msra.mxu0 %v2679
    %4056 = vmatpush.bf16.msra.mxu0 %v2675
    %4057 = vmatpush.bf16.msra.mxu0 %v2671
    %4058 = vmatmul.bf16.gmra.mxu0 %v160
    %v4059 = vpop.f32.mrf.mxu0
    %v4060 = vadd.f32 %v4047, %v4059
    %v4061 = vpop.f32.mrf.mxu0
    %4062 = vdwg.mxu0
    %4063 = vmatpush.bf16.msra.mxu0 %v2731
    %4064 = vmatpush.bf16.msra.mxu0 %v2727
    %4065 = vmatpush.bf16.msra.mxu0 %v2723
    %4066 = vmatpush.bf16.msra.mxu0 %v2719
    %4067 = vmatpush.bf16.msra.mxu0 %v2715
    %4068 = vmatpush.bf16.msra.mxu0 %v2711
    %4069 = vmatpush.bf16.msra.mxu0 %v2707
    %4070 = vmatpush.bf16.msra.mxu0 %v2703
    %4071 = vmatmul.bf16.gmra.mxu0 %v161
    %v4072 = vpop.f32.mrf.mxu0
    %v4073 = vadd.f32 %v4060, %v4072
    %v4074 = vpop.f32.mrf.mxu0
    %4075 = vdwg.mxu0
    %v4076 = vmax.f32 %v3449, 0.0
    %v4077 = vmax.f32 %v3657, 0.0
    %v4078 = vmax.f32 %v3865, 0.0
    %v4079 = vmax.f32 %v4073, 0.0
    %v4080 = vpack.c.bf16 %v4076, %v4076
    %v4081 = vpack.c.bf16 %v4077, %v4077
    %v4082 = vpack.c.bf16 %v4078, %v4078
    %v4083 = vpack.c.bf16 %v4079, %v4079
    %v4084 = vld [vmem:[#allocation8] sm:$0xff]
    %v4085 = vld [vmem:[#allocation8 + $0x8] sm:$0xff]
    %v4086 = vld [vmem:[#allocation8 + $0x10] sm:$0xff]
    %v4087 = vld [vmem:[#allocation8 + $0x18] sm:$0xff]
    %v4088 = vld [vmem:[#allocation8 + $0x20] sm:$0xff]
    %v4089 = vld [vmem:[#allocation8 + $0x28] sm:$0xff]
    %v4090 = vld [vmem:[#allocation8 + $0x30] sm:$0xff]
    %v4091 = vld [vmem:[#allocation8 + $0x38] sm:$0xff]
    %v4092 = vld [vmem:[#allocation8 + $0x40] sm:$0xff]
    %v4093 = vld [vmem:[#allocation8 + $0x48] sm:$0xff]
    %v4094 = vld [vmem:[#allocation8 + $0x50] sm:$0xff]
    %v4095 = vld [vmem:[#allocation8 + $0x58] sm:$0xff]
    %v4096 = vld [vmem:[#allocation8 + $0x60] sm:$0xff]
    %v4097 = vld [vmem:[#allocation8 + $0x68] sm:$0xff]
    %v4098 = vld [vmem:[#allocation8 + $0x70] sm:$0xff]
    %v4099 = vld [vmem:[#allocation8 + $0x78] sm:$0xff]
    %v4100 = vld [vmem:[#allocation8 + $0x80] sm:$0xff]
    %v4101 = vld [vmem:[#allocation8 + $0x88] sm:$0xff]
    %v4102 = vld [vmem:[#allocation8 + $0x90] sm:$0xff]
    %v4103 = vld [vmem:[#allocation8 + $0x98] sm:$0xff]
    %v4104 = vld [vmem:[#allocation8 + $0xa0] sm:$0xff]
    %v4105 = vld [vmem:[#allocation8 + $0xa8] sm:$0xff]
    %v4106 = vld [vmem:[#allocation8 + $0xb0] sm:$0xff]
    %v4107 = vld [vmem:[#allocation8 + $0xb8] sm:$0xff]
    %v4108 = vld [vmem:[#allocation8 + $0xc0] sm:$0xff]
    %v4109 = vld [vmem:[#allocation8 + $0xc8] sm:$0xff]
    %v4110 = vld [vmem:[#allocation8 + $0xd0] sm:$0xff]
    %v4111 = vld [vmem:[#allocation8 + $0xd8] sm:$0xff]
    %v4112 = vld [vmem:[#allocation8 + $0xe0] sm:$0xff]
    %v4113 = vld [vmem:[#allocation8 + $0xe8] sm:$0xff]
    %v4114 = vld [vmem:[#allocation8 + $0xf0] sm:$0xff]
    %v4115 = vld [vmem:[#allocation8 + $0xf8] sm:$0xff]
    %v4116 = vld [vmem:[#allocation8 + $0x100] sm:$0xff]
    %v4117 = vld [vmem:[#allocation8 + $0x108] sm:$0xff]
    %v4118 = vld [vmem:[#allocation8 + $0x110] sm:$0xff]
    %v4119 = vld [vmem:[#allocation8 + $0x118] sm:$0xff]
    %v4120 = vld [vmem:[#allocation8 + $0x120] sm:$0xff]
    %v4121 = vld [vmem:[#allocation8 + $0x128] sm:$0xff]
    %v4122 = vld [vmem:[#allocation8 + $0x130] sm:$0xff]
    %v4123 = vld [vmem:[#allocation8 + $0x138] sm:$0xff]
    %v4124 = vld [vmem:[#allocation8 + $0x140] sm:$0xff]
    %v4125 = vld [vmem:[#allocation8 + $0x148] sm:$0xff]
    %v4126 = vld [vmem:[#allocation8 + $0x150] sm:$0xff]
    %v4127 = vld [vmem:[#allocation8 + $0x158] sm:$0xff]
    %v4128 = vld [vmem:[#allocation8 + $0x160] sm:$0xff]
    %v4129 = vld [vmem:[#allocation8 + $0x168] sm:$0xff]
    %v4130 = vld [vmem:[#allocation8 + $0x170] sm:$0xff]
    %v4131 = vld [vmem:[#allocation8 + $0x178] sm:$0xff]
    %v4132 = vld [vmem:[#allocation8 + $0x180] sm:$0xff]
    %v4133 = vld [vmem:[#allocation8 + $0x188] sm:$0xff]
    %v4134 = vld [vmem:[#allocation8 + $0x190] sm:$0xff]
    %v4135 = vld [vmem:[#allocation8 + $0x198] sm:$0xff]
    %v4136 = vld [vmem:[#allocation8 + $0x1a0] sm:$0xff]
    %v4137 = vld [vmem:[#allocation8 + $0x1a8] sm:$0xff]
    %v4138 = vld [vmem:[#allocation8 + $0x1b0] sm:$0xff]
    %v4139 = vld [vmem:[#allocation8 + $0x1b8] sm:$0xff]
    %v4140 = vld [vmem:[#allocation8 + $0x1c0] sm:$0xff]
    %v4141 = vld [vmem:[#allocation8 + $0x1c8] sm:$0xff]
    %v4142 = vld [vmem:[#allocation8 + $0x1d0] sm:$0xff]
    %v4143 = vld [vmem:[#allocation8 + $0x1d8] sm:$0xff]
    %v4144 = vld [vmem:[#allocation8 + $0x1e0] sm:$0xff]
    %v4145 = vld [vmem:[#allocation8 + $0x1e8] sm:$0xff]
    %v4146 = vld [vmem:[#allocation8 + $0x1f0] sm:$0xff]
    %v4147 = vld [vmem:[#allocation8 + $0x1f8] sm:$0xff]
    %v4148 = vld [vmem:[#allocation9] sm:$0x3]
    %v4150 = vperm.slane %v4148, 0
    %v4151 = vperm.slane %v4148, 1
    %v4218 = vunpack.c.l.b16 %v4084
    %v4219 = vunpack.c.h.b16 %v4084
    %v4220 = vunpack.c.l.b16 %v4085
    %v4221 = vunpack.c.h.b16 %v4085
    %v4222 = vunpack.c.l.b16 %v4086
    %v4223 = vunpack.c.h.b16 %v4086
    %v4224 = vunpack.c.l.b16 %v4087
    %v4225 = vunpack.c.h.b16 %v4087
    %v4226 = vunpack.c.l.b16 %v4088
    %v4227 = vunpack.c.h.b16 %v4088
    %v4228 = vunpack.c.l.b16 %v4089
    %v4229 = vunpack.c.h.b16 %v4089
    %v4230 = vunpack.c.l.b16 %v4090
    %v4231 = vunpack.c.h.b16 %v4090
    %v4232 = vunpack.c.l.b16 %v4091
    %v4233 = vunpack.c.h.b16 %v4091
    %v4234 = vunpack.c.l.b16 %v4092
    %v4235 = vunpack.c.h.b16 %v4092
    %v4236 = vunpack.c.l.b16 %v4093
    %v4237 = vunpack.c.h.b16 %v4093
    %v4238 = vunpack.c.l.b16 %v4094
    %v4239 = vunpack.c.h.b16 %v4094
    %v4240 = vunpack.c.l.b16 %v4095
    %v4241 = vunpack.c.h.b16 %v4095
    %v4242 = vunpack.c.l.b16 %v4096
    %v4243 = vunpack.c.h.b16 %v4096
    %v4244 = vunpack.c.l.b16 %v4097
    %v4245 = vunpack.c.h.b16 %v4097
    %v4246 = vunpack.c.l.b16 %v4098
    %v4247 = vunpack.c.h.b16 %v4098
    %v4248 = vunpack.c.l.b16 %v4099
    %v4249 = vunpack.c.h.b16 %v4099
    %v4250 = vunpack.c.l.b16 %v4100
    %v4251 = vunpack.c.h.b16 %v4100
    %v4252 = vunpack.c.l.b16 %v4101
    %v4253 = vunpack.c.h.b16 %v4101
    %v4254 = vunpack.c.l.b16 %v4102
    %v4255 = vunpack.c.h.b16 %v4102
    %v4256 = vunpack.c.l.b16 %v4103
    %v4257 = vunpack.c.h.b16 %v4103
    %v4258 = vunpack.c.l.b16 %v4104
    %v4259 = vunpack.c.h.b16 %v4104
    %v4260 = vunpack.c.l.b16 %v4105
    %v4261 = vunpack.c.h.b16 %v4105
    %v4262 = vunpack.c.l.b16 %v4106
    %v4263 = vunpack.c.h.b16 %v4106
    %v4264 = vunpack.c.l.b16 %v4107
    %v4265 = vunpack.c.h.b16 %v4107
    %v4266 = vunpack.c.l.b16 %v4108
    %v4267 = vunpack.c.h.b16 %v4108
    %v4268 = vunpack.c.l.b16 %v4109
    %v4269 = vunpack.c.h.b16 %v4109
    %v4270 = vunpack.c.l.b16 %v4110
    %v4271 = vunpack.c.h.b16 %v4110
    %v4272 = vunpack.c.l.b16 %v4111
    %v4273 = vunpack.c.h.b16 %v4111
    %v4274 = vunpack.c.l.b16 %v4112
    %v4275 = vunpack.c.h.b16 %v4112
    %v4276 = vunpack.c.l.b16 %v4113
    %v4277 = vunpack.c.h.b16 %v4113
    %v4278 = vunpack.c.l.b16 %v4114
    %v4279 = vunpack.c.h.b16 %v4114
    %v4280 = vunpack.c.l.b16 %v4115
    %v4281 = vunpack.c.h.b16 %v4115
    %v4282 = vunpack.c.l.b16 %v4116
    %v4283 = vunpack.c.h.b16 %v4116
    %v4284 = vunpack.c.l.b16 %v4117
    %v4285 = vunpack.c.h.b16 %v4117
    %v4286 = vunpack.c.l.b16 %v4118
    %v4287 = vunpack.c.h.b16 %v4118
    %v4288 = vunpack.c.l.b16 %v4119
    %v4289 = vunpack.c.h.b16 %v4119
    %v4290 = vunpack.c.l.b16 %v4120
    %v4291 = vunpack.c.h.b16 %v4120
    %v4292 = vunpack.c.l.b16 %v4121
    %v4293 = vunpack.c.h.b16 %v4121
    %v4294 = vunpack.c.l.b16 %v4122
    %v4295 = vunpack.c.h.b16 %v4122
    %v4296 = vunpack.c.l.b16 %v4123
    %v4297 = vunpack.c.h.b16 %v4123
    %v4298 = vunpack.c.l.b16 %v4124
    %v4299 = vunpack.c.h.b16 %v4124
    %v4300 = vunpack.c.l.b16 %v4125
    %v4301 = vunpack.c.h.b16 %v4125
    %v4302 = vunpack.c.l.b16 %v4126
    %v4303 = vunpack.c.h.b16 %v4126
    %v4304 = vunpack.c.l.b16 %v4127
    %v4305 = vunpack.c.h.b16 %v4127
    %v4306 = vunpack.c.l.b16 %v4128
    %v4307 = vunpack.c.h.b16 %v4128
    %v4308 = vunpack.c.l.b16 %v4129
    %v4309 = vunpack.c.h.b16 %v4129
    %v4310 = vunpack.c.l.b16 %v4130
    %v4311 = vunpack.c.h.b16 %v4130
    %v4312 = vunpack.c.l.b16 %v4131
    %v4313 = vunpack.c.h.b16 %v4131
    %v4314 = vunpack.c.l.b16 %v4132
    %v4315 = vunpack.c.h.b16 %v4132
    %v4316 = vunpack.c.l.b16 %v4133
    %v4317 = vunpack.c.h.b16 %v4133
    %v4318 = vunpack.c.l.b16 %v4134
    %v4319 = vunpack.c.h.b16 %v4134
    %v4320 = vunpack.c.l.b16 %v4135
    %v4321 = vunpack.c.h.b16 %v4135
    %v4322 = vunpack.c.l.b16 %v4136
    %v4323 = vunpack.c.h.b16 %v4136
    %v4324 = vunpack.c.l.b16 %v4137
    %v4325 = vunpack.c.h.b16 %v4137
    %v4326 = vunpack.c.l.b16 %v4138
    %v4327 = vunpack.c.h.b16 %v4138
    %v4328 = vunpack.c.l.b16 %v4139
    %v4329 = vunpack.c.h.b16 %v4139
    %v4330 = vunpack.c.l.b16 %v4140
    %v4331 = vunpack.c.h.b16 %v4140
    %v4332 = vunpack.c.l.b16 %v4141
    %v4333 = vunpack.c.h.b16 %v4141
    %v4334 = vunpack.c.l.b16 %v4142
    %v4335 = vunpack.c.h.b16 %v4142
    %v4336 = vunpack.c.l.b16 %v4143
    %v4337 = vunpack.c.h.b16 %v4143
    %v4338 = vunpack.c.l.b16 %v4144
    %v4339 = vunpack.c.h.b16 %v4144
    %v4340 = vunpack.c.l.b16 %v4145
    %v4341 = vunpack.c.h.b16 %v4145
    %v4342 = vunpack.c.l.b16 %v4146
    %v4343 = vunpack.c.h.b16 %v4146
    %v4344 = vunpack.c.l.b16 %v4147
    %v4345 = vunpack.c.h.b16 %v4147
    %v4346 = vpack.c.b16 %v4220, %v4218
    %v4347 = vpack.c.b16 %v4221, %v4219
    %v4348 = vpack.c.b16 %v4224, %v4222
    %v4349 = vpack.c.b16 %v4225, %v4223
    %v4350 = vpack.c.b16 %v4228, %v4226
    %v4351 = vpack.c.b16 %v4229, %v4227
    %v4352 = vpack.c.b16 %v4232, %v4230
    %v4353 = vpack.c.b16 %v4233, %v4231
    %v4354 = vpack.c.b16 %v4236, %v4234
    %v4355 = vpack.c.b16 %v4237, %v4235
    %v4356 = vpack.c.b16 %v4240, %v4238
    %v4357 = vpack.c.b16 %v4241, %v4239
    %v4358 = vpack.c.b16 %v4244, %v4242
    %v4359 = vpack.c.b16 %v4245, %v4243
    %v4360 = vpack.c.b16 %v4248, %v4246
    %v4361 = vpack.c.b16 %v4249, %v4247
    %v4362 = vpack.c.b16 %v4252, %v4250
    %v4363 = vpack.c.b16 %v4253, %v4251
    %v4364 = vpack.c.b16 %v4256, %v4254
    %v4365 = vpack.c.b16 %v4257, %v4255
    %v4366 = vpack.c.b16 %v4260, %v4258
    %v4367 = vpack.c.b16 %v4261, %v4259
    %v4368 = vpack.c.b16 %v4264, %v4262
    %v4369 = vpack.c.b16 %v4265, %v4263
    %v4370 = vpack.c.b16 %v4268, %v4266
    %v4371 = vpack.c.b16 %v4269, %v4267
    %v4372 = vpack.c.b16 %v4272, %v4270
    %v4373 = vpack.c.b16 %v4273, %v4271
    %v4374 = vpack.c.b16 %v4276, %v4274
    %v4375 = vpack.c.b16 %v4277, %v4275
    %v4376 = vpack.c.b16 %v4280, %v4278
    %v4377 = vpack.c.b16 %v4281, %v4279
    %v4378 = vpack.c.b16 %v4284, %v4282
    %v4379 = vpack.c.b16 %v4285, %v4283
    %v4380 = vpack.c.b16 %v4288, %v4286
    %v4381 = vpack.c.b16 %v4289, %v4287
    %v4382 = vpack.c.b16 %v4292, %v4290
    %v4383 = vpack.c.b16 %v4293, %v4291
    %v4384 = vpack.c.b16 %v4296, %v4294
    %v4385 = vpack.c.b16 %v4297, %v4295
    %v4386 = vpack.c.b16 %v4300, %v4298
    %v4387 = vpack.c.b16 %v4301, %v4299
    %v4388 = vpack.c.b16 %v4304, %v4302
    %v4389 = vpack.c.b16 %v4305, %v4303
    %v4390 = vpack.c.b16 %v4308, %v4306
    %v4391 = vpack.c.b16 %v4309, %v4307
    %v4392 = vpack.c.b16 %v4312, %v4310
    %v4393 = vpack.c.b16 %v4313, %v4311
    %v4394 = vpack.c.b16 %v4316, %v4314
    %v4395 = vpack.c.b16 %v4317, %v4315
    %v4396 = vpack.c.b16 %v4320, %v4318
    %v4397 = vpack.c.b16 %v4321, %v4319
    %v4398 = vpack.c.b16 %v4324, %v4322
    %v4399 = vpack.c.b16 %v4325, %v4323
    %v4400 = vpack.c.b16 %v4328, %v4326
    %v4401 = vpack.c.b16 %v4329, %v4327
    %v4402 = vpack.c.b16 %v4332, %v4330
    %v4403 = vpack.c.b16 %v4333, %v4331
    %v4404 = vpack.c.b16 %v4336, %v4334
    %v4405 = vpack.c.b16 %v4337, %v4335
    %v4406 = vpack.c.b16 %v4340, %v4338
    %v4407 = vpack.c.b16 %v4341, %v4339
    %v4408 = vpack.c.b16 %v4344, %v4342
    %v4409 = vpack.c.b16 %v4345, %v4343
    %4474 = vmatpush.bf16.msra.mxu0 %v4360
    %4475 = vmatpush.bf16.msra.mxu0 %v4358
    %4476 = vmatpush.bf16.msra.mxu0 %v4356
    %4477 = vmatpush.bf16.msra.mxu0 %v4354
    %4478 = vmatpush.bf16.msra.mxu0 %v4352
    %4479 = vmatpush.bf16.msra.mxu0 %v4350
    %4480 = vmatpush.bf16.msra.mxu0 %v4348
    %4481 = vmatpush.bf16.msra.mxu0 %v4346
    %4482 = vmatmul.bf16.gmra.mxu0 %v4080
    %v4483 = vpop.f32.mrf.mxu0
    %v4484 = vadd.f32 %v4150, %v4483
    %v4485 = vpop.f32.mrf.mxu0
    %4486 = vdwg.mxu0
    %4487 = vmatpush.bf16.msra.mxu0 %v4376
    %4488 = vmatpush.bf16.msra.mxu0 %v4374
    %4489 = vmatpush.bf16.msra.mxu0 %v4372
    %4490 = vmatpush.bf16.msra.mxu0 %v4370
    %4491 = vmatpush.bf16.msra.mxu0 %v4368
    %4492 = vmatpush.bf16.msra.mxu0 %v4366
    %4493 = vmatpush.bf16.msra.mxu0 %v4364
    %4494 = vmatpush.bf16.msra.mxu0 %v4362
    %4495 = vmatmul.bf16.gmra.mxu0 %v4081
    %v4496 = vpop.f32.mrf.mxu0
    %v4497 = vadd.f32 %v4484, %v4496
    %v4498 = vpop.f32.mrf.mxu0
    %4499 = vdwg.mxu0
    %4500 = vmatpush.bf16.msra.mxu0 %v4392
    %4501 = vmatpush.bf16.msra.mxu0 %v4390
    %4502 = vmatpush.bf16.msra.mxu0 %v4388
    %4503 = vmatpush.bf16.msra.mxu0 %v4386
    %4504 = vmatpush.bf16.msra.mxu0 %v4384
    %4505 = vmatpush.bf16.msra.mxu0 %v4382
    %4506 = vmatpush.bf16.msra.mxu0 %v4380
    %4507 = vmatpush.bf16.msra.mxu0 %v4378
    %4508 = vmatmul.bf16.gmra.mxu0 %v4082
    %v4509 = vpop.f32.mrf.mxu0
    %v4510 = vadd.f32 %v4497, %v4509
    %v4511 = vpop.f32.mrf.mxu0
    %4512 = vdwg.mxu0
    %4513 = vmatpush.bf16.msra.mxu0 %v4408
    %4514 = vmatpush.bf16.msra.mxu0 %v4406
    %4515 = vmatpush.bf16.msra.mxu0 %v4404
    %4516 = vmatpush.bf16.msra.mxu0 %v4402
    %4517 = vmatpush.bf16.msra.mxu0 %v4400
    %4518 = vmatpush.bf16.msra.mxu0 %v4398
    %4519 = vmatpush.bf16.msra.mxu0 %v4396
    %4520 = vmatpush.bf16.msra.mxu0 %v4394
    %4521 = vmatmul.bf16.gmra.mxu0 %v4083
    %v4522 = vpop.f32.mrf.mxu0
    %v4523 = vadd.f32 %v4510, %v4522
    %v4524 = vpop.f32.mrf.mxu0
    %4525 = vdwg.mxu0
    %4526 = vmatpush.bf16.msra.mxu0 %v4361
    %4527 = vmatpush.bf16.msra.mxu0 %v4359
    %4528 = vmatpush.bf16.msra.mxu0 %v4357
    %4529 = vmatpush.bf16.msra.mxu0 %v4355
    %4530 = vmatpush.bf16.msra.mxu0 %v4353
    %4531 = vmatpush.bf16.msra.mxu0 %v4351
    %4532 = vmatpush.bf16.msra.mxu0 %v4349
    %4533 = vmatpush.bf16.msra.mxu0 %v4347
    %4534 = vmatmul.bf16.gmra.mxu0 %v4080
    %v4535 = vpop.f32.mrf.mxu0
    %v4536 = vadd.f32 %v4151, %v4535
    %v4537 = vpop.f32.mrf.mxu0
    %4538 = vdwg.mxu0
    %4539 = vmatpush.bf16.msra.mxu0 %v4377
    %4540 = vmatpush.bf16.msra.mxu0 %v4375
    %4541 = vmatpush.bf16.msra.mxu0 %v4373
    %4542 = vmatpush.bf16.msra.mxu0 %v4371
    %4543 = vmatpush.bf16.msra.mxu0 %v4369
    %4544 = vmatpush.bf16.msra.mxu0 %v4367
    %4545 = vmatpush.bf16.msra.mxu0 %v4365
    %4546 = vmatpush.bf16.msra.mxu0 %v4363
    %4547 = vmatmul.bf16.gmra.mxu0 %v4081
    %v4548 = vpop.f32.mrf.mxu0
    %v4549 = vadd.f32 %v4536, %v4548
    %v4550 = vpop.f32.mrf.mxu0
    %4551 = vdwg.mxu0
    %4552 = vmatpush.bf16.msra.mxu0 %v4393
    %4553 = vmatpush.bf16.msra.mxu0 %v4391
    %4554 = vmatpush.bf16.msra.mxu0 %v4389
    %4555 = vmatpush.bf16.msra.mxu0 %v4387
    %4556 = vmatpush.bf16.msra.mxu0 %v4385
    %4557 = vmatpush.bf16.msra.mxu0 %v4383
    %4558 = vmatpush.bf16.msra.mxu0 %v4381
    %4559 = vmatpush.bf16.msra.mxu0 %v4379
    %4560 = vmatmul.bf16.gmra.mxu0 %v4082
    %v4561 = vpop.f32.mrf.mxu0
    %v4562 = vadd.f32 %v4549, %v4561
    %v4563 = vpop.f32.mrf.mxu0
    %4564 = vdwg.mxu0
    %4565 = vmatpush.bf16.msra.mxu0 %v4409
    %4566 = vmatpush.bf16.msra.mxu0 %v4407
    %4567 = vmatpush.bf16.msra.mxu0 %v4405
    %4568 = vmatpush.bf16.msra.mxu0 %v4403
    %4569 = vmatpush.bf16.msra.mxu0 %v4401
    %4570 = vmatpush.bf16.msra.mxu0 %v4399
    %4571 = vmatpush.bf16.msra.mxu0 %v4397
    %4572 = vmatpush.bf16.msra.mxu0 %v4395
    %4573 = vmatmul.bf16.gmra.mxu0 %v4083
    %v4574 = vpop.f32.mrf.mxu0
    %v4575 = vadd.f32 %v4562, %v4574
    %v4576 = vpop.f32.mrf.mxu0
    %4577 = vdwg.mxu0
    %v4578 = vmax.f32 %v4523, 0.0
    %v4579 = vmax.f32 %v4575, 0.0
    %v4580 = vld [vmem:[#allocation11] sm:$0x3]
    %v4581 = vld [vmem:[#allocation2] sm:$0x1]
    %4583 = vset.pattern.permute.xlu0 0
    %4584 = vperm.xlu0 %4583, %v4581
    %v4585 = vpop.permute.xlu0 %4584
    %v4587 = vperm.slane %v4585, 0
    %v4589 = vperm.slane %v4580, 0
    %v4590 = vperm.slane %v4580, 1
    %4593 = vmatpush.xpose.msra.mxu0 0.0
    %4594 = vmatpush.xpose.msra.mxu0 0.0
    %4595 = vmatpush.xpose.msra.mxu0 0.0
    %4596 = vmatpush.xpose.msra.mxu0 0.0
    %4597 = vmatpush.xpose.msra.mxu0 0.0
    %4598 = vmatpush.xpose.msra.mxu0 0.0
    %4599 = vmatpush.xpose.msra.mxu0 0.0
    %4600 = vmatpush.xpose.msra.mxu0 0.0
    %4601 = vmatpush.xpose.msra.mxu0 0.0
    %4602 = vmatpush.xpose.msra.mxu0 0.0
    %4603 = vmatpush.xpose.msra.mxu0 0.0
    %4604 = vmatpush.xpose.msra.mxu0 0.0
    %4605 = vmatpush.xpose.msra.mxu0 0.0
    %4606 = vmatpush.xpose.msra.mxu0 0.0
    %4607 = vmatpush.xpose.msra.mxu0 0.0
    %4608 = vmatpush.xpose.msra.mxu0 %v4578
    %4609 = vmatmul.f32.gmra.mxu0 %v4589
    %v4610 = vpop.f32.mrf.mxu0
    %v4611 = vadd.f32 %v4587, %v4610
    %4612 = vdwg.mxu0
    %4613 = vmatpush.xpose.msra.mxu0 0.0
    %4614 = vmatpush.xpose.msra.mxu0 0.0
    %4615 = vmatpush.xpose.msra.mxu0 0.0
    %4616 = vmatpush.xpose.msra.mxu0 0.0
    %4617 = vmatpush.xpose.msra.mxu0 0.0
    %4618 = vmatpush.xpose.msra.mxu0 0.0
    %4619 = vmatpush.xpose.msra.mxu0 0.0
    %4620 = vmatpush.xpose.msra.mxu0 0.0
    %4621 = vmatpush.xpose.msra.mxu0 0.0
    %4622 = vmatpush.xpose.msra.mxu0 0.0
    %4623 = vmatpush.xpose.msra.mxu0 0.0
    %4624 = vmatpush.xpose.msra.mxu0 0.0
    %4625 = vmatpush.xpose.msra.mxu0 0.0
    %4626 = vmatpush.xpose.msra.mxu0 0.0
    %4627 = vmatpush.xpose.msra.mxu0 0.0
    %4628 = vmatpush.xpose.msra.mxu0 %v4579
    %4629 = vmatmul.f32.gmra.mxu0 %v4590
    %v4630 = vpop.f32.mrf.mxu0
    %v4631 = vadd.f32 %v4611, %v4630
    %4632 = vdwg.mxu0
    %vm4633 = vcmask 8192
    %4634 = vst.msk [vmem:[#allocation12] sm:$0x1] %vm4633, %v4631
    // Predicated region
    $region50: #{classifier_forward.1} parent=1 // pred_check
      _
    $region51: #{classifier_forward.1} parent=1 // pred_check_branch
      %4636 = sbr.rel (0) target = $region53
    $region52: #{classifier_forward.1} parent=1 // pred_region
      %4638 = vsyncadd [#allocation5], 0
      %s4640 = sshll.u32 [#allocation12], 4
      %s4641 = int_to_ptr.vmem [resolvable:$true] %s4640
      %s4642 = sshll.u32 %s7, 4
      %s4643 = int_to_ptr.hbm [resolvable:$true] %s4642
      %4645 = dma.vmem_to_hbm [thread:$0]  %s4641, 16, %s4643, [#allocation5]
    $region53: #{classifier_forward.1} parent=1 // pred_fallthru
      _
    // Predicated region
    $region54: #{classifier_forward.1} parent=1 // pred_check
      _
    $region55: #{classifier_forward.1} parent=1 // pred_check_branch
      %4647 = sbr.rel (0) target = $region57
    $region56: #{classifier_forward.1} parent=1 // pred_region
      %4649 = dma.done [#allocation5], 16
    $region57: #{classifier_forward.1} parent=1 // pred_fallthru
      _
    %4650 = vsyncpa [#allocation4], 1
    %4651 = vsyncpa [#allocation7], 1
    %4652 = vsyncpa [#allocation10], 1
    %4653 = vsyncpa [#allocation5], 1

</llo_original>
